<compile_context>
chip_gen: v7x
topology: tpu7x:2x2x1
jax: 0.10.0
libtpu: 0.0.40
codegen_flags: <defaults>
</compile_context>

<pallas_src>
import functools

import jax
import jax.numpy as jnp
from jax.experimental import pallas as pl
from jax.experimental.pallas import tpu as pltpu


def _round_up(x, m):
    return (x + m - 1) // m * m


_FC_TV = 512          # fixed vocab tile for large V (multiple of 256 for v7x MXU)
_VMEM_CAP = 64 << 20  # portable cap: v7x has 64 MiB physical VMEM per TC


# --------------------------- kernel 1: LSTM recurrence ------------------------

def _lstm_chunk_kernel(x_ref, wih_ref, whh_ref, b_ref, h_all_ref,
                       gx_scr, h_scr, c_scr, *, Tc, Bp, Hp, unroll):
    """One time-chunk (Tc steps) of the LSTM; h/c carried in VMEM scratch.

    x_ref     : (Tc*Bp, Ep)   time-major inputs for this chunk (compute dtype)
    wih_ref   : (Ep, 4*Hp)    W_ih^T, gate-major (i,f,g,o), lane aligned
    whh_ref   : (Hp, 4*Hp)    W_hh^T, same layout
    b_ref     : (1, 4*Hp)     b_ih + b_hh (f32)
    h_all_ref : (Tc*Bp, Hp)   hidden states of this chunk (output, compute dtype)
    gx_scr    : (Tc*Bp, 4*Hp) f32 scratch — batched input projection
    h_scr/c_scr : (Bp, Hp)    f32 carry, persistent across grid steps
    """
    @pl.when(pl.program_id(0) == 0)
    def _init():
        h_scr[...] = jnp.zeros_like(h_scr)
        c_scr[...] = jnp.zeros_like(c_scr)

    # Input projection for the whole chunk: one big MXU matmul, hoisted out of
    # the serial recurrence.
    gx_scr[...] = (
        jnp.dot(x_ref[...], wih_ref[...], preferred_element_type=jnp.float32)
        + b_ref[...])

    whh = whh_ref[...]  # resident across the chunk

    def step(t, carry):
        h, c = carry
        start = pl.multiple_of(t * Bp, Bp)
        gates = gx_scr[pl.ds(start, Bp), :] + jnp.dot(
            h.astype(whh.dtype), whh, preferred_element_type=jnp.float32)
        # Gate slices are whole 128-lane blocks (Hp is a multiple of 128).
        i_g = jax.nn.sigmoid(gates[:, 0 * Hp:1 * Hp])
        f_g = jax.nn.sigmoid(gates[:, 1 * Hp:2 * Hp])
        g_g = jnp.tanh(gates[:, 2 * Hp:3 * Hp])
        o_g = jax.nn.sigmoid(gates[:, 3 * Hp:4 * Hp])
        c_new = f_g * c + i_g * g_g
        h_new = o_g * jnp.tanh(c_new)
        h_all_ref[pl.ds(start, Bp), :] = h_new.astype(h_all_ref.dtype)
        return h_new, c_new

    h_fin, c_fin = jax.lax.fori_loop(
        0, Tc, step, (h_scr[...], c_scr[...]), unroll=unroll)
    h_scr[...] = h_fin
    c_scr[...] = c_fin


# --------------------------- kernel 2: fc / logits ----------------------------

def _fc_kernel(h_ref, w_ref, b_ref, o_ref):
    o_ref[...] = (
        jnp.dot(h_ref[...], w_ref[...], preferred_element_type=jnp.float32)
        + b_ref[...])


# ---------------------- one-time parameter preparation ------------------------

def prepare_decoder_params(params, compute_dtype=jnp.bfloat16):
    """Hoisted weight re-layout: pad to TPU tiles, gate-major layout, dtype cast.

    Done once; repeated forwards reuse the prepared (padded/cast) arrays.
    """
    E = params["embedding"].shape[1]
    H = params["w_hh"].shape[1]
    V = params["w_fc"].shape[0]

    Ep = _round_up(E, 128)
    Hp = _round_up(H, 128)
    if _round_up(V, 128) >= _FC_TV:
        Vp, tv = _round_up(V, _FC_TV), _FC_TV   # never fall back to a 128-wide N tile
    else:
        Vp = _round_up(V, 128)
        tv = Vp

    f32 = jnp.float32
    # Embedding pre-padded to Ep lanes so jnp.take emits lane-padded rows.
    emb_p = jnp.zeros((params["embedding"].shape[0], Ep), compute_dtype)
    emb_p = emb_p.at[:, :E].set(params["embedding"].astype(compute_dtype))

    # Gate-major, lane-aligned W^T layouts.  Zero padding keeps padded H lanes
    # exactly inert: gates_pad=0 -> g=0 -> c_pad stays 0 and h_pad stays 0.
    wih4 = jnp.zeros((4, Hp, Ep), f32).at[:, :H, :E].set(
        params["w_ih"].reshape(4, H, E))
    wih_t = jnp.transpose(wih4, (2, 0, 1)).reshape(Ep, 4 * Hp).astype(compute_dtype)
    whh4 = jnp.zeros((4, Hp, Hp), f32).at[:, :H, :H].set(
        params["w_hh"].reshape(4, H, H))
    whh_t = jnp.transpose(whh4, (2, 0, 1)).reshape(Hp, 4 * Hp).astype(compute_dtype)
    b = jnp.zeros((4, Hp), f32).at[:, :H].set(
        (params["b_ih"] + params["b_hh"]).reshape(4, H)).reshape(1, 4 * Hp)

    wfc_t = jnp.zeros((Hp, Vp), f32).at[:H, :V].set(
        params["w_fc"].T).astype(compute_dtype)
    bfc = jnp.zeros((1, Vp), f32).at[0, :V].set(params["b_fc"])

    return {
        "embedding_p": emb_p, "wih_t": wih_t, "whh_t": whh_t, "b": b,
        "wfc_t": wfc_t, "bfc": bfc,
        "dims": dict(E=E, H=H, V=V, Ep=Ep, Hp=Hp, Vp=Vp, tv=tv),
        "compute_dtype": compute_dtype,
    }


# --------------------------------- forward ------------------------------------

def decoder_rnn_forward(features, captions, prep):
    """features: (B, E) f32, captions: (B, Tc) int32.  Returns (B, Tc, V) f32."""
    dims = prep["dims"]
    E, V = dims["E"], dims["V"]
    Ep, Hp, Vp, tv = dims["Ep"], dims["Hp"], dims["Vp"], dims["tv"]
    cdt = prep["compute_dtype"]
    f32 = jnp.float32

    B = features.shape[0]

    # ---- glue: embedding gather (rows already Ep-padded) + feature as t=0 ----
    cap = captions[:, :-1]
    emb = jnp.take(prep["embedding_p"], cap, axis=0)                # (B, T-1, Ep)
    feat = jnp.zeros((B, Ep), cdt).at[:, :E].set(features.astype(cdt))
    inputs = jnp.concatenate([feat[:, None, :], emb], axis=1)       # (B, T, Ep)
    T = inputs.shape[1]

    # ---- pad B -> 16 sublanes (bf16 min tile), choose time chunk Tc ----------
    Bp = _round_up(B, 16)
    dts = jnp.dtype(cdt).itemsize
    # Per-timestep VMEM of the chunk-scaled buffers (double-buffered x + h_all,
    # f32 gates_x scratch).  Target ~4 MiB so chunks also fit v5e comfortably.
    per_t = Bp * (2 * Ep * dts + 2 * Hp * dts + 4 * Hp * 4)
    Tc = int(max(1, min(T, (4 << 20) // max(per_t, 1))))
    Tp = _round_up(T, Tc)
    n_chunks = Tp // Tc
    M = Tp * Bp

    x_tm = jnp.transpose(inputs, (1, 0, 2))                          # (T, B, Ep)
    x2d = jnp.zeros((Tp, Bp, Ep), cdt).at[:T, :B, :].set(x_tm).reshape(M, Ep)

    # Unroll only when the per-step gate temporaries are small (avoid spills).
    unroll = (Tc <= 16) and (Bp * 4 * Hp * 4 <= 96 * 1024)

    # Explicit VMEM budget (blocks are double-buffered by the pipeline).
    w_bytes = (Ep * 4 * Hp + Hp * 4 * Hp) * dts + 4 * Hp * 4
    k1_bytes = Tc * per_t + 2 * w_bytes + 2 * Bp * Hp * 4
    vmem1 = int(min(max(1.25 * k1_bytes + (4 << 20), 16 << 20), _VMEM_CAP))

    # ---- kernel 1: time-chunked recurrence, h/c carried in VMEM scratch ------
    lstm_kernel = functools.partial(
        _lstm_chunk_kernel, Tc=Tc, Bp=Bp, Hp=Hp, unroll=unroll)
    h_all = pl.pallas_call(
        lstm_kernel,
        out_shape=jax.ShapeDtypeStruct((M, Hp), cdt),
        grid_spec=pltpu.PrefetchScalarGridSpec(
            num_scalar_prefetch=0,
            grid=(n_chunks,),
            in_specs=[
                pl.BlockSpec((Tc * Bp, Ep), lambda i: (i, 0)),       # x chunk
                # TODO(synk): pipeline_mode=pl.Buffered(1) would single-buffer
                # these grid-invariant weight blocks and save ~w_bytes of VMEM.
                pl.BlockSpec((Ep, 4 * Hp), lambda i: (0, 0)),        # W_ih^T
                pl.BlockSpec((Hp, 4 * Hp), lambda i: (0, 0)),        # W_hh^T
                pl.BlockSpec((1, 4 * Hp), lambda i: (0, 0)),         # bias
            ],
            out_specs=pl.BlockSpec((Tc * Bp, Hp), lambda i: (i, 0)),
            scratch_shapes=[
                pltpu.VMEM((Tc * Bp, 4 * Hp), f32),                  # gates_x
                pltpu.VMEM((Bp, Hp), f32),                           # h carry
                pltpu.VMEM((Bp, Hp), f32),                           # c carry
            ],
        ),
        compiler_params=pltpu.CompilerParams(
            dimension_semantics=("arbitrary",),     # serial recurrence over time
            vmem_limit_bytes=vmem1),
    )(x2d, prep["wih_t"], prep["whh_t"], prep["b"])

    # ---- kernel 2: logits = h_all @ W_fc^T + b, 2-D tiled over (vocab, M) ----
    # tm: a multiple of Bp, <= ~512 rows, dividing M exactly.
    if Bp >= 512:
        tm = Bp
    else:
        k = min(Tp, max(1, 512 // Bp))
        while Tp % k:
            k -= 1
        tm = Bp * k

    k2_bytes = 2 * (tm * Hp * dts + Hp * tv * dts + tv * 4) + 2 * tm * tv * 4
    vmem2 = int(min(max(1.25 * k2_bytes + (4 << 20), 16 << 20), _VMEM_CAP))

    logits = pl.pallas_call(
        _fc_kernel,
        out_shape=jax.ShapeDtypeStruct((M, Vp), f32),
        grid_spec=pltpu.PrefetchScalarGridSpec(
            num_scalar_prefetch=0,
            grid=(Vp // tv, M // tm),       # vocab on the slow axis: each W_fc
            in_specs=[                      # tile is DMA'd exactly once
                pl.BlockSpec((tm, Hp), lambda j, i: (i, 0)),         # h tile
                pl.BlockSpec((Hp, tv), lambda j, i: (0, j)),         # W_fc tile
                pl.BlockSpec((1, tv), lambda j, i: (0, j)),          # bias tile
            ],
            out_specs=pl.BlockSpec((tm, tv), lambda j, i: (i, j)),
        ),
        compiler_params=pltpu.CompilerParams(
            dimension_semantics=("parallel", "parallel"),
            vmem_limit_bytes=vmem2),
    )(h_all, prep["wfc_t"], prep["bfc"])

    # ---- unpad / restore (B, T, V) batch-major layout ----
    out = logits.reshape(Tp, Bp, Vp)[:T, :B, :V]
    return jnp.transpose(out, (1, 0, 2))


# ----------------------------- params / reference -----------------------------

def init_params(key, embed_size, hidden_size, vocab_size):
    """Deterministic parameter init mirroring the PyTorch module's shapes."""
    k_emb, k_ih, k_hh, k_bih, k_bhh, k_fc = jax.random.split(key, 6)
    H = hidden_size
    stdv = 1.0 / jnp.sqrt(H)

    def xavier_uniform(k, shape):
        fan_out, fan_in = shape
        limit = jnp.sqrt(6.0 / (fan_in + fan_out))
        return jax.random.uniform(k, shape, jnp.float32, -limit, limit)

    return {
        "embedding": xavier_uniform(k_emb, (vocab_size, embed_size)),
        "w_ih": jax.random.uniform(k_ih, (4 * H, embed_size), jnp.float32, -stdv, stdv),
        "w_hh": jax.random.uniform(k_hh, (4 * H, H), jnp.float32, -stdv, stdv),
        "b_ih": jax.random.uniform(k_bih, (4 * H,), jnp.float32, -stdv, stdv),
        "b_hh": jax.random.uniform(k_bhh, (4 * H,), jnp.float32, -stdv, stdv),
        "w_fc": xavier_uniform(k_fc, (vocab_size, H)),
        "b_fc": jnp.zeros((vocab_size,), jnp.float32),
    }


def _reference_forward(features, captions, params):
    """Pure-JAX f32 reference (lax.scan LSTM) for correctness checking."""
    cap = captions[:, :-1]
    emb = jnp.take(params["embedding"], cap, axis=0)
    inputs = jnp.concatenate([features[:, None, :], emb], axis=1)
    B = inputs.shape[0]
    H = params["w_hh"].shape[1]
    b = params["b_ih"] + params["b_hh"]

    def step(carry, x_t):
        h, c = carry
        gates = x_t @ params["w_ih"].T + h @ params["w_hh"].T + b
        i, f, g, o = jnp.split(gates, 4, axis=-1)
        c = jax.nn.sigmoid(f) * c + jax.nn.sigmoid(i) * jnp.tanh(g)
        h = jax.nn.sigmoid(o) * jnp.tanh(c)
        return (h, c), h

    init = (jnp.zeros((B, H)), jnp.zeros((B, H)))
    _, hs = jax.lax.scan(step, init, jnp.swapaxes(inputs, 0, 1))
    hs = jnp.swapaxes(hs, 0, 1)                                   # (B, T, H)
    return hs @ params["w_fc"].T + params["b_fc"]


if __name__ == "__main__":
    # TODO(synk): sample() greedy decode loop not implemented (training forward only).
    # Note: nn.LSTM's dropout=0.2 is a no-op for num_layers=1 (inference forward).
    embed_size, hidden_size, vocab_size = 32, 32, 128
    batch, cap_len = 2, 8

    key = jax.random.PRNGKey(0)
    k_p, k_f, k_c = jax.random.split(key, 3)
    params = init_params(k_p, embed_size, hidden_size, vocab_size)
    features = jax.random.normal(k_f, (batch, embed_size), jnp.float32)
    captions = jax.random.randint(k_c, (batch, cap_len), 0, vocab_size, jnp.int32)

    ref = _reference_forward(features, captions, params)

    # f32 compute path: tight check against the pure-JAX reference.
    prep_f32 = prepare_decoder_params(params, compute_dtype=jnp.float32)
    out_f32 = jax.block_until_ready(decoder_rnn_forward(features, captions, prep_f32))
    assert out_f32.shape == (batch, cap_len, vocab_size)
    assert jnp.allclose(out_f32, ref, atol=1e-4, rtol=1e-4)

    # Default bf16-MXU path (fast path on v6e/v7x): bf16-appropriate tolerance.
    prep_bf16 = prepare_decoder_params(params)          # compute_dtype=bf16
    out_bf16 = jax.block_until_ready(decoder_rnn_forward(features, captions, prep_bf16))
    assert out_bf16.shape == (batch, cap_len, vocab_size)
    assert jnp.allclose(out_bf16, ref, atol=3e-2, rtol=3e-2)

    print("KERNEL_OK")
</pallas_src>

<mosaic_0001>
module attributes {stable_mosaic.version = 11 : i64} {
  func.func @_lstm_chunk_kernel(%arg0: i32, %arg1: memref<128x128xf32, #tpu.memory_space<vmem>>, %arg2: memref<128x512xf32, #tpu.memory_space<vmem>>, %arg3: memref<128x512xf32, #tpu.memory_space<vmem>>, %arg4: memref<1x512xf32, #tpu.memory_space<vmem>>, %arg5: memref<128x128xf32, #tpu.memory_space<vmem>>, %arg6: memref<128x512xf32, #tpu.memory_space<vmem>>, %arg7: memref<16x128xf32, #tpu.memory_space<vmem>>, %arg8: memref<16x128xf32, #tpu.memory_space<vmem>>) attributes {dimension_semantics = [#tpu.dimension_semantics<arbitrary>], iteration_bounds = array<i64: 1>, scalar_prefetch = 0 : i64, scratch_operands = 3 : i64, tpu.core_type = #tpu.core_type<tc>, window_params = [{transform_indices = @transform_0, window_bounds = array<i64: 128, 128>}, {pipeline_mode = #tpu.pipeline_mode<synchronous>, transform_indices = @transform_1, window_bounds = array<i64: 128, 512>}, {pipeline_mode = #tpu.pipeline_mode<synchronous>, transform_indices = @transform_2, window_bounds = array<i64: 128, 512>}, {pipeline_mode = #tpu.pipeline_mode<synchronous>, transform_indices = @transform_3, window_bounds = array<i64: 1, 512>}, {transform_indices = @transform_4, window_bounds = array<i64: 128, 128>}]} {
    %c0_i32 = arith.constant 0 : i32
    %0 = arith.cmpi eq, %arg0, %c0_i32 : i32
    %1 = arith.extui %0 : i1 to i32
    %c0_i32_0 = arith.constant 0 : i32
    %2 = arith.cmpi ne, %1, %c0_i32_0 : i32
    scf.if %2 {
      %cst_74 = arith.constant 0.000000e+00 : f32
      %279 = vector.broadcast %cst_74 : f32 to vector<16x128xf32>
      %c0_75 = arith.constant 0 : index
      %c0_76 = arith.constant 0 : index
      %280 = vector.load %arg7[%c0_75, %c0_76] : memref<16x128xf32, #tpu.memory_space<vmem>>, vector<16x128xf32>
      tpu.vector_store %arg7[%c0_75, %c0_76], %279 {strides = array<i32>} : memref<16x128xf32, #tpu.memory_space<vmem>>, vector<16x128xf32>,
      %cst_77 = arith.constant 0.000000e+00 : f32
      %281 = vector.broadcast %cst_77 : f32 to vector<16x128xf32>
      %c0_78 = arith.constant 0 : index
      %c0_79 = arith.constant 0 : index
      %282 = vector.load %arg8[%c0_78, %c0_79] : memref<16x128xf32, #tpu.memory_space<vmem>>, vector<16x128xf32>
      tpu.vector_store %arg8[%c0_78, %c0_79], %281 {strides = array<i32>} : memref<16x128xf32, #tpu.memory_space<vmem>>, vector<16x128xf32>,
    } else {
    }
    %c0 = arith.constant 0 : index
    %c0_1 = arith.constant 0 : index
    %3 = vector.load %arg1[%c0, %c0_1] : memref<128x128xf32, #tpu.memory_space<vmem>>, vector<128x128xf32>
    %c0_2 = arith.constant 0 : index
    %c0_3 = arith.constant 0 : index
    %4 = vector.load %arg2[%c0_2, %c0_3] : memref<128x512xf32, #tpu.memory_space<vmem>>, vector<128x512xf32>
    %cst = arith.constant dense<0.000000e+00> : vector<128x512xf32>
    %5 = tpu.matmul %3, %4, %cst {dimension_numbers = #tpu.dot_dimension_numbers<[1], [0], [0], [1], [0, 0, 1, 1], [], []>} : vector<128x128xf32>, vector<128x512xf32>, vector<128x512xf32> -> vector<128x512xf32>
    %c0_4 = arith.constant 0 : index
    %c0_5 = arith.constant 0 : index
    %6 = vector.load %arg4[%c0_4, %c0_5] : memref<1x512xf32, #tpu.memory_space<vmem>>, vector<1x512xf32>
    %7 = vector.broadcast %6 : vector<1x512xf32> to vector<128x512xf32>
    %8 = arith.addf %5, %7 : vector<128x512xf32>
    %c0_6 = arith.constant 0 : index
    %c0_7 = arith.constant 0 : index
    %9 = vector.load %arg6[%c0_6, %c0_7] : memref<128x512xf32, #tpu.memory_space<vmem>>, vector<128x512xf32>
    tpu.vector_store %arg6[%c0_6, %c0_7], %8 {strides = array<i32>} : memref<128x512xf32, #tpu.memory_space<vmem>>, vector<128x512xf32>,
    %c0_8 = arith.constant 0 : index
    %c0_9 = arith.constant 0 : index
    %10 = vector.load %arg3[%c0_8, %c0_9] : memref<128x512xf32, #tpu.memory_space<vmem>>, vector<128x512xf32>
    %c0_10 = arith.constant 0 : index
    %c0_11 = arith.constant 0 : index
    %11 = vector.load %arg7[%c0_10, %c0_11] : memref<16x128xf32, #tpu.memory_space<vmem>>, vector<16x128xf32>
    %c0_12 = arith.constant 0 : index
    %c0_13 = arith.constant 0 : index
    %12 = vector.load %arg8[%c0_12, %c0_13] : memref<16x128xf32, #tpu.memory_space<vmem>>, vector<16x128xf32>
    %c0_i32_14 = arith.constant 0 : i32
    %c16_i32 = arith.constant 16 : i32
    %13 = arith.muli %c0_i32_14, %c16_i32 : i32
    %14 = tpu.assume_multiple %13, 16 : i32
    %15 = arith.index_cast %14 : i32 to index
    %c0_15 = arith.constant 0 : index
    %16 = vector.load %arg6[%15, %c0_15] : memref<128x512xf32, #tpu.memory_space<vmem>>, vector<16x512xf32>
    %cst_16 = arith.constant dense<0.000000e+00> : vector<16x512xf32>
    %17 = tpu.matmul %11, %10, %cst_16 {dimension_numbers = #tpu.dot_dimension_numbers<[1], [0], [0], [1], [0, 0, 1, 1], [], []>} : vector<16x128xf32>, vector<128x512xf32>, vector<16x512xf32> -> vector<16x512xf32>
    %18 = arith.addf %16, %17 : vector<16x512xf32>
    %19 = vector.extract_strided_slice %18 {offsets = [0, 0], sizes = [16, 128], strides = [1, 1]} : vector<16x512xf32> to vector<16x128xf32>
    %20 = arith.negf %19 : vector<16x128xf32>
    %21 = math.exp %20 : vector<16x128xf32>
    %cst_17 = arith.constant 1.000000e+00 : f32
    %22 = vector.broadcast %cst_17 : f32 to vector<16x128xf32>
    %23 = arith.addf %22, %21 : vector<16x128xf32>
    %24 = arith.divf %22, %23 : vector<16x128xf32>
    %25 = vector.extract_strided_slice %18 {offsets = [0, 128], sizes = [16, 128], strides = [1, 1]} : vector<16x512xf32> to vector<16x128xf32>
    %26 = arith.negf %25 : vector<16x128xf32>
    %27 = math.exp %26 : vector<16x128xf32>
    %cst_18 = arith.constant 1.000000e+00 : f32
    %28 = vector.broadcast %cst_18 : f32 to vector<16x128xf32>
    %29 = arith.addf %28, %27 : vector<16x128xf32>
    %30 = arith.divf %28, %29 : vector<16x128xf32>
    %31 = vector.extract_strided_slice %18 {offsets = [0, 256], sizes = [16, 128], strides = [1, 1]} : vector<16x512xf32> to vector<16x128xf32>
    %32 = math.tanh %31 : vector<16x128xf32>
    %33 = vector.extract_strided_slice %18 {offsets = [0, 384], sizes = [16, 128], strides = [1, 1]} : vector<16x512xf32> to vector<16x128xf32>
    %34 = arith.negf %33 : vector<16x128xf32>
    %35 = math.exp %34 : vector<16x128xf32>
    %cst_19 = arith.constant 1.000000e+00 : f32
    %36 = vector.broadcast %cst_19 : f32 to vector<16x128xf32>
    %37 = arith.addf %36, %35 : vector<16x128xf32>
    %38 = arith.divf %36, %37 : vector<16x128xf32>
    %39 = arith.mulf %30, %12 : vector<16x128xf32>
    %40 = arith.mulf %24, %32 : vector<16x128xf32>
    %41 = arith.addf %39, %40 : vector<16x128xf32>
    %42 = math.tanh %41 : vector<16x128xf32>
    %43 = arith.mulf %38, %42 : vector<16x128xf32>
    %44 = arith.index_cast %14 : i32 to index
    %c0_20 = arith.constant 0 : index
    %45 = vector.load %arg5[%44, %c0_20] : memref<128x128xf32, #tpu.memory_space<vmem>>, vector<16x128xf32>
    tpu.vector_store %arg5[%44, %c0_20], %43 {strides = array<i32>} : memref<128x128xf32, #tpu.memory_space<vmem>>, vector<16x128xf32>,
    %c1_i32 = arith.constant 1 : i32
    %c16_i32_21 = arith.constant 16 : i32
    %46 = arith.muli %c1_i32, %c16_i32_21 : i32
    %47 = tpu.assume_multiple %46, 16 : i32
    %48 = arith.index_cast %47 : i32 to index
    %c0_22 = arith.constant 0 : index
    %49 = vector.load %arg6[%48, %c0_22] : memref<128x512xf32, #tpu.memory_space<vmem>>, vector<16x512xf32>
    %cst_23 = arith.constant dense<0.000000e+00> : vector<16x512xf32>
    %50 = tpu.matmul %43, %10, %cst_23 {dimension_numbers = #tpu.dot_dimension_numbers<[1], [0], [0], [1], [0, 0, 1, 1], [], []>} : vector<16x128xf32>, vector<128x512xf32>, vector<16x512xf32> -> vector<16x512xf32>
    %51 = arith.addf %49, %50 : vector<16x512xf32>
    %52 = vector.extract_strided_slice %51 {offsets = [0, 0], sizes = [16, 128], strides = [1, 1]} : vector<16x512xf32> to vector<16x128xf32>
    %53 = arith.negf %52 : vector<16x128xf32>
    %54 = math.exp %53 : vector<16x128xf32>
    %cst_24 = arith.constant 1.000000e+00 : f32
    %55 = vector.broadcast %cst_24 : f32 to vector<16x128xf32>
    %56 = arith.addf %55, %54 : vector<16x128xf32>
    %57 = arith.divf %55, %56 : vector<16x128xf32>
    %58 = vector.extract_strided_slice %51 {offsets = [0, 128], sizes = [16, 128], strides = [1, 1]} : vector<16x512xf32> to vector<16x128xf32>
    %59 = arith.negf %58 : vector<16x128xf32>
    %60 = math.exp %59 : vector<16x128xf32>
    %cst_25 = arith.constant 1.000000e+00 : f32
    %61 = vector.broadcast %cst_25 : f32 to vector<16x128xf32>
    %62 = arith.addf %61, %60 : vector<16x128xf32>
    %63 = arith.divf %61, %62 : vector<16x128xf32>
    %64 = vector.extract_strided_slice %51 {offsets = [0, 256], sizes = [16, 128], strides = [1, 1]} : vector<16x512xf32> to vector<16x128xf32>
    %65 = math.tanh %64 : vector<16x128xf32>
    %66 = vector.extract_strided_slice %51 {offsets = [0, 384], sizes = [16, 128], strides = [1, 1]} : vector<16x512xf32> to vector<16x128xf32>
    %67 = arith.negf %66 : vector<16x128xf32>
    %68 = math.exp %67 : vector<16x128xf32>
    %cst_26 = arith.constant 1.000000e+00 : f32
    %69 = vector.broadcast %cst_26 : f32 to vector<16x128xf32>
    %70 = arith.addf %69, %68 : vector<16x128xf32>
    %71 = arith.divf %69, %70 : vector<16x128xf32>
    %72 = arith.mulf %63, %41 : vector<16x128xf32>
    %73 = arith.mulf %57, %65 : vector<16x128xf32>
    %74 = arith.addf %72, %73 : vector<16x128xf32>
    %75 = math.tanh %74 : vector<16x128xf32>
    %76 = arith.mulf %71, %75 : vector<16x128xf32>
    %77 = arith.index_cast %47 : i32 to index
    %c0_27 = arith.constant 0 : index
    %78 = vector.load %arg5[%77, %c0_27] : memref<128x128xf32, #tpu.memory_space<vmem>>, vector<16x128xf32>
    tpu.vector_store %arg5[%77, %c0_27], %76 {strides = array<i32>} : memref<128x128xf32, #tpu.memory_space<vmem>>, vector<16x128xf32>,
    %c2_i32 = arith.constant 2 : i32
    %c16_i32_28 = arith.constant 16 : i32
    %79 = arith.muli %c2_i32, %c16_i32_28 : i32
    %80 = tpu.assume_multiple %79, 16 : i32
    %81 = arith.index_cast %80 : i32 to index
    %c0_29 = arith.constant 0 : index
    %82 = vector.load %arg6[%81, %c0_29] : memref<128x512xf32, #tpu.memory_space<vmem>>, vector<16x512xf32>
    %cst_30 = arith.constant dense<0.000000e+00> : vector<16x512xf32>
    %83 = tpu.matmul %76, %10, %cst_30 {dimension_numbers = #tpu.dot_dimension_numbers<[1], [0], [0], [1], [0, 0, 1, 1], [], []>} : vector<16x128xf32>, vector<128x512xf32>, vector<16x512xf32> -> vector<16x512xf32>
    %84 = arith.addf %82, %83 : vector<16x512xf32>
    %85 = vector.extract_strided_slice %84 {offsets = [0, 0], sizes = [16, 128], strides = [1, 1]} : vector<16x512xf32> to vector<16x128xf32>
    %86 = arith.negf %85 : vector<16x128xf32>
    %87 = math.exp %86 : vector<16x128xf32>
    %cst_31 = arith.constant 1.000000e+00 : f32
    %88 = vector.broadcast %cst_31 : f32 to vector<16x128xf32>
    %89 = arith.addf %88, %87 : vector<16x128xf32>
    %90 = arith.divf %88, %89 : vector<16x128xf32>
    %91 = vector.extract_strided_slice %84 {offsets = [0, 128], sizes = [16, 128], strides = [1, 1]} : vector<16x512xf32> to vector<16x128xf32>
    %92 = arith.negf %91 : vector<16x128xf32>
    %93 = math.exp %92 : vector<16x128xf32>
    %cst_32 = arith.constant 1.000000e+00 : f32
    %94 = vector.broadcast %cst_32 : f32 to vector<16x128xf32>
    %95 = arith.addf %94, %93 : vector<16x128xf32>
    %96 = arith.divf %94, %95 : vector<16x128xf32>
    %97 = vector.extract_strided_slice %84 {offsets = [0, 256], sizes = [16, 128], strides = [1, 1]} : vector<16x512xf32> to vector<16x128xf32>
    %98 = math.tanh %97 : vector<16x128xf32>
    %99 = vector.extract_strided_slice %84 {offsets = [0, 384], sizes = [16, 128], strides = [1, 1]} : vector<16x512xf32> to vector<16x128xf32>
    %100 = arith.negf %99 : vector<16x128xf32>
    %101 = math.exp %100 : vector<16x128xf32>
    %cst_33 = arith.constant 1.000000e+00 : f32
    %102 = vector.broadcast %cst_33 : f32 to vector<16x128xf32>
    %103 = arith.addf %102, %101 : vector<16x128xf32>
    %104 = arith.divf %102, %103 : vector<16x128xf32>
    %105 = arith.mulf %96, %74 : vector<16x128xf32>
    %106 = arith.mulf %90, %98 : vector<16x128xf32>
    %107 = arith.addf %105, %106 : vector<16x128xf32>
    %108 = math.tanh %107 : vector<16x128xf32>
    %109 = arith.mulf %104, %108 : vector<16x128xf32>
    %110 = arith.index_cast %80 : i32 to index
    %c0_34 = arith.constant 0 : index
    %111 = vector.load %arg5[%110, %c0_34] : memref<128x128xf32, #tpu.memory_space<vmem>>, vector<16x128xf32>
    tpu.vector_store %arg5[%110, %c0_34], %109 {strides = array<i32>} : memref<128x128xf32, #tpu.memory_space<vmem>>, vector<16x128xf32>,
    %c3_i32 = arith.constant 3 : i32
    %c16_i32_35 = arith.constant 16 : i32
    %112 = arith.muli %c3_i32, %c16_i32_35 : i32
    %113 = tpu.assume_multiple %112, 16 : i32
    %114 = arith.index_cast %113 : i32 to index
    %c0_36 = arith.constant 0 : index
    %115 = vector.load %arg6[%114, %c0_36] : memref<128x512xf32, #tpu.memory_space<vmem>>, vector<16x512xf32>
    %cst_37 = arith.constant dense<0.000000e+00> : vector<16x512xf32>
    %116 = tpu.matmul %109, %10, %cst_37 {dimension_numbers = #tpu.dot_dimension_numbers<[1], [0], [0], [1], [0, 0, 1, 1], [], []>} : vector<16x128xf32>, vector<128x512xf32>, vector<16x512xf32> -> vector<16x512xf32>
    %117 = arith.addf %115, %116 : vector<16x512xf32>
    %118 = vector.extract_strided_slice %117 {offsets = [0, 0], sizes = [16, 128], strides = [1, 1]} : vector<16x512xf32> to vector<16x128xf32>
    %119 = arith.negf %118 : vector<16x128xf32>
    %120 = math.exp %119 : vector<16x128xf32>
    %cst_38 = arith.constant 1.000000e+00 : f32
    %121 = vector.broadcast %cst_38 : f32 to vector<16x128xf32>
    %122 = arith.addf %121, %120 : vector<16x128xf32>
    %123 = arith.divf %121, %122 : vector<16x128xf32>
    %124 = vector.extract_strided_slice %117 {offsets = [0, 128], sizes = [16, 128], strides = [1, 1]} : vector<16x512xf32> to vector<16x128xf32>
    %125 = arith.negf %124 : vector<16x128xf32>
    %126 = math.exp %125 : vector<16x128xf32>
    %cst_39 = arith.constant 1.000000e+00 : f32
    %127 = vector.broadcast %cst_39 : f32 to vector<16x128xf32>
    %128 = arith.addf %127, %126 : vector<16x128xf32>
    %129 = arith.divf %127, %128 : vector<16x128xf32>
    %130 = vector.extract_strided_slice %117 {offsets = [0, 256], sizes = [16, 128], strides = [1, 1]} : vector<16x512xf32> to vector<16x128xf32>
    %131 = math.tanh %130 : vector<16x128xf32>
    %132 = vector.extract_strided_slice %117 {offsets = [0, 384], sizes = [16, 128], strides = [1, 1]} : vector<16x512xf32> to vector<16x128xf32>
    %133 = arith.negf %132 : vector<16x128xf32>
    %134 = math.exp %133 : vector<16x128xf32>
    %cst_40 = arith.constant 1.000000e+00 : f32
    %135 = vector.broadcast %cst_40 : f32 to vector<16x128xf32>
    %136 = arith.addf %135, %134 : vector<16x128xf32>
    %137 = arith.divf %135, %136 : vector<16x128xf32>
    %138 = arith.mulf %129, %107 : vector<16x128xf32>
    %139 = arith.mulf %123, %131 : vector<16x128xf32>
    %140 = arith.addf %138, %139 : vector<16x128xf32>
    %141 = math.tanh %140 : vector<16x128xf32>
    %142 = arith.mulf %137, %141 : vector<16x128xf32>
    %143 = arith.index_cast %113 : i32 to index
    %c0_41 = arith.constant 0 : index
    %144 = vector.load %arg5[%143, %c0_41] : memref<128x128xf32, #tpu.memory_space<vmem>>, vector<16x128xf32>
    tpu.vector_store %arg5[%143, %c0_41], %142 {strides = array<i32>} : memref<128x128xf32, #tpu.memory_space<vmem>>, vector<16x128xf32>,
    %c4_i32 = arith.constant 4 : i32
    %c16_i32_42 = arith.constant 16 : i32
    %145 = arith.muli %c4_i32, %c16_i32_42 : i32
    %146 = tpu.assume_multiple %145, 16 : i32
    %147 = arith.index_cast %146 : i32 to index
    %c0_43 = arith.constant 0 : index
    %148 = vector.load %arg6[%147, %c0_43] : memref<128x512xf32, #tpu.memory_space<vmem>>, vector<16x512xf32>
    %cst_44 = arith.constant dense<0.000000e+00> : vector<16x512xf32>
    %149 = tpu.matmul %142, %10, %cst_44 {dimension_numbers = #tpu.dot_dimension_numbers<[1], [0], [0], [1], [0, 0, 1, 1], [], []>} : vector<16x128xf32>, vector<128x512xf32>, vector<16x512xf32> -> vector<16x512xf32>
    %150 = arith.addf %148, %149 : vector<16x512xf32>
    %151 = vector.extract_strided_slice %150 {offsets = [0, 0], sizes = [16, 128], strides = [1, 1]} : vector<16x512xf32> to vector<16x128xf32>
    %152 = arith.negf %151 : vector<16x128xf32>
    %153 = math.exp %152 : vector<16x128xf32>
    %cst_45 = arith.constant 1.000000e+00 : f32
    %154 = vector.broadcast %cst_45 : f32 to vector<16x128xf32>
    %155 = arith.addf %154, %153 : vector<16x128xf32>
    %156 = arith.divf %154, %155 : vector<16x128xf32>
    %157 = vector.extract_strided_slice %150 {offsets = [0, 128], sizes = [16, 128], strides = [1, 1]} : vector<16x512xf32> to vector<16x128xf32>
    %158 = arith.negf %157 : vector<16x128xf32>
    %159 = math.exp %158 : vector<16x128xf32>
    %cst_46 = arith.constant 1.000000e+00 : f32
    %160 = vector.broadcast %cst_46 : f32 to vector<16x128xf32>
    %161 = arith.addf %160, %159 : vector<16x128xf32>
    %162 = arith.divf %160, %161 : vector<16x128xf32>
    %163 = vector.extract_strided_slice %150 {offsets = [0, 256], sizes = [16, 128], strides = [1, 1]} : vector<16x512xf32> to vector<16x128xf32>
    %164 = math.tanh %163 : vector<16x128xf32>
    %165 = vector.extract_strided_slice %150 {offsets = [0, 384], sizes = [16, 128], strides = [1, 1]} : vector<16x512xf32> to vector<16x128xf32>
    %166 = arith.negf %165 : vector<16x128xf32>
    %167 = math.exp %166 : vector<16x128xf32>
    %cst_47 = arith.constant 1.000000e+00 : f32
    %168 = vector.broadcast %cst_47 : f32 to vector<16x128xf32>
    %169 = arith.addf %168, %167 : vector<16x128xf32>
    %170 = arith.divf %168, %169 : vector<16x128xf32>
    %171 = arith.mulf %162, %140 : vector<16x128xf32>
    %172 = arith.mulf %156, %164 : vector<16x128xf32>
    %173 = arith.addf %171, %172 : vector<16x128xf32>
    %174 = math.tanh %173 : vector<16x128xf32>
    %175 = arith.mulf %170, %174 : vector<16x128xf32>
    %176 = arith.index_cast %146 : i32 to index
    %c0_48 = arith.constant 0 : index
    %177 = vector.load %arg5[%176, %c0_48] : memref<128x128xf32, #tpu.memory_space<vmem>>, vector<16x128xf32>
    tpu.vector_store %arg5[%176, %c0_48], %175 {strides = array<i32>} : memref<128x128xf32, #tpu.memory_space<vmem>>, vector<16x128xf32>,
    %c5_i32 = arith.constant 5 : i32
    %c16_i32_49 = arith.constant 16 : i32
    %178 = arith.muli %c5_i32, %c16_i32_49 : i32
    %179 = tpu.assume_multiple %178, 16 : i32
    %180 = arith.index_cast %179 : i32 to index
    %c0_50 = arith.constant 0 : index
    %181 = vector.load %arg6[%180, %c0_50] : memref<128x512xf32, #tpu.memory_space<vmem>>, vector<16x512xf32>
    %cst_51 = arith.constant dense<0.000000e+00> : vector<16x512xf32>
    %182 = tpu.matmul %175, %10, %cst_51 {dimension_numbers = #tpu.dot_dimension_numbers<[1], [0], [0], [1], [0, 0, 1, 1], [], []>} : vector<16x128xf32>, vector<128x512xf32>, vector<16x512xf32> -> vector<16x512xf32>
    %183 = arith.addf %181, %182 : vector<16x512xf32>
    %184 = vector.extract_strided_slice %183 {offsets = [0, 0], sizes = [16, 128], strides = [1, 1]} : vector<16x512xf32> to vector<16x128xf32>
    %185 = arith.negf %184 : vector<16x128xf32>
    %186 = math.exp %185 : vector<16x128xf32>
    %cst_52 = arith.constant 1.000000e+00 : f32
    %187 = vector.broadcast %cst_52 : f32 to vector<16x128xf32>
    %188 = arith.addf %187, %186 : vector<16x128xf32>
    %189 = arith.divf %187, %188 : vector<16x128xf32>
    %190 = vector.extract_strided_slice %183 {offsets = [0, 128], sizes = [16, 128], strides = [1, 1]} : vector<16x512xf32> to vector<16x128xf32>
    %191 = arith.negf %190 : vector<16x128xf32>
    %192 = math.exp %191 : vector<16x128xf32>
    %cst_53 = arith.constant 1.000000e+00 : f32
    %193 = vector.broadcast %cst_53 : f32 to vector<16x128xf32>
    %194 = arith.addf %193, %192 : vector<16x128xf32>
    %195 = arith.divf %193, %194 : vector<16x128xf32>
    %196 = vector.extract_strided_slice %183 {offsets = [0, 256], sizes = [16, 128], strides = [1, 1]} : vector<16x512xf32> to vector<16x128xf32>
    %197 = math.tanh %196 : vector<16x128xf32>
    %198 = vector.extract_strided_slice %183 {offsets = [0, 384], sizes = [16, 128], strides = [1, 1]} : vector<16x512xf32> to vector<16x128xf32>
    %199 = arith.negf %198 : vector<16x128xf32>
    %200 = math.exp %199 : vector<16x128xf32>
    %cst_54 = arith.constant 1.000000e+00 : f32
    %201 = vector.broadcast %cst_54 : f32 to vector<16x128xf32>
    %202 = arith.addf %201, %200 : vector<16x128xf32>
    %203 = arith.divf %201, %202 : vector<16x128xf32>
    %204 = arith.mulf %195, %173 : vector<16x128xf32>
    %205 = arith.mulf %189, %197 : vector<16x128xf32>
    %206 = arith.addf %204, %205 : vector<16x128xf32>
    %207 = math.tanh %206 : vector<16x128xf32>
    %208 = arith.mulf %203, %207 : vector<16x128xf32>
    %209 = arith.index_cast %179 : i32 to index
    %c0_55 = arith.constant 0 : index
    %210 = vector.load %arg5[%209, %c0_55] : memref<128x128xf32, #tpu.memory_space<vmem>>, vector<16x128xf32>
    tpu.vector_store %arg5[%209, %c0_55], %208 {strides = array<i32>} : memref<128x128xf32, #tpu.memory_space<vmem>>, vector<16x128xf32>,
    %c6_i32 = arith.constant 6 : i32
    %c16_i32_56 = arith.constant 16 : i32
    %211 = arith.muli %c6_i32, %c16_i32_56 : i32
    %212 = tpu.assume_multiple %211, 16 : i32
    %213 = arith.index_cast %212 : i32 to index
    %c0_57 = arith.constant 0 : index
    %214 = vector.load %arg6[%213, %c0_57] : memref<128x512xf32, #tpu.memory_space<vmem>>, vector<16x512xf32>
    %cst_58 = arith.constant dense<0.000000e+00> : vector<16x512xf32>
    %215 = tpu.matmul %208, %10, %cst_58 {dimension_numbers = #tpu.dot_dimension_numbers<[1], [0], [0], [1], [0, 0, 1, 1], [], []>} : vector<16x128xf32>, vector<128x512xf32>, vector<16x512xf32> -> vector<16x512xf32>
    %216 = arith.addf %214, %215 : vector<16x512xf32>
    %217 = vector.extract_strided_slice %216 {offsets = [0, 0], sizes = [16, 128], strides = [1, 1]} : vector<16x512xf32> to vector<16x128xf32>
    %218 = arith.negf %217 : vector<16x128xf32>
    %219 = math.exp %218 : vector<16x128xf32>
    %cst_59 = arith.constant 1.000000e+00 : f32
    %220 = vector.broadcast %cst_59 : f32 to vector<16x128xf32>
    %221 = arith.addf %220, %219 : vector<16x128xf32>
    %222 = arith.divf %220, %221 : vector<16x128xf32>
    %223 = vector.extract_strided_slice %216 {offsets = [0, 128], sizes = [16, 128], strides = [1, 1]} : vector<16x512xf32> to vector<16x128xf32>
    %224 = arith.negf %223 : vector<16x128xf32>
    %225 = math.exp %224 : vector<16x128xf32>
    %cst_60 = arith.constant 1.000000e+00 : f32
    %226 = vector.broadcast %cst_60 : f32 to vector<16x128xf32>
    %227 = arith.addf %226, %225 : vector<16x128xf32>
    %228 = arith.divf %226, %227 : vector<16x128xf32>
    %229 = vector.extract_strided_slice %216 {offsets = [0, 256], sizes = [16, 128], strides = [1, 1]} : vector<16x512xf32> to vector<16x128xf32>
    %230 = math.tanh %229 : vector<16x128xf32>
    %231 = vector.extract_strided_slice %216 {offsets = [0, 384], sizes = [16, 128], strides = [1, 1]} : vector<16x512xf32> to vector<16x128xf32>
    %232 = arith.negf %231 : vector<16x128xf32>
    %233 = math.exp %232 : vector<16x128xf32>
    %cst_61 = arith.constant 1.000000e+00 : f32
    %234 = vector.broadcast %cst_61 : f32 to vector<16x128xf32>
    %235 = arith.addf %234, %233 : vector<16x128xf32>
    %236 = arith.divf %234, %235 : vector<16x128xf32>
    %237 = arith.mulf %228, %206 : vector<16x128xf32>
    %238 = arith.mulf %222, %230 : vector<16x128xf32>
    %239 = arith.addf %237, %238 : vector<16x128xf32>
    %240 = math.tanh %239 : vector<16x128xf32>
    %241 = arith.mulf %236, %240 : vector<16x128xf32>
    %242 = arith.index_cast %212 : i32 to index
    %c0_62 = arith.constant 0 : index
    %243 = vector.load %arg5[%242, %c0_62] : memref<128x128xf32, #tpu.memory_space<vmem>>, vector<16x128xf32>
    tpu.vector_store %arg5[%242, %c0_62], %241 {strides = array<i32>} : memref<128x128xf32, #tpu.memory_space<vmem>>, vector<16x128xf32>,
    %c7_i32 = arith.constant 7 : i32
    %c16_i32_63 = arith.constant 16 : i32
    %244 = arith.muli %c7_i32, %c16_i32_63 : i32
    %245 = tpu.assume_multiple %244, 16 : i32
    %246 = arith.index_cast %245 : i32 to index
    %c0_64 = arith.constant 0 : index
    %247 = vector.load %arg6[%246, %c0_64] : memref<128x512xf32, #tpu.memory_space<vmem>>, vector<16x512xf32>
    %cst_65 = arith.constant dense<0.000000e+00> : vector<16x512xf32>
    %248 = tpu.matmul %241, %10, %cst_65 {dimension_numbers = #tpu.dot_dimension_numbers<[1], [0], [0], [1], [0, 0, 1, 1], [], []>} : vector<16x128xf32>, vector<128x512xf32>, vector<16x512xf32> -> vector<16x512xf32>
    %249 = arith.addf %247, %248 : vector<16x512xf32>
    %250 = vector.extract_strided_slice %249 {offsets = [0, 0], sizes = [16, 128], strides = [1, 1]} : vector<16x512xf32> to vector<16x128xf32>
    %251 = arith.negf %250 : vector<16x128xf32>
    %252 = math.exp %251 : vector<16x128xf32>
    %cst_66 = arith.constant 1.000000e+00 : f32
    %253 = vector.broadcast %cst_66 : f32 to vector<16x128xf32>
    %254 = arith.addf %253, %252 : vector<16x128xf32>
    %255 = arith.divf %253, %254 : vector<16x128xf32>
    %256 = vector.extract_strided_slice %249 {offsets = [0, 128], sizes = [16, 128], strides = [1, 1]} : vector<16x512xf32> to vector<16x128xf32>
    %257 = arith.negf %256 : vector<16x128xf32>
    %258 = math.exp %257 : vector<16x128xf32>
    %cst_67 = arith.constant 1.000000e+00 : f32
    %259 = vector.broadcast %cst_67 : f32 to vector<16x128xf32>
    %260 = arith.addf %259, %258 : vector<16x128xf32>
    %261 = arith.divf %259, %260 : vector<16x128xf32>
    %262 = vector.extract_strided_slice %249 {offsets = [0, 256], sizes = [16, 128], strides = [1, 1]} : vector<16x512xf32> to vector<16x128xf32>
    %263 = math.tanh %262 : vector<16x128xf32>
    %264 = vector.extract_strided_slice %249 {offsets = [0, 384], sizes = [16, 128], strides = [1, 1]} : vector<16x512xf32> to vector<16x128xf32>
    %265 = arith.negf %264 : vector<16x128xf32>
    %266 = math.exp %265 : vector<16x128xf32>
    %cst_68 = arith.constant 1.000000e+00 : f32
    %267 = vector.broadcast %cst_68 : f32 to vector<16x128xf32>
    %268 = arith.addf %267, %266 : vector<16x128xf32>
    %269 = arith.divf %267, %268 : vector<16x128xf32>
    %270 = arith.mulf %261, %239 : vector<16x128xf32>
    %271 = arith.mulf %255, %263 : vector<16x128xf32>
    %272 = arith.addf %270, %271 : vector<16x128xf32>
    %273 = math.tanh %272 : vector<16x128xf32>
    %274 = arith.mulf %269, %273 : vector<16x128xf32>
    %275 = arith.index_cast %245 : i32 to index
    %c0_69 = arith.constant 0 : index
    %276 = vector.load %arg5[%275, %c0_69] : memref<128x128xf32, #tpu.memory_space<vmem>>, vector<16x128xf32>
    tpu.vector_store %arg5[%275, %c0_69], %274 {strides = array<i32>} : memref<128x128xf32, #tpu.memory_space<vmem>>, vector<16x128xf32>,
    %c8_i32 = arith.constant 8 : i32
    %c0_70 = arith.constant 0 : index
    %c0_71 = arith.constant 0 : index
    %277 = vector.load %arg7[%c0_70, %c0_71] : memref<16x128xf32, #tpu.memory_space<vmem>>, vector<16x128xf32>
    tpu.vector_store %arg7[%c0_70, %c0_71], %274 {strides = array<i32>} : memref<16x128xf32, #tpu.memory_space<vmem>>, vector<16x128xf32>,
    %c0_72 = arith.constant 0 : index
    %c0_73 = arith.constant 0 : index
    %278 = vector.load %arg8[%c0_72, %c0_73] : memref<16x128xf32, #tpu.memory_space<vmem>>, vector<16x128xf32>
    tpu.vector_store %arg8[%c0_72, %c0_73], %272 {strides = array<i32>} : memref<16x128xf32, #tpu.memory_space<vmem>>, vector<16x128xf32>,
    return
  }
  func.func @transform_0(%arg0: i32) -> (i32, i32) {
    %c0_i32 = arith.constant 0 : i32
    %c0_i32_0 = arith.constant 0 : i32
    return %arg0, %c0_i32 : i32, i32
  }
  func.func @transform_1(%arg0: i32) -> (i32, i32) {
    %c0_i32 = arith.constant 0 : i32
    %c0_i32_0 = arith.constant 0 : i32
    %c0_i32_1 = arith.constant 0 : i32
    return %c0_i32, %c0_i32_0 : i32, i32
  }
  func.func @transform_2(%arg0: i32) -> (i32, i32) {
    %c0_i32 = arith.constant 0 : i32
    %c0_i32_0 = arith.constant 0 : i32
    %c0_i32_1 = arith.constant 0 : i32
    return %c0_i32, %c0_i32_0 : i32, i32
  }
  func.func @transform_3(%arg0: i32) -> (i32, i32) {
    %c0_i32 = arith.constant 0 : i32
    %c0_i32_0 = arith.constant 0 : i32
    %c0_i32_1 = arith.constant 0 : i32
    return %c0_i32, %c0_i32_0 : i32, i32
  }
  func.func @transform_4(%arg0: i32) -> (i32, i32) {
    %c0_i32 = arith.constant 0 : i32
    %c0_i32_0 = arith.constant 0 : i32
    return %arg0, %c0_i32 : i32, i32
  }
}

</mosaic_0001>

<llo_original>
// kernel: tpu_custom_call.1
$region0: #{tpu_custom_call.1}
  #allocation0 [shape = 'u32[]', space=smem, size = 0x4, offset = 0x4, fixed_abs, tag = 'smem constant byte address 0x4 - core index']
  #allocation1 [shape = 'u32[144,128]{1,0:T(1,128)}', space=vmem, size = 0x12000, scoped, tag = 'internal scratch']
  #allocation2 [shape = 'f32[128,512]{1,0:T(8,128)}', space=vmem, size = 0x40000, scoped, tag = 'scratch operand']
  #allocation3 [shape = 'f32[16,128]{1,0:T(8,128)}', space=vmem, size = 0x2000, scoped, tag = 'scratch operand']
  #allocation4 [shape = 'f32[16,128]{1,0:T(8,128)}', space=vmem, size = 0x2000, scoped, tag = 'scratch operand']
  %s0 = inlined_call_operand.hbm [shape: f32[128,128], index: 0, kind: input, shape index: {}]
  %s1 = inlined_call_operand.hbm [shape: f32[128,512], index: 1, kind: input, shape index: {}]
  %s2 = inlined_call_operand.hbm [shape: f32[128,512], index: 2, kind: input, shape index: {}]
  %s3 = inlined_call_operand.vmem [shape: f32[1,512], index: 3, kind: input, shape index: {}]
  %s4 = inlined_call_operand.hbm [shape: f32[128,128], index: 4, kind: output, shape index: {}]
  %s5 = sld [smem:[#allocation0]]
  $region42: #{tpu_custom_call.1} parent=0
    _
  %s7 = ssub.s32 1, %s5
  %s8 = scalar_select 0, %s7, %s5
  $region1: #{tpu_custom_call.1} parent=0
    #allocation5 [shape = 'u8[65536]{0}', space=vmem, size = 0x10000, scoped, tag = 'input window, operand 0, single buffered']
    #allocation6 [shape = 's32[1]{0}', space=sflag, size = 0x4, scoped, tag = 'scoped memory for tpu_custom_call.1']
    #allocation7 [shape = 's32[1]{0}', space=sflag, size = 0x4, scoped, tag = 'scoped memory for tpu_custom_call.1']
    #allocation8 [shape = 'u8[262144]{0}', space=vmem, size = 0x40000, scoped, tag = 'input window, operand 1, single buffered']
    #allocation9 [shape = 's32[1]{0}', space=sflag, size = 0x4, scoped, tag = 'scoped memory for tpu_custom_call.1']
    #allocation10 [shape = 'u8[262144]{0}', space=vmem, size = 0x40000, scoped, tag = 'input window, operand 2, single buffered']
    #allocation11 [shape = 'u8[65536]{0}', space=vmem, size = 0x10000, scoped, tag = 'output window, operand 0, single buffered']
    %9 = vsyncpa [#allocation6], 0
    %10 = vsyncpa [#allocation9], 0
    %11 = vsyncpa [#allocation7], 0
    // Predicated region
    $region2: #{tpu_custom_call.1} parent=1 // pred_check
      _
    $region3: #{tpu_custom_call.1} parent=1 // pred_check_branch
      %13 = sbr.rel (0) target = $region5
    $region4: #{tpu_custom_call.1} parent=1 // pred_region
      %s15 = ssub.s32 2048, 2048
      %16 = vsyncadd [#allocation6], %s15
      %s17 = sshll.u32 [#allocation5], 4
      %s18 = int_to_ptr.vmem [resolvable:$true] %s17
      %23 = dma.hbm_to_vmem [thread:$0]  %s0, 2048, %s18, [#allocation6], 128, 128, 8
    $region5: #{tpu_custom_call.1} parent=1 // pred_fallthru
      _
    // Predicated region
    $region6: #{tpu_custom_call.1} parent=1 // pred_check
      _
    $region7: #{tpu_custom_call.1} parent=1 // pred_check_branch
      %25 = sbr.rel (0) target = $region9
    $region8: #{tpu_custom_call.1} parent=1 // pred_region
      %s27 = ssub.s32 8192, 8192
      %28 = vsyncadd [#allocation9], %s27
      %s29 = sshll.u32 [#allocation8], 4
      %s30 = int_to_ptr.vmem [resolvable:$true] %s29
      %35 = dma.hbm_to_vmem [thread:$0]  %s1, 8192, %s30, [#allocation9], 512, 512, 32
    $region9: #{tpu_custom_call.1} parent=1 // pred_fallthru
      _
    // Predicated region
    $region10: #{tpu_custom_call.1} parent=1 // pred_check
      _
    $region11: #{tpu_custom_call.1} parent=1 // pred_check_branch
      %37 = sbr.rel (0) target = $region13
    $region12: #{tpu_custom_call.1} parent=1 // pred_region
      %s39 = ssub.s32 8192, 8192
      %40 = vsyncadd [#allocation9], %s39
      %s41 = sshll.u32 [#allocation10], 4
      %s42 = int_to_ptr.vmem [resolvable:$true] %s41
      %47 = dma.hbm_to_vmem [thread:$0]  %s2, 8192, %s42, [#allocation9], 512, 512, 32
    $region13: #{tpu_custom_call.1} parent=1 // pred_fallthru
      _
    // Predicated region
    $region14: #{tpu_custom_call.1} parent=1 // pred_check
      _
    $region15: #{tpu_custom_call.1} parent=1 // pred_check_branch
      %49 = sbr.rel (0) target = $region17
    $region16: #{tpu_custom_call.1} parent=1 // pred_region
      _
    $region17: #{tpu_custom_call.1} parent=1 // pred_fallthru
      _
    // Predicated region
    $region18: #{tpu_custom_call.1} parent=1 // pred_check
      _
    $region19: #{tpu_custom_call.1} parent=1 // pred_check_branch
      %51 = sbr.rel (0) target = $region21
    $region20: #{tpu_custom_call.1} parent=1 // pred_region
      %52 = dma.done [#allocation6], 2048
    $region21: #{tpu_custom_call.1} parent=1 // pred_fallthru
      _
    // Predicated region
    $region22: #{tpu_custom_call.1} parent=1 // pred_check
      _
    $region23: #{tpu_custom_call.1} parent=1 // pred_check_branch
      %54 = sbr.rel (0) target = $region25
    $region24: #{tpu_custom_call.1} parent=1 // pred_region
      %55 = dma.done [#allocation9], 8192
    $region25: #{tpu_custom_call.1} parent=1 // pred_fallthru
      _
    // Predicated region
    $region26: #{tpu_custom_call.1} parent=1 // pred_check
      _
    $region27: #{tpu_custom_call.1} parent=1 // pred_check_branch
      %57 = sbr.rel (0) target = $region29
    $region28: #{tpu_custom_call.1} parent=1 // pred_region
      %58 = dma.done [#allocation9], 8192
    $region29: #{tpu_custom_call.1} parent=1 // pred_fallthru
      _
    %p59 = scmp.eq.s32.totalorder 0, 0
    // Predicated region
    $region30: #{tpu_custom_call.1} parent=1 // pred_check
      %p60 = pneg %p59
    $region31: #{tpu_custom_call.1} parent=1 // pred_check_branch
      %62 = sbr.rel (%p60) target = $region33
    $region32: #{tpu_custom_call.1} parent=1 // pred_region
      %63 = vst [vmem:[#allocation3] sm:$0xff] 0.0
      %64 = vst [vmem:[#allocation3 + $0x8] sm:$0xff] 0.0
      %65 = vst [vmem:[#allocation4] sm:$0xff] 0.0
      %66 = vst [vmem:[#allocation4 + $0x8] sm:$0xff] 0.0
    $region33: #{tpu_custom_call.1} parent=1 // pred_fallthru
      _
    %v67 = vld [vmem:[#allocation5] sm:$0xff]
    %v68 = vld [vmem:[#allocation5 + $0x8] sm:$0xff]
    %v69 = vld [vmem:[#allocation5 + $0x10] sm:$0xff]
    %v70 = vld [vmem:[#allocation5 + $0x18] sm:$0xff]
    %v71 = vld [vmem:[#allocation5 + $0x20] sm:$0xff]
    %v72 = vld [vmem:[#allocation5 + $0x28] sm:$0xff]
    %v73 = vld [vmem:[#allocation5 + $0x30] sm:$0xff]
    %v74 = vld [vmem:[#allocation5 + $0x38] sm:$0xff]
    %v75 = vld [vmem:[#allocation5 + $0x40] sm:$0xff]
    %v76 = vld [vmem:[#allocation5 + $0x48] sm:$0xff]
    %v77 = vld [vmem:[#allocation5 + $0x50] sm:$0xff]
    %v78 = vld [vmem:[#allocation5 + $0x58] sm:$0xff]
    %v79 = vld [vmem:[#allocation5 + $0x60] sm:$0xff]
    %v80 = vld [vmem:[#allocation5 + $0x68] sm:$0xff]
    %v81 = vld [vmem:[#allocation5 + $0x70] sm:$0xff]
    %v82 = vld [vmem:[#allocation5 + $0x78] sm:$0xff]
    %v83 = vld [vmem:[#allocation8] sm:$0xff]
    %v84 = vld [vmem:[#allocation8 + $0x8] sm:$0xff]
    %v85 = vld [vmem:[#allocation8 + $0x10] sm:$0xff]
    %v86 = vld [vmem:[#allocation8 + $0x18] sm:$0xff]
    %v87 = vld [vmem:[#allocation8 + $0x20] sm:$0xff]
    %v88 = vld [vmem:[#allocation8 + $0x28] sm:$0xff]
    %v89 = vld [vmem:[#allocation8 + $0x30] sm:$0xff]
    %v90 = vld [vmem:[#allocation8 + $0x38] sm:$0xff]
    %v91 = vld [vmem:[#allocation8 + $0x40] sm:$0xff]
    %v92 = vld [vmem:[#allocation8 + $0x48] sm:$0xff]
    %v93 = vld [vmem:[#allocation8 + $0x50] sm:$0xff]
    %v94 = vld [vmem:[#allocation8 + $0x58] sm:$0xff]
    %v95 = vld [vmem:[#allocation8 + $0x60] sm:$0xff]
    %v96 = vld [vmem:[#allocation8 + $0x68] sm:$0xff]
    %v97 = vld [vmem:[#allocation8 + $0x70] sm:$0xff]
    %v98 = vld [vmem:[#allocation8 + $0x78] sm:$0xff]
    %v99 = vld [vmem:[#allocation8 + $0x80] sm:$0xff]
    %v100 = vld [vmem:[#allocation8 + $0x88] sm:$0xff]
    %v101 = vld [vmem:[#allocation8 + $0x90] sm:$0xff]
    %v102 = vld [vmem:[#allocation8 + $0x98] sm:$0xff]
    %v103 = vld [vmem:[#allocation8 + $0xa0] sm:$0xff]
    %v104 = vld [vmem:[#allocation8 + $0xa8] sm:$0xff]
    %v105 = vld [vmem:[#allocation8 + $0xb0] sm:$0xff]
    %v106 = vld [vmem:[#allocation8 + $0xb8] sm:$0xff]
    %v107 = vld [vmem:[#allocation8 + $0xc0] sm:$0xff]
    %v108 = vld [vmem:[#allocation8 + $0xc8] sm:$0xff]
    %v109 = vld [vmem:[#allocation8 + $0xd0] sm:$0xff]
    %v110 = vld [vmem:[#allocation8 + $0xd8] sm:$0xff]
    %v111 = vld [vmem:[#allocation8 + $0xe0] sm:$0xff]
    %v112 = vld [vmem:[#allocation8 + $0xe8] sm:$0xff]
    %v113 = vld [vmem:[#allocation8 + $0xf0] sm:$0xff]
    %v114 = vld [vmem:[#allocation8 + $0xf8] sm:$0xff]
    %v115 = vld [vmem:[#allocation8 + $0x100] sm:$0xff]
    %v116 = vld [vmem:[#allocation8 + $0x108] sm:$0xff]
    %v117 = vld [vmem:[#allocation8 + $0x110] sm:$0xff]
    %v118 = vld [vmem:[#allocation8 + $0x118] sm:$0xff]
    %v119 = vld [vmem:[#allocation8 + $0x120] sm:$0xff]
    %v120 = vld [vmem:[#allocation8 + $0x128] sm:$0xff]
    %v121 = vld [vmem:[#allocation8 + $0x130] sm:$0xff]
    %v122 = vld [vmem:[#allocation8 + $0x138] sm:$0xff]
    %v123 = vld [vmem:[#allocation8 + $0x140] sm:$0xff]
    %v124 = vld [vmem:[#allocation8 + $0x148] sm:$0xff]
    %v125 = vld [vmem:[#allocation8 + $0x150] sm:$0xff]
    %v126 = vld [vmem:[#allocation8 + $0x158] sm:$0xff]
    %v127 = vld [vmem:[#allocation8 + $0x160] sm:$0xff]
    %v128 = vld [vmem:[#allocation8 + $0x168] sm:$0xff]
    %v129 = vld [vmem:[#allocation8 + $0x170] sm:$0xff]
    %v130 = vld [vmem:[#allocation8 + $0x178] sm:$0xff]
    %v131 = vld [vmem:[#allocation8 + $0x180] sm:$0xff]
    %v132 = vld [vmem:[#allocation8 + $0x188] sm:$0xff]
    %v133 = vld [vmem:[#allocation8 + $0x190] sm:$0xff]
    %v134 = vld [vmem:[#allocation8 + $0x198] sm:$0xff]
    %v135 = vld [vmem:[#allocation8 + $0x1a0] sm:$0xff]
    %v136 = vld [vmem:[#allocation8 + $0x1a8] sm:$0xff]
    %v137 = vld [vmem:[#allocation8 + $0x1b0] sm:$0xff]
    %v138 = vld [vmem:[#allocation8 + $0x1b8] sm:$0xff]
    %v139 = vld [vmem:[#allocation8 + $0x1c0] sm:$0xff]
    %v140 = vld [vmem:[#allocation8 + $0x1c8] sm:$0xff]
    %v141 = vld [vmem:[#allocation8 + $0x1d0] sm:$0xff]
    %v142 = vld [vmem:[#allocation8 + $0x1d8] sm:$0xff]
    %v143 = vld [vmem:[#allocation8 + $0x1e0] sm:$0xff]
    %v144 = vld [vmem:[#allocation8 + $0x1e8] sm:$0xff]
    %v145 = vld [vmem:[#allocation8 + $0x1f0] sm:$0xff]
    %v146 = vld [vmem:[#allocation8 + $0x1f8] sm:$0xff]
    %v147 = vld [vmem:[%s3] sm:$0xf]
    %v149 = vlaneseq
    %v150 = vshrl.u32 %v149, 7
    %v151 = vsub.s32 0, %v150
    %v152 = vrot.slane %v147, %v151
    %v153 = vlaneseq
    %v154 = vshrl.u32 %v153, 7
    %v155 = vsub.s32 1, %v154
    %v156 = vrot.slane %v147, %v155
    %v157 = vlaneseq
    %v158 = vshrl.u32 %v157, 7
    %v159 = vsub.s32 2, %v158
    %v160 = vrot.slane %v147, %v159
    %v161 = vlaneseq
    %v162 = vshrl.u32 %v161, 7
    %v163 = vsub.s32 3, %v162
    %v164 = vrot.slane %v147, %v163
    %169 = vmatprep.subr.mxu0 %v84
    %170 = vmatpush1.msra.mxu0 %v83
    %171 = vmatprep.subr.mxu0 %v88
    %172 = vmatpush1.msra.mxu0 %v87
    %173 = vmatprep.subr.mxu0 %v92
    %174 = vmatpush1.msra.mxu0 %v91
    %175 = vmatprep.subr.mxu0 %v96
    %176 = vmatpush1.msra.mxu0 %v95
    %177 = vmatprep.subr.mxu0 %v100
    %178 = vmatpush1.msra.mxu0 %v99
    %179 = vmatprep.subr.mxu0 %v104
    %180 = vmatpush1.msra.mxu0 %v103
    %181 = vmatprep.subr.mxu0 %v108
    %182 = vmatpush1.msra.mxu0 %v107
    %183 = vmatprep.subr.mxu0 %v112
    %184 = vmatpush1.msra.mxu0 %v111
    %185 = vmatprep.subr.mxu0 %v116
    %186 = vmatpush1.msra.mxu0 %v115
    %187 = vmatprep.subr.mxu0 %v120
    %188 = vmatpush1.msra.mxu0 %v119
    %189 = vmatprep.subr.mxu0 %v124
    %190 = vmatpush1.msra.mxu0 %v123
    %191 = vmatprep.subr.mxu0 %v128
    %192 = vmatpush1.msra.mxu0 %v127
    %193 = vmatprep.subr.mxu0 %v132
    %194 = vmatpush1.msra.mxu0 %v131
    %195 = vmatprep.subr.mxu0 %v136
    %196 = vmatpush1.msra.mxu0 %v135
    %197 = vmatprep.subr.mxu0 %v140
    %198 = vmatpush1.msra.mxu0 %v139
    %199 = vmatprep.subr.mxu0 %v144
    %200 = vmatpush1.msra.mxu0 %v143
    %201 = vmatprep.subr.mxu0 0.0
    %202 = vmatpush1.msra.mxu0 0.0
    %203 = vmatprep.subr.mxu0 0.0
    %204 = vmatpush1.msra.mxu0 0.0
    %205 = vmatprep.subr.mxu0 0.0
    %206 = vmatpush1.msra.mxu0 0.0
    %207 = vmatprep.subr.mxu0 0.0
    %208 = vmatpush1.msra.mxu0 0.0
    %209 = vmatprep.subr.mxu0 0.0
    %210 = vmatpush1.msra.mxu0 0.0
    %211 = vmatprep.subr.mxu0 0.0
    %212 = vmatpush1.msra.mxu0 0.0
    %213 = vmatprep.subr.mxu0 0.0
    %214 = vmatpush1.msra.mxu0 0.0
    %215 = vmatprep.subr.mxu0 0.0
    %216 = vmatpush1.msra.mxu0 0.0
    %217 = vmatprep.subr.mxu0 0.0
    %218 = vmatpush1.msra.mxu0 0.0
    %219 = vmatprep.subr.mxu0 0.0
    %220 = vmatpush1.msra.mxu0 0.0
    %221 = vmatprep.subr.mxu0 0.0
    %222 = vmatpush1.msra.mxu0 0.0
    %223 = vmatprep.subr.mxu0 0.0
    %224 = vmatpush1.msra.mxu0 0.0
    %225 = vmatprep.subr.mxu0 0.0
    %226 = vmatpush1.msra.mxu0 0.0
    %227 = vmatprep.subr.mxu0 0.0
    %228 = vmatpush1.msra.mxu0 0.0
    %229 = vmatprep.subr.mxu0 0.0
    %230 = vmatpush1.msra.mxu0 0.0
    %231 = vmatprep.subr.mxu0 0.0
    %232 = vmatpush1.msra.mxu0 0.0
    %233 = vmatprep.mubr.f32.mxu0 0.0
    %234 = vmatmul.mubr.f32.gmra.mrb[0].mxu0 %v67
    %v235 = vpop.f32.mrb[0].mxu0
    %v236 = vadd.f32 %v152, %v235
    %v237 = vpop.f32.mrb[0].mxu0
    %v238 = vadd.f32 %v156, %v237
    %239 = vmatprep.mubr.f32.mxu0 0.0
    %240 = vmatmul.mubr.f32.gmra.mrb[0].mxu0 %v68
    %v241 = vpop.f32.mrb[0].mxu0
    %v242 = vadd.f32 %v152, %v241
    %v243 = vpop.f32.mrb[0].mxu0
    %v244 = vadd.f32 %v156, %v243
    %245 = vmatprep.mubr.f32.mxu0 0.0
    %246 = vmatmul.mubr.f32.gmra.mrb[0].mxu0 %v69
    %v247 = vpop.f32.mrb[0].mxu0
    %v248 = vadd.f32 %v152, %v247
    %v249 = vpop.f32.mrb[0].mxu0
    %v250 = vadd.f32 %v156, %v249
    %251 = vmatprep.mubr.f32.mxu0 0.0
    %252 = vmatmul.mubr.f32.gmra.mrb[0].mxu0 %v70
    %v253 = vpop.f32.mrb[0].mxu0
    %v254 = vadd.f32 %v152, %v253
    %v255 = vpop.f32.mrb[0].mxu0
    %v256 = vadd.f32 %v156, %v255
    %257 = vmatprep.mubr.f32.mxu0 0.0
    %258 = vmatmul.mubr.f32.gmra.mrb[0].mxu0 %v71
    %v259 = vpop.f32.mrb[0].mxu0
    %v260 = vadd.f32 %v152, %v259
    %v261 = vpop.f32.mrb[0].mxu0
    %v262 = vadd.f32 %v156, %v261
    %263 = vmatprep.mubr.f32.mxu0 0.0
    %264 = vmatmul.mubr.f32.gmra.mrb[0].mxu0 %v72
    %v265 = vpop.f32.mrb[0].mxu0
    %v266 = vadd.f32 %v152, %v265
    %v267 = vpop.f32.mrb[0].mxu0
    %v268 = vadd.f32 %v156, %v267
    %269 = vmatprep.mubr.f32.mxu0 0.0
    %270 = vmatmul.mubr.f32.gmra.mrb[0].mxu0 %v73
    %v271 = vpop.f32.mrb[0].mxu0
    %v272 = vadd.f32 %v152, %v271
    %v273 = vpop.f32.mrb[0].mxu0
    %v274 = vadd.f32 %v156, %v273
    %275 = vmatprep.mubr.f32.mxu0 0.0
    %276 = vmatmul.mubr.f32.gmra.mrb[0].mxu0 %v74
    %v277 = vpop.f32.mrb[0].mxu0
    %v278 = vadd.f32 %v152, %v277
    %v279 = vpop.f32.mrb[0].mxu0
    %v280 = vadd.f32 %v156, %v279
    %281 = vmatprep.mubr.f32.mxu0 0.0
    %282 = vmatmul.mubr.f32.gmra.mrb[0].mxu0 %v75
    %v283 = vpop.f32.mrb[0].mxu0
    %v284 = vadd.f32 %v152, %v283
    %v285 = vpop.f32.mrb[0].mxu0
    %v286 = vadd.f32 %v156, %v285
    %287 = vmatprep.mubr.f32.mxu0 0.0
    %288 = vmatmul.mubr.f32.gmra.mrb[0].mxu0 %v76
    %v289 = vpop.f32.mrb[0].mxu0
    %v290 = vadd.f32 %v152, %v289
    %v291 = vpop.f32.mrb[0].mxu0
    %v292 = vadd.f32 %v156, %v291
    %293 = vmatprep.mubr.f32.mxu0 0.0
    %294 = vmatmul.mubr.f32.gmra.mrb[0].mxu0 %v77
    %v295 = vpop.f32.mrb[0].mxu0
    %v296 = vadd.f32 %v152, %v295
    %v297 = vpop.f32.mrb[0].mxu0
    %v298 = vadd.f32 %v156, %v297
    %299 = vmatprep.mubr.f32.mxu0 0.0
    %300 = vmatmul.mubr.f32.gmra.mrb[0].mxu0 %v78
    %v301 = vpop.f32.mrb[0].mxu0
    %v302 = vadd.f32 %v152, %v301
    %v303 = vpop.f32.mrb[0].mxu0
    %v304 = vadd.f32 %v156, %v303
    %305 = vmatprep.mubr.f32.mxu0 0.0
    %306 = vmatmul.mubr.f32.gmra.mrb[0].mxu0 %v79
    %v307 = vpop.f32.mrb[0].mxu0
    %v308 = vadd.f32 %v152, %v307
    %v309 = vpop.f32.mrb[0].mxu0
    %v310 = vadd.f32 %v156, %v309
    %311 = vmatprep.mubr.f32.mxu0 0.0
    %312 = vmatmul.mubr.f32.gmra.mrb[0].mxu0 %v80
    %v313 = vpop.f32.mrb[0].mxu0
    %v314 = vadd.f32 %v152, %v313
    %v315 = vpop.f32.mrb[0].mxu0
    %v316 = vadd.f32 %v156, %v315
    %317 = vmatprep.mubr.f32.mxu0 0.0
    %318 = vmatmul.mubr.f32.gmra.mrb[0].mxu0 %v81
    %v319 = vpop.f32.mrb[0].mxu0
    %v320 = vadd.f32 %v152, %v319
    %v321 = vpop.f32.mrb[0].mxu0
    %v322 = vadd.f32 %v156, %v321
    %323 = vmatprep.mubr.f32.mxu0 0.0
    %324 = vmatmul.mubr.f32.gmra.mrb[0].mxu0 %v82
    %v325 = vpop.f32.mrb[0].mxu0
    %v326 = vadd.f32 %v152, %v325
    %v327 = vpop.f32.mrb[0].mxu0
    %v328 = vadd.f32 %v156, %v327
    %329 = vdwg.mxu0
    %330 = vmatprep.subr.mxu0 %v86
    %331 = vmatpush1.msra.mxu0 %v85
    %332 = vmatprep.subr.mxu0 %v90
    %333 = vmatpush1.msra.mxu0 %v89
    %334 = vmatprep.subr.mxu0 %v94
    %335 = vmatpush1.msra.mxu0 %v93
    %336 = vmatprep.subr.mxu0 %v98
    %337 = vmatpush1.msra.mxu0 %v97
    %338 = vmatprep.subr.mxu0 %v102
    %339 = vmatpush1.msra.mxu0 %v101
    %340 = vmatprep.subr.mxu0 %v106
    %341 = vmatpush1.msra.mxu0 %v105
    %342 = vmatprep.subr.mxu0 %v110
    %343 = vmatpush1.msra.mxu0 %v109
    %344 = vmatprep.subr.mxu0 %v114
    %345 = vmatpush1.msra.mxu0 %v113
    %346 = vmatprep.subr.mxu0 %v118
    %347 = vmatpush1.msra.mxu0 %v117
    %348 = vmatprep.subr.mxu0 %v122
    %349 = vmatpush1.msra.mxu0 %v121
    %350 = vmatprep.subr.mxu0 %v126
    %351 = vmatpush1.msra.mxu0 %v125
    %352 = vmatprep.subr.mxu0 %v130
    %353 = vmatpush1.msra.mxu0 %v129
    %354 = vmatprep.subr.mxu0 %v134
    %355 = vmatpush1.msra.mxu0 %v133
    %356 = vmatprep.subr.mxu0 %v138
    %357 = vmatpush1.msra.mxu0 %v137
    %358 = vmatprep.subr.mxu0 %v142
    %359 = vmatpush1.msra.mxu0 %v141
    %360 = vmatprep.subr.mxu0 %v146
    %361 = vmatpush1.msra.mxu0 %v145
    %362 = vmatprep.subr.mxu0 0.0
    %363 = vmatpush1.msra.mxu0 0.0
    %364 = vmatprep.subr.mxu0 0.0
    %365 = vmatpush1.msra.mxu0 0.0
    %366 = vmatprep.subr.mxu0 0.0
    %367 = vmatpush1.msra.mxu0 0.0
    %368 = vmatprep.subr.mxu0 0.0
    %369 = vmatpush1.msra.mxu0 0.0
    %370 = vmatprep.subr.mxu0 0.0
    %371 = vmatpush1.msra.mxu0 0.0
    %372 = vmatprep.subr.mxu0 0.0
    %373 = vmatpush1.msra.mxu0 0.0
    %374 = vmatprep.subr.mxu0 0.0
    %375 = vmatpush1.msra.mxu0 0.0
    %376 = vmatprep.subr.mxu0 0.0
    %377 = vmatpush1.msra.mxu0 0.0
    %378 = vmatprep.subr.mxu0 0.0
    %379 = vmatpush1.msra.mxu0 0.0
    %380 = vmatprep.subr.mxu0 0.0
    %381 = vmatpush1.msra.mxu0 0.0
    %382 = vmatprep.subr.mxu0 0.0
    %383 = vmatpush1.msra.mxu0 0.0
    %384 = vmatprep.subr.mxu0 0.0
    %385 = vmatpush1.msra.mxu0 0.0
    %386 = vmatprep.subr.mxu0 0.0
    %387 = vmatpush1.msra.mxu0 0.0
    %388 = vmatprep.subr.mxu0 0.0
    %389 = vmatpush1.msra.mxu0 0.0
    %390 = vmatprep.subr.mxu0 0.0
    %391 = vmatpush1.msra.mxu0 0.0
    %392 = vmatprep.subr.mxu0 0.0
    %393 = vmatpush1.msra.mxu0 0.0
    %394 = vmatprep.mubr.f32.mxu0 0.0
    %395 = vmatmul.mubr.f32.gmra.mrb[0].mxu0 %v67
    %v396 = vpop.f32.mrb[0].mxu0
    %v397 = vadd.f32 %v160, %v396
    %v398 = vpop.f32.mrb[0].mxu0
    %v399 = vadd.f32 %v164, %v398
    %400 = vmatprep.mubr.f32.mxu0 0.0
    %401 = vmatmul.mubr.f32.gmra.mrb[0].mxu0 %v68
    %v402 = vpop.f32.mrb[0].mxu0
    %v403 = vadd.f32 %v160, %v402
    %v404 = vpop.f32.mrb[0].mxu0
    %v405 = vadd.f32 %v164, %v404
    %406 = vmatprep.mubr.f32.mxu0 0.0
    %407 = vmatmul.mubr.f32.gmra.mrb[0].mxu0 %v69
    %v408 = vpop.f32.mrb[0].mxu0
    %v409 = vadd.f32 %v160, %v408
    %v410 = vpop.f32.mrb[0].mxu0
    %v411 = vadd.f32 %v164, %v410
    %412 = vmatprep.mubr.f32.mxu0 0.0
    %413 = vmatmul.mubr.f32.gmra.mrb[0].mxu0 %v70
    %v414 = vpop.f32.mrb[0].mxu0
    %v415 = vadd.f32 %v160, %v414
    %v416 = vpop.f32.mrb[0].mxu0
    %v417 = vadd.f32 %v164, %v416
    %418 = vmatprep.mubr.f32.mxu0 0.0
    %419 = vmatmul.mubr.f32.gmra.mrb[0].mxu0 %v71
    %v420 = vpop.f32.mrb[0].mxu0
    %v421 = vadd.f32 %v160, %v420
    %v422 = vpop.f32.mrb[0].mxu0
    %v423 = vadd.f32 %v164, %v422
    %424 = vmatprep.mubr.f32.mxu0 0.0
    %425 = vmatmul.mubr.f32.gmra.mrb[0].mxu0 %v72
    %v426 = vpop.f32.mrb[0].mxu0
    %v427 = vadd.f32 %v160, %v426
    %v428 = vpop.f32.mrb[0].mxu0
    %v429 = vadd.f32 %v164, %v428
    %430 = vmatprep.mubr.f32.mxu0 0.0
    %431 = vmatmul.mubr.f32.gmra.mrb[0].mxu0 %v73
    %v432 = vpop.f32.mrb[0].mxu0
    %v433 = vadd.f32 %v160, %v432
    %v434 = vpop.f32.mrb[0].mxu0
    %v435 = vadd.f32 %v164, %v434
    %436 = vmatprep.mubr.f32.mxu0 0.0
    %437 = vmatmul.mubr.f32.gmra.mrb[0].mxu0 %v74
    %v438 = vpop.f32.mrb[0].mxu0
    %v439 = vadd.f32 %v160, %v438
    %v440 = vpop.f32.mrb[0].mxu0
    %v441 = vadd.f32 %v164, %v440
    %442 = vmatprep.mubr.f32.mxu0 0.0
    %443 = vmatmul.mubr.f32.gmra.mrb[0].mxu0 %v75
    %v444 = vpop.f32.mrb[0].mxu0
    %v445 = vadd.f32 %v160, %v444
    %v446 = vpop.f32.mrb[0].mxu0
    %v447 = vadd.f32 %v164, %v446
    %448 = vmatprep.mubr.f32.mxu0 0.0
    %449 = vmatmul.mubr.f32.gmra.mrb[0].mxu0 %v76
    %v450 = vpop.f32.mrb[0].mxu0
    %v451 = vadd.f32 %v160, %v450
    %v452 = vpop.f32.mrb[0].mxu0
    %v453 = vadd.f32 %v164, %v452
    %454 = vmatprep.mubr.f32.mxu0 0.0
    %455 = vmatmul.mubr.f32.gmra.mrb[0].mxu0 %v77
    %v456 = vpop.f32.mrb[0].mxu0
    %v457 = vadd.f32 %v160, %v456
    %v458 = vpop.f32.mrb[0].mxu0
    %v459 = vadd.f32 %v164, %v458
    %460 = vmatprep.mubr.f32.mxu0 0.0
    %461 = vmatmul.mubr.f32.gmra.mrb[0].mxu0 %v78
    %v462 = vpop.f32.mrb[0].mxu0
    %v463 = vadd.f32 %v160, %v462
    %v464 = vpop.f32.mrb[0].mxu0
    %v465 = vadd.f32 %v164, %v464
    %466 = vmatprep.mubr.f32.mxu0 0.0
    %467 = vmatmul.mubr.f32.gmra.mrb[0].mxu0 %v79
    %v468 = vpop.f32.mrb[0].mxu0
    %v469 = vadd.f32 %v160, %v468
    %v470 = vpop.f32.mrb[0].mxu0
    %v471 = vadd.f32 %v164, %v470
    %472 = vmatprep.mubr.f32.mxu0 0.0
    %473 = vmatmul.mubr.f32.gmra.mrb[0].mxu0 %v80
    %v474 = vpop.f32.mrb[0].mxu0
    %v475 = vadd.f32 %v160, %v474
    %v476 = vpop.f32.mrb[0].mxu0
    %v477 = vadd.f32 %v164, %v476
    %478 = vmatprep.mubr.f32.mxu0 0.0
    %479 = vmatmul.mubr.f32.gmra.mrb[0].mxu0 %v81
    %v480 = vpop.f32.mrb[0].mxu0
    %v481 = vadd.f32 %v160, %v480
    %v482 = vpop.f32.mrb[0].mxu0
    %v483 = vadd.f32 %v164, %v482
    %484 = vmatprep.mubr.f32.mxu0 0.0
    %485 = vmatmul.mubr.f32.gmra.mrb[0].mxu0 %v82
    %v486 = vpop.f32.mrb[0].mxu0
    %v487 = vadd.f32 %v160, %v486
    %v488 = vpop.f32.mrb[0].mxu0
    %v489 = vadd.f32 %v164, %v488
    %490 = vdwg.mxu0
    %491 = vst [vmem:[#allocation2] sm:$0xff] %v236
    %492 = vst [vmem:[#allocation2 + $0x8] sm:$0xff] %v238
    %493 = vst [vmem:[#allocation2 + $0x10] sm:$0xff] %v397
    %494 = vst [vmem:[#allocation2 + $0x18] sm:$0xff] %v399
    %495 = vst [vmem:[#allocation2 + $0x20] sm:$0xff] %v242
    %496 = vst [vmem:[#allocation2 + $0x28] sm:$0xff] %v244
    %497 = vst [vmem:[#allocation2 + $0x30] sm:$0xff] %v403
    %498 = vst [vmem:[#allocation2 + $0x38] sm:$0xff] %v405
    %499 = vst [vmem:[#allocation2 + $0x40] sm:$0xff] %v248
    %500 = vst [vmem:[#allocation2 + $0x48] sm:$0xff] %v250
    %501 = vst [vmem:[#allocation2 + $0x50] sm:$0xff] %v409
    %502 = vst [vmem:[#allocation2 + $0x58] sm:$0xff] %v411
    %503 = vst [vmem:[#allocation2 + $0x60] sm:$0xff] %v254
    %504 = vst [vmem:[#allocation2 + $0x68] sm:$0xff] %v256
    %505 = vst [vmem:[#allocation2 + $0x70] sm:$0xff] %v415
    %506 = vst [vmem:[#allocation2 + $0x78] sm:$0xff] %v417
    %507 = vst [vmem:[#allocation2 + $0x80] sm:$0xff] %v260
    %508 = vst [vmem:[#allocation2 + $0x88] sm:$0xff] %v262
    %509 = vst [vmem:[#allocation2 + $0x90] sm:$0xff] %v421
    %510 = vst [vmem:[#allocation2 + $0x98] sm:$0xff] %v423
    %511 = vst [vmem:[#allocation2 + $0xa0] sm:$0xff] %v266
    %512 = vst [vmem:[#allocation2 + $0xa8] sm:$0xff] %v268
    %513 = vst [vmem:[#allocation2 + $0xb0] sm:$0xff] %v427
    %514 = vst [vmem:[#allocation2 + $0xb8] sm:$0xff] %v429
    %515 = vst [vmem:[#allocation2 + $0xc0] sm:$0xff] %v272
    %516 = vst [vmem:[#allocation2 + $0xc8] sm:$0xff] %v274
    %517 = vst [vmem:[#allocation2 + $0xd0] sm:$0xff] %v433
    %518 = vst [vmem:[#allocation2 + $0xd8] sm:$0xff] %v435
    %519 = vst [vmem:[#allocation2 + $0xe0] sm:$0xff] %v278
    %520 = vst [vmem:[#allocation2 + $0xe8] sm:$0xff] %v280
    %521 = vst [vmem:[#allocation2 + $0xf0] sm:$0xff] %v439
    %522 = vst [vmem:[#allocation2 + $0xf8] sm:$0xff] %v441
    %523 = vst [vmem:[#allocation2 + $0x100] sm:$0xff] %v284
    %524 = vst [vmem:[#allocation2 + $0x108] sm:$0xff] %v286
    %525 = vst [vmem:[#allocation2 + $0x110] sm:$0xff] %v445
    %526 = vst [vmem:[#allocation2 + $0x118] sm:$0xff] %v447
    %527 = vst [vmem:[#allocation2 + $0x120] sm:$0xff] %v290
    %528 = vst [vmem:[#allocation2 + $0x128] sm:$0xff] %v292
    %529 = vst [vmem:[#allocation2 + $0x130] sm:$0xff] %v451
    %530 = vst [vmem:[#allocation2 + $0x138] sm:$0xff] %v453
    %531 = vst [vmem:[#allocation2 + $0x140] sm:$0xff] %v296
    %532 = vst [vmem:[#allocation2 + $0x148] sm:$0xff] %v298
    %533 = vst [vmem:[#allocation2 + $0x150] sm:$0xff] %v457
    %534 = vst [vmem:[#allocation2 + $0x158] sm:$0xff] %v459
    %535 = vst [vmem:[#allocation2 + $0x160] sm:$0xff] %v302
    %536 = vst [vmem:[#allocation2 + $0x168] sm:$0xff] %v304
    %537 = vst [vmem:[#allocation2 + $0x170] sm:$0xff] %v463
    %538 = vst [vmem:[#allocation2 + $0x178] sm:$0xff] %v465
    %539 = vst [vmem:[#allocation2 + $0x180] sm:$0xff] %v308
    %540 = vst [vmem:[#allocation2 + $0x188] sm:$0xff] %v310
    %541 = vst [vmem:[#allocation2 + $0x190] sm:$0xff] %v469
    %542 = vst [vmem:[#allocation2 + $0x198] sm:$0xff] %v471
    %543 = vst [vmem:[#allocation2 + $0x1a0] sm:$0xff] %v314
    %544 = vst [vmem:[#allocation2 + $0x1a8] sm:$0xff] %v316
    %545 = vst [vmem:[#allocation2 + $0x1b0] sm:$0xff] %v475
    %546 = vst [vmem:[#allocation2 + $0x1b8] sm:$0xff] %v477
    %547 = vst [vmem:[#allocation2 + $0x1c0] sm:$0xff] %v320
    %548 = vst [vmem:[#allocation2 + $0x1c8] sm:$0xff] %v322
    %549 = vst [vmem:[#allocation2 + $0x1d0] sm:$0xff] %v481
    %550 = vst [vmem:[#allocation2 + $0x1d8] sm:$0xff] %v483
    %551 = vst [vmem:[#allocation2 + $0x1e0] sm:$0xff] %v326
    %552 = vst [vmem:[#allocation2 + $0x1e8] sm:$0xff] %v328
    %553 = vst [vmem:[#allocation2 + $0x1f0] sm:$0xff] %v487
    %554 = vst [vmem:[#allocation2 + $0x1f8] sm:$0xff] %v489
    %v555 = vld [vmem:[#allocation10] sm:$0xff]
    %v556 = vld [vmem:[#allocation10 + $0x8] sm:$0xff]
    %v557 = vld [vmem:[#allocation10 + $0x10] sm:$0xff]
    %v558 = vld [vmem:[#allocation10 + $0x18] sm:$0xff]
    %v559 = vld [vmem:[#allocation10 + $0x20] sm:$0xff]
    %v560 = vld [vmem:[#allocation10 + $0x28] sm:$0xff]
    %v561 = vld [vmem:[#allocation10 + $0x30] sm:$0xff]
    %v562 = vld [vmem:[#allocation10 + $0x38] sm:$0xff]
    %v563 = vld [vmem:[#allocation10 + $0x40] sm:$0xff]
    %v564 = vld [vmem:[#allocation10 + $0x48] sm:$0xff]
    %v565 = vld [vmem:[#allocation10 + $0x50] sm:$0xff]
    %v566 = vld [vmem:[#allocation10 + $0x58] sm:$0xff]
    %v567 = vld [vmem:[#allocation10 + $0x60] sm:$0xff]
    %v568 = vld [vmem:[#allocation10 + $0x68] sm:$0xff]
    %v569 = vld [vmem:[#allocation10 + $0x70] sm:$0xff]
    %v570 = vld [vmem:[#allocation10 + $0x78] sm:$0xff]
    %v571 = vld [vmem:[#allocation10 + $0x80] sm:$0xff]
    %v572 = vld [vmem:[#allocation10 + $0x88] sm:$0xff]
    %v573 = vld [vmem:[#allocation10 + $0x90] sm:$0xff]
    %v574 = vld [vmem:[#allocation10 + $0x98] sm:$0xff]
    %v575 = vld [vmem:[#allocation10 + $0xa0] sm:$0xff]
    %v576 = vld [vmem:[#allocation10 + $0xa8] sm:$0xff]
    %v577 = vld [vmem:[#allocation10 + $0xb0] sm:$0xff]
    %v578 = vld [vmem:[#allocation10 + $0xb8] sm:$0xff]
    %v579 = vld [vmem:[#allocation10 + $0xc0] sm:$0xff]
    %v580 = vld [vmem:[#allocation10 + $0xc8] sm:$0xff]
    %v581 = vld [vmem:[#allocation10 + $0xd0] sm:$0xff]
    %v582 = vld [vmem:[#allocation10 + $0xd8] sm:$0xff]
    %v583 = vld [vmem:[#allocation10 + $0xe0] sm:$0xff]
    %v584 = vld [vmem:[#allocation10 + $0xe8] sm:$0xff]
    %v585 = vld [vmem:[#allocation10 + $0xf0] sm:$0xff]
    %v586 = vld [vmem:[#allocation10 + $0xf8] sm:$0xff]
    %v587 = vld [vmem:[#allocation10 + $0x100] sm:$0xff]
    %v588 = vld [vmem:[#allocation10 + $0x108] sm:$0xff]
    %v589 = vld [vmem:[#allocation10 + $0x110] sm:$0xff]
    %v590 = vld [vmem:[#allocation10 + $0x118] sm:$0xff]
    %v591 = vld [vmem:[#allocation10 + $0x120] sm:$0xff]
    %v592 = vld [vmem:[#allocation10 + $0x128] sm:$0xff]
    %v593 = vld [vmem:[#allocation10 + $0x130] sm:$0xff]
    %v594 = vld [vmem:[#allocation10 + $0x138] sm:$0xff]
    %v595 = vld [vmem:[#allocation10 + $0x140] sm:$0xff]
    %v596 = vld [vmem:[#allocation10 + $0x148] sm:$0xff]
    %v597 = vld [vmem:[#allocation10 + $0x150] sm:$0xff]
    %v598 = vld [vmem:[#allocation10 + $0x158] sm:$0xff]
    %v599 = vld [vmem:[#allocation10 + $0x160] sm:$0xff]
    %v600 = vld [vmem:[#allocation10 + $0x168] sm:$0xff]
    %v601 = vld [vmem:[#allocation10 + $0x170] sm:$0xff]
    %v602 = vld [vmem:[#allocation10 + $0x178] sm:$0xff]
    %v603 = vld [vmem:[#allocation10 + $0x180] sm:$0xff]
    %v604 = vld [vmem:[#allocation10 + $0x188] sm:$0xff]
    %v605 = vld [vmem:[#allocation10 + $0x190] sm:$0xff]
    %v606 = vld [vmem:[#allocation10 + $0x198] sm:$0xff]
    %v607 = vld [vmem:[#allocation10 + $0x1a0] sm:$0xff]
    %v608 = vld [vmem:[#allocation10 + $0x1a8] sm:$0xff]
    %v609 = vld [vmem:[#allocation10 + $0x1b0] sm:$0xff]
    %v610 = vld [vmem:[#allocation10 + $0x1b8] sm:$0xff]
    %v611 = vld [vmem:[#allocation10 + $0x1c0] sm:$0xff]
    %v612 = vld [vmem:[#allocation10 + $0x1c8] sm:$0xff]
    %v613 = vld [vmem:[#allocation10 + $0x1d0] sm:$0xff]
    %v614 = vld [vmem:[#allocation10 + $0x1d8] sm:$0xff]
    %v615 = vld [vmem:[#allocation10 + $0x1e0] sm:$0xff]
    %v616 = vld [vmem:[#allocation10 + $0x1e8] sm:$0xff]
    %v617 = vld [vmem:[#allocation10 + $0x1f0] sm:$0xff]
    %v618 = vld [vmem:[#allocation10 + $0x1f8] sm:$0xff]
    %v619 = vld [vmem:[#allocation3] sm:$0xff]
    %v620 = vld [vmem:[#allocation3 + $0x8] sm:$0xff]
    %v621 = vld [vmem:[#allocation4] sm:$0xff]
    %v622 = vld [vmem:[#allocation4 + $0x8] sm:$0xff]
    %s623 = smul.u32 0, 4
    %s624 = smul.addr %s623, 8
    %s625 = scalar_lea.vmem [#allocation2], %s624
    %v626 = vld [vmem:[%s625] sm:$0xff]
    %v627 = vld [vmem:[%s625 + $0x8] sm:$0xff]
    %v628 = vld [vmem:[%s625 + $0x10] sm:$0xff]
    %v629 = vld [vmem:[%s625 + $0x18] sm:$0xff]
    %v630 = vld [vmem:[%s625 + $0x20] sm:$0xff]
    %v631 = vld [vmem:[%s625 + $0x28] sm:$0xff]
    %v632 = vld [vmem:[%s625 + $0x30] sm:$0xff]
    %v633 = vld [vmem:[%s625 + $0x38] sm:$0xff]
    %634 = vmatprep.subr.mxu0 %v556
    %635 = vmatpush1.msra.mxu0 %v555
    %636 = vmatprep.subr.mxu0 %v560
    %637 = vmatpush1.msra.mxu0 %v559
    %638 = vmatprep.subr.mxu0 %v564
    %639 = vmatpush1.msra.mxu0 %v563
    %640 = vmatprep.subr.mxu0 %v568
    %641 = vmatpush1.msra.mxu0 %v567
    %642 = vmatprep.subr.mxu0 %v572
    %643 = vmatpush1.msra.mxu0 %v571
    %644 = vmatprep.subr.mxu0 %v576
    %645 = vmatpush1.msra.mxu0 %v575
    %646 = vmatprep.subr.mxu0 %v580
    %647 = vmatpush1.msra.mxu0 %v579
    %648 = vmatprep.subr.mxu0 %v584
    %649 = vmatpush1.msra.mxu0 %v583
    %650 = vmatprep.subr.mxu0 %v588
    %651 = vmatpush1.msra.mxu0 %v587
    %652 = vmatprep.subr.mxu0 %v592
    %653 = vmatpush1.msra.mxu0 %v591
    %654 = vmatprep.subr.mxu0 %v596
    %655 = vmatpush1.msra.mxu0 %v595
    %656 = vmatprep.subr.mxu0 %v600
    %657 = vmatpush1.msra.mxu0 %v599
    %658 = vmatprep.subr.mxu0 %v604
    %659 = vmatpush1.msra.mxu0 %v603
    %660 = vmatprep.subr.mxu0 %v608
    %661 = vmatpush1.msra.mxu0 %v607
    %662 = vmatprep.subr.mxu0 %v612
    %663 = vmatpush1.msra.mxu0 %v611
    %664 = vmatprep.subr.mxu0 %v616
    %665 = vmatpush1.msra.mxu0 %v615
    %666 = vmatprep.subr.mxu0 0.0
    %667 = vmatpush1.msra.mxu0 0.0
    %668 = vmatprep.subr.mxu0 0.0
    %669 = vmatpush1.msra.mxu0 0.0
    %670 = vmatprep.subr.mxu0 0.0
    %671 = vmatpush1.msra.mxu0 0.0
    %672 = vmatprep.subr.mxu0 0.0
    %673 = vmatpush1.msra.mxu0 0.0
    %674 = vmatprep.subr.mxu0 0.0
    %675 = vmatpush1.msra.mxu0 0.0
    %676 = vmatprep.subr.mxu0 0.0
    %677 = vmatpush1.msra.mxu0 0.0
    %678 = vmatprep.subr.mxu0 0.0
    %679 = vmatpush1.msra.mxu0 0.0
    %680 = vmatprep.subr.mxu0 0.0
    %681 = vmatpush1.msra.mxu0 0.0
    %682 = vmatprep.subr.mxu0 0.0
    %683 = vmatpush1.msra.mxu0 0.0
    %684 = vmatprep.subr.mxu0 0.0
    %685 = vmatpush1.msra.mxu0 0.0
    %686 = vmatprep.subr.mxu0 0.0
    %687 = vmatpush1.msra.mxu0 0.0
    %688 = vmatprep.subr.mxu0 0.0
    %689 = vmatpush1.msra.mxu0 0.0
    %690 = vmatprep.subr.mxu0 0.0
    %691 = vmatpush1.msra.mxu0 0.0
    %692 = vmatprep.subr.mxu0 0.0
    %693 = vmatpush1.msra.mxu0 0.0
    %694 = vmatprep.subr.mxu0 0.0
    %695 = vmatpush1.msra.mxu0 0.0
    %696 = vmatprep.subr.mxu0 0.0
    %697 = vmatpush1.msra.mxu0 0.0
    %698 = vmatprep.mubr.f32.mxu0 0.0
    %699 = vmatmul.mubr.f32.gmra.mrb[0].mxu0 %v619
    %v700 = vpop.f32.mrb[0].mxu0
    %v701 = vadd.f32 0.0, %v700
    %v702 = vpop.f32.mrb[0].mxu0
    %v703 = vadd.f32 0.0, %v702
    %704 = vmatprep.mubr.f32.mxu0 0.0
    %705 = vmatmul.mubr.f32.gmra.mrb[0].mxu0 %v620
    %v706 = vpop.f32.mrb[0].mxu0
    %v707 = vadd.f32 0.0, %v706
    %v708 = vpop.f32.mrb[0].mxu0
    %v709 = vadd.f32 0.0, %v708
    %710 = vdwg.mxu0
    %711 = vmatprep.subr.mxu0 %v558
    %712 = vmatpush1.msra.mxu0 %v557
    %713 = vmatprep.subr.mxu0 %v562
    %714 = vmatpush1.msra.mxu0 %v561
    %715 = vmatprep.subr.mxu0 %v566
    %716 = vmatpush1.msra.mxu0 %v565
    %717 = vmatprep.subr.mxu0 %v570
    %718 = vmatpush1.msra.mxu0 %v569
    %719 = vmatprep.subr.mxu0 %v574
    %720 = vmatpush1.msra.mxu0 %v573
    %721 = vmatprep.subr.mxu0 %v578
    %722 = vmatpush1.msra.mxu0 %v577
    %723 = vmatprep.subr.mxu0 %v582
    %724 = vmatpush1.msra.mxu0 %v581
    %725 = vmatprep.subr.mxu0 %v586
    %726 = vmatpush1.msra.mxu0 %v585
    %727 = vmatprep.subr.mxu0 %v590
    %728 = vmatpush1.msra.mxu0 %v589
    %729 = vmatprep.subr.mxu0 %v594
    %730 = vmatpush1.msra.mxu0 %v593
    %731 = vmatprep.subr.mxu0 %v598
    %732 = vmatpush1.msra.mxu0 %v597
    %733 = vmatprep.subr.mxu0 %v602
    %734 = vmatpush1.msra.mxu0 %v601
    %735 = vmatprep.subr.mxu0 %v606
    %736 = vmatpush1.msra.mxu0 %v605
    %737 = vmatprep.subr.mxu0 %v610
    %738 = vmatpush1.msra.mxu0 %v609
    %739 = vmatprep.subr.mxu0 %v614
    %740 = vmatpush1.msra.mxu0 %v613
    %741 = vmatprep.subr.mxu0 %v618
    %742 = vmatpush1.msra.mxu0 %v617
    %743 = vmatprep.subr.mxu0 0.0
    %744 = vmatpush1.msra.mxu0 0.0
    %745 = vmatprep.subr.mxu0 0.0
    %746 = vmatpush1.msra.mxu0 0.0
    %747 = vmatprep.subr.mxu0 0.0
    %748 = vmatpush1.msra.mxu0 0.0
    %749 = vmatprep.subr.mxu0 0.0
    %750 = vmatpush1.msra.mxu0 0.0
    %751 = vmatprep.subr.mxu0 0.0
    %752 = vmatpush1.msra.mxu0 0.0
    %753 = vmatprep.subr.mxu0 0.0
    %754 = vmatpush1.msra.mxu0 0.0
    %755 = vmatprep.subr.mxu0 0.0
    %756 = vmatpush1.msra.mxu0 0.0
    %757 = vmatprep.subr.mxu0 0.0
    %758 = vmatpush1.msra.mxu0 0.0
    %759 = vmatprep.subr.mxu0 0.0
    %760 = vmatpush1.msra.mxu0 0.0
    %761 = vmatprep.subr.mxu0 0.0
    %762 = vmatpush1.msra.mxu0 0.0
    %763 = vmatprep.subr.mxu0 0.0
    %764 = vmatpush1.msra.mxu0 0.0
    %765 = vmatprep.subr.mxu0 0.0
    %766 = vmatpush1.msra.mxu0 0.0
    %767 = vmatprep.subr.mxu0 0.0
    %768 = vmatpush1.msra.mxu0 0.0
    %769 = vmatprep.subr.mxu0 0.0
    %770 = vmatpush1.msra.mxu0 0.0
    %771 = vmatprep.subr.mxu0 0.0
    %772 = vmatpush1.msra.mxu0 0.0
    %773 = vmatprep.subr.mxu0 0.0
    %774 = vmatpush1.msra.mxu0 0.0
    %775 = vmatprep.mubr.f32.mxu0 0.0
    %776 = vmatmul.mubr.f32.gmra.mrb[0].mxu0 %v619
    %v777 = vpop.f32.mrb[0].mxu0
    %v778 = vadd.f32 0.0, %v777
    %v779 = vpop.f32.mrb[0].mxu0
    %v780 = vadd.f32 0.0, %v779
    %781 = vmatprep.mubr.f32.mxu0 0.0
    %782 = vmatmul.mubr.f32.gmra.mrb[0].mxu0 %v620
    %v783 = vpop.f32.mrb[0].mxu0
    %v784 = vadd.f32 0.0, %v783
    %v785 = vpop.f32.mrb[0].mxu0
    %v786 = vadd.f32 0.0, %v785
    %787 = vdwg.mxu0
    %v788 = vadd.f32 %v626, %v701
    %v789 = vadd.f32 %v627, %v703
    %v790 = vadd.f32 %v628, %v778
    %v791 = vadd.f32 %v629, %v780
    %v792 = vadd.f32 %v630, %v707
    %v793 = vadd.f32 %v631, %v709
    %v794 = vadd.f32 %v632, %v784
    %v795 = vadd.f32 %v633, %v786
    %v796 = vxor.u32 %v788, 2147483648
    %v797 = vxor.u32 %v792, 2147483648
    %v798 = vmul.f32 %v796, 1.442695
    %v799 = vpow.pop %v798
    %v800 = vmul.f32 %v797, 1.442695
    %v801 = vpow.pop %v800
    %v802 = vadd.f32 %v799, 1.0
    %v803 = vadd.f32 %v801, 1.0
    %v804 = vrcp.pop %v802
    %v805 = vmul.f32 1.0, %v804
    %v806 = vrcp.pop %v803
    %v807 = vmul.f32 1.0, %v806
    %v808 = vxor.u32 %v789, 2147483648
    %v809 = vxor.u32 %v793, 2147483648
    %v810 = vmul.f32 %v808, 1.442695
    %v811 = vpow.pop %v810
    %v812 = vmul.f32 %v809, 1.442695
    %v813 = vpow.pop %v812
    %v814 = vadd.f32 %v811, 1.0
    %v815 = vadd.f32 %v813, 1.0
    %v816 = vrcp.pop %v814
    %v817 = vmul.f32 1.0, %v816
    %v818 = vrcp.pop %v815
    %v819 = vmul.f32 1.0, %v818
    %v820 = vtanh.pop %v790
    %v821 = vtanh.pop %v794
    %v822 = vxor.u32 %v791, 2147483648
    %v823 = vxor.u32 %v795, 2147483648
    %v824 = vmul.f32 %v822, 1.442695
    %v825 = vpow.pop %v824
    %v826 = vmul.f32 %v823, 1.442695
    %v827 = vpow.pop %v826
    %v828 = vadd.f32 %v825, 1.0
    %v829 = vadd.f32 %v827, 1.0
    %v830 = vrcp.pop %v828
    %v831 = vmul.f32 1.0, %v830
    %v832 = vrcp.pop %v829
    %v833 = vmul.f32 1.0, %v832
    %v834 = vmul.f32 %v817, %v621
    %v835 = vmul.f32 %v819, %v622
    %v836 = vmul.f32 %v805, %v820
    %v837 = vmul.f32 %v807, %v821
    %v838 = vadd.f32 %v834, %v836
    %v839 = vadd.f32 %v835, %v837
    %v840 = vtanh.pop %v838
    %v841 = vtanh.pop %v839
    %v842 = vmul.f32 %v831, %v840
    %v843 = vmul.f32 %v833, %v841
    %844 = vst [vmem:[#allocation11] sm:$0xff] %v842
    %845 = vst [vmem:[#allocation11 + $0x8] sm:$0xff] %v843
    %s846 = smul.u32 2, 4
    %s847 = smul.addr %s846, 8
    %s848 = scalar_lea.vmem [#allocation2], %s847
    %v849 = vld [vmem:[%s848] sm:$0xff]
    %v850 = vld [vmem:[%s848 + $0x8] sm:$0xff]
    %v851 = vld [vmem:[%s848 + $0x10] sm:$0xff]
    %v852 = vld [vmem:[%s848 + $0x18] sm:$0xff]
    %v853 = vld [vmem:[%s848 + $0x20] sm:$0xff]
    %v854 = vld [vmem:[%s848 + $0x28] sm:$0xff]
    %v855 = vld [vmem:[%s848 + $0x30] sm:$0xff]
    %v856 = vld [vmem:[%s848 + $0x38] sm:$0xff]
    %857 = vmatprep.subr.mxu0 %v556
    %858 = vmatpush1.msra.mxu0 %v555
    %859 = vmatprep.subr.mxu0 %v560
    %860 = vmatpush1.msra.mxu0 %v559
    %861 = vmatprep.subr.mxu0 %v564
    %862 = vmatpush1.msra.mxu0 %v563
    %863 = vmatprep.subr.mxu0 %v568
    %864 = vmatpush1.msra.mxu0 %v567
    %865 = vmatprep.subr.mxu0 %v572
    %866 = vmatpush1.msra.mxu0 %v571
    %867 = vmatprep.subr.mxu0 %v576
    %868 = vmatpush1.msra.mxu0 %v575
    %869 = vmatprep.subr.mxu0 %v580
    %870 = vmatpush1.msra.mxu0 %v579
    %871 = vmatprep.subr.mxu0 %v584
    %872 = vmatpush1.msra.mxu0 %v583
    %873 = vmatprep.subr.mxu0 %v588
    %874 = vmatpush1.msra.mxu0 %v587
    %875 = vmatprep.subr.mxu0 %v592
    %876 = vmatpush1.msra.mxu0 %v591
    %877 = vmatprep.subr.mxu0 %v596
    %878 = vmatpush1.msra.mxu0 %v595
    %879 = vmatprep.subr.mxu0 %v600
    %880 = vmatpush1.msra.mxu0 %v599
    %881 = vmatprep.subr.mxu0 %v604
    %882 = vmatpush1.msra.mxu0 %v603
    %883 = vmatprep.subr.mxu0 %v608
    %884 = vmatpush1.msra.mxu0 %v607
    %885 = vmatprep.subr.mxu0 %v612
    %886 = vmatpush1.msra.mxu0 %v611
    %887 = vmatprep.subr.mxu0 %v616
    %888 = vmatpush1.msra.mxu0 %v615
    %889 = vmatprep.subr.mxu0 0.0
    %890 = vmatpush1.msra.mxu0 0.0
    %891 = vmatprep.subr.mxu0 0.0
    %892 = vmatpush1.msra.mxu0 0.0
    %893 = vmatprep.subr.mxu0 0.0
    %894 = vmatpush1.msra.mxu0 0.0
    %895 = vmatprep.subr.mxu0 0.0
    %896 = vmatpush1.msra.mxu0 0.0
    %897 = vmatprep.subr.mxu0 0.0
    %898 = vmatpush1.msra.mxu0 0.0
    %899 = vmatprep.subr.mxu0 0.0
    %900 = vmatpush1.msra.mxu0 0.0
    %901 = vmatprep.subr.mxu0 0.0
    %902 = vmatpush1.msra.mxu0 0.0
    %903 = vmatprep.subr.mxu0 0.0
    %904 = vmatpush1.msra.mxu0 0.0
    %905 = vmatprep.subr.mxu0 0.0
    %906 = vmatpush1.msra.mxu0 0.0
    %907 = vmatprep.subr.mxu0 0.0
    %908 = vmatpush1.msra.mxu0 0.0
    %909 = vmatprep.subr.mxu0 0.0
    %910 = vmatpush1.msra.mxu0 0.0
    %911 = vmatprep.subr.mxu0 0.0
    %912 = vmatpush1.msra.mxu0 0.0
    %913 = vmatprep.subr.mxu0 0.0
    %914 = vmatpush1.msra.mxu0 0.0
    %915 = vmatprep.subr.mxu0 0.0
    %916 = vmatpush1.msra.mxu0 0.0
    %917 = vmatprep.subr.mxu0 0.0
    %918 = vmatpush1.msra.mxu0 0.0
    %919 = vmatprep.subr.mxu0 0.0
    %920 = vmatpush1.msra.mxu0 0.0
    %921 = vmatprep.mubr.f32.mxu0 0.0
    %922 = vmatmul.mubr.f32.gmra.mrb[0].mxu0 %v842
    %v923 = vpop.f32.mrb[0].mxu0
    %v924 = vadd.f32 0.0, %v923
    %v925 = vpop.f32.mrb[0].mxu0
    %v926 = vadd.f32 0.0, %v925
    %927 = vmatprep.mubr.f32.mxu0 0.0
    %928 = vmatmul.mubr.f32.gmra.mrb[0].mxu0 %v843
    %v929 = vpop.f32.mrb[0].mxu0
    %v930 = vadd.f32 0.0, %v929
    %v931 = vpop.f32.mrb[0].mxu0
    %v932 = vadd.f32 0.0, %v931
    %933 = vdwg.mxu0
    %934 = vmatprep.subr.mxu0 %v558
    %935 = vmatpush1.msra.mxu0 %v557
    %936 = vmatprep.subr.mxu0 %v562
    %937 = vmatpush1.msra.mxu0 %v561
    %938 = vmatprep.subr.mxu0 %v566
    %939 = vmatpush1.msra.mxu0 %v565
    %940 = vmatprep.subr.mxu0 %v570
    %941 = vmatpush1.msra.mxu0 %v569
    %942 = vmatprep.subr.mxu0 %v574
    %943 = vmatpush1.msra.mxu0 %v573
    %944 = vmatprep.subr.mxu0 %v578
    %945 = vmatpush1.msra.mxu0 %v577
    %946 = vmatprep.subr.mxu0 %v582
    %947 = vmatpush1.msra.mxu0 %v581
    %948 = vmatprep.subr.mxu0 %v586
    %949 = vmatpush1.msra.mxu0 %v585
    %950 = vmatprep.subr.mxu0 %v590
    %951 = vmatpush1.msra.mxu0 %v589
    %952 = vmatprep.subr.mxu0 %v594
    %953 = vmatpush1.msra.mxu0 %v593
    %954 = vmatprep.subr.mxu0 %v598
    %955 = vmatpush1.msra.mxu0 %v597
    %956 = vmatprep.subr.mxu0 %v602
    %957 = vmatpush1.msra.mxu0 %v601
    %958 = vmatprep.subr.mxu0 %v606
    %959 = vmatpush1.msra.mxu0 %v605
    %960 = vmatprep.subr.mxu0 %v610
    %961 = vmatpush1.msra.mxu0 %v609
    %962 = vmatprep.subr.mxu0 %v614
    %963 = vmatpush1.msra.mxu0 %v613
    %964 = vmatprep.subr.mxu0 %v618
    %965 = vmatpush1.msra.mxu0 %v617
    %966 = vmatprep.subr.mxu0 0.0
    %967 = vmatpush1.msra.mxu0 0.0
    %968 = vmatprep.subr.mxu0 0.0
    %969 = vmatpush1.msra.mxu0 0.0
    %970 = vmatprep.subr.mxu0 0.0
    %971 = vmatpush1.msra.mxu0 0.0
    %972 = vmatprep.subr.mxu0 0.0
    %973 = vmatpush1.msra.mxu0 0.0
    %974 = vmatprep.subr.mxu0 0.0
    %975 = vmatpush1.msra.mxu0 0.0
    %976 = vmatprep.subr.mxu0 0.0
    %977 = vmatpush1.msra.mxu0 0.0
    %978 = vmatprep.subr.mxu0 0.0
    %979 = vmatpush1.msra.mxu0 0.0
    %980 = vmatprep.subr.mxu0 0.0
    %981 = vmatpush1.msra.mxu0 0.0
    %982 = vmatprep.subr.mxu0 0.0
    %983 = vmatpush1.msra.mxu0 0.0
    %984 = vmatprep.subr.mxu0 0.0
    %985 = vmatpush1.msra.mxu0 0.0
    %986 = vmatprep.subr.mxu0 0.0
    %987 = vmatpush1.msra.mxu0 0.0
    %988 = vmatprep.subr.mxu0 0.0
    %989 = vmatpush1.msra.mxu0 0.0
    %990 = vmatprep.subr.mxu0 0.0
    %991 = vmatpush1.msra.mxu0 0.0
    %992 = vmatprep.subr.mxu0 0.0
    %993 = vmatpush1.msra.mxu0 0.0
    %994 = vmatprep.subr.mxu0 0.0
    %995 = vmatpush1.msra.mxu0 0.0
    %996 = vmatprep.subr.mxu0 0.0
    %997 = vmatpush1.msra.mxu0 0.0
    %998 = vmatprep.mubr.f32.mxu0 0.0
    %999 = vmatmul.mubr.f32.gmra.mrb[0].mxu0 %v842
    %v1000 = vpop.f32.mrb[0].mxu0
    %v1001 = vadd.f32 0.0, %v1000
    %v1002 = vpop.f32.mrb[0].mxu0
    %v1003 = vadd.f32 0.0, %v1002
    %1004 = vmatprep.mubr.f32.mxu0 0.0
    %1005 = vmatmul.mubr.f32.gmra.mrb[0].mxu0 %v843
    %v1006 = vpop.f32.mrb[0].mxu0
    %v1007 = vadd.f32 0.0, %v1006
    %v1008 = vpop.f32.mrb[0].mxu0
    %v1009 = vadd.f32 0.0, %v1008
    %1010 = vdwg.mxu0
    %v1011 = vadd.f32 %v849, %v924
    %v1012 = vadd.f32 %v850, %v926
    %v1013 = vadd.f32 %v851, %v1001
    %v1014 = vadd.f32 %v852, %v1003
    %v1015 = vadd.f32 %v853, %v930
    %v1016 = vadd.f32 %v854, %v932
    %v1017 = vadd.f32 %v855, %v1007
    %v1018 = vadd.f32 %v856, %v1009
    %v1019 = vxor.u32 %v1011, 2147483648
    %v1020 = vxor.u32 %v1015, 2147483648
    %v1021 = vmul.f32 %v1019, 1.442695
    %v1022 = vpow.pop %v1021
    %v1023 = vmul.f32 %v1020, 1.442695
    %v1024 = vpow.pop %v1023
    %v1025 = vadd.f32 %v1022, 1.0
    %v1026 = vadd.f32 %v1024, 1.0
    %v1027 = vrcp.pop %v1025
    %v1028 = vmul.f32 1.0, %v1027
    %v1029 = vrcp.pop %v1026
    %v1030 = vmul.f32 1.0, %v1029
    %v1031 = vxor.u32 %v1012, 2147483648
    %v1032 = vxor.u32 %v1016, 2147483648
    %v1033 = vmul.f32 %v1031, 1.442695
    %v1034 = vpow.pop %v1033
    %v1035 = vmul.f32 %v1032, 1.442695
    %v1036 = vpow.pop %v1035
    %v1037 = vadd.f32 %v1034, 1.0
    %v1038 = vadd.f32 %v1036, 1.0
    %v1039 = vrcp.pop %v1037
    %v1040 = vmul.f32 1.0, %v1039
    %v1041 = vrcp.pop %v1038
    %v1042 = vmul.f32 1.0, %v1041
    %v1043 = vtanh.pop %v1013
    %v1044 = vtanh.pop %v1017
    %v1045 = vxor.u32 %v1014, 2147483648
    %v1046 = vxor.u32 %v1018, 2147483648
    %v1047 = vmul.f32 %v1045, 1.442695
    %v1048 = vpow.pop %v1047
    %v1049 = vmul.f32 %v1046, 1.442695
    %v1050 = vpow.pop %v1049
    %v1051 = vadd.f32 %v1048, 1.0
    %v1052 = vadd.f32 %v1050, 1.0
    %v1053 = vrcp.pop %v1051
    %v1054 = vmul.f32 1.0, %v1053
    %v1055 = vrcp.pop %v1052
    %v1056 = vmul.f32 1.0, %v1055
    %v1057 = vmul.f32 %v1040, %v838
    %v1058 = vmul.f32 %v1042, %v839
    %v1059 = vmul.f32 %v1028, %v1043
    %v1060 = vmul.f32 %v1030, %v1044
    %v1061 = vadd.f32 %v1057, %v1059
    %v1062 = vadd.f32 %v1058, %v1060
    %v1063 = vtanh.pop %v1061
    %v1064 = vtanh.pop %v1062
    %v1065 = vmul.f32 %v1054, %v1063
    %v1066 = vmul.f32 %v1056, %v1064
    %s1067 = scalar_lea.vmem [#allocation11], 16
    %1068 = vst [vmem:[%s1067] sm:$0xff] %v1065
    %1069 = vst [vmem:[%s1067 + $0x8] sm:$0xff] %v1066
    %s1070 = smul.u32 4, 4
    %s1071 = smul.addr %s1070, 8
    %s1072 = scalar_lea.vmem [#allocation2], %s1071
    %v1073 = vld [vmem:[%s1072] sm:$0xff]
    %v1074 = vld [vmem:[%s1072 + $0x8] sm:$0xff]
    %v1075 = vld [vmem:[%s1072 + $0x10] sm:$0xff]
    %v1076 = vld [vmem:[%s1072 + $0x18] sm:$0xff]
    %v1077 = vld [vmem:[%s1072 + $0x20] sm:$0xff]
    %v1078 = vld [vmem:[%s1072 + $0x28] sm:$0xff]
    %v1079 = vld [vmem:[%s1072 + $0x30] sm:$0xff]
    %v1080 = vld [vmem:[%s1072 + $0x38] sm:$0xff]
    %1081 = vmatprep.subr.mxu0 %v556
    %1082 = vmatpush1.msra.mxu0 %v555
    %1083 = vmatprep.subr.mxu0 %v560
    %1084 = vmatpush1.msra.mxu0 %v559
    %1085 = vmatprep.subr.mxu0 %v564
    %1086 = vmatpush1.msra.mxu0 %v563
    %1087 = vmatprep.subr.mxu0 %v568
    %1088 = vmatpush1.msra.mxu0 %v567
    %1089 = vmatprep.subr.mxu0 %v572
    %1090 = vmatpush1.msra.mxu0 %v571
    %1091 = vmatprep.subr.mxu0 %v576
    %1092 = vmatpush1.msra.mxu0 %v575
    %1093 = vmatprep.subr.mxu0 %v580
    %1094 = vmatpush1.msra.mxu0 %v579
    %1095 = vmatprep.subr.mxu0 %v584
    %1096 = vmatpush1.msra.mxu0 %v583
    %1097 = vmatprep.subr.mxu0 %v588
    %1098 = vmatpush1.msra.mxu0 %v587
    %1099 = vmatprep.subr.mxu0 %v592
    %1100 = vmatpush1.msra.mxu0 %v591
    %1101 = vmatprep.subr.mxu0 %v596
    %1102 = vmatpush1.msra.mxu0 %v595
    %1103 = vmatprep.subr.mxu0 %v600
    %1104 = vmatpush1.msra.mxu0 %v599
    %1105 = vmatprep.subr.mxu0 %v604
    %1106 = vmatpush1.msra.mxu0 %v603
    %1107 = vmatprep.subr.mxu0 %v608
    %1108 = vmatpush1.msra.mxu0 %v607
    %1109 = vmatprep.subr.mxu0 %v612
    %1110 = vmatpush1.msra.mxu0 %v611
    %1111 = vmatprep.subr.mxu0 %v616
    %1112 = vmatpush1.msra.mxu0 %v615
    %1113 = vmatprep.subr.mxu0 0.0
    %1114 = vmatpush1.msra.mxu0 0.0
    %1115 = vmatprep.subr.mxu0 0.0
    %1116 = vmatpush1.msra.mxu0 0.0
    %1117 = vmatprep.subr.mxu0 0.0
    %1118 = vmatpush1.msra.mxu0 0.0
    %1119 = vmatprep.subr.mxu0 0.0
    %1120 = vmatpush1.msra.mxu0 0.0
    %1121 = vmatprep.subr.mxu0 0.0
    %1122 = vmatpush1.msra.mxu0 0.0
    %1123 = vmatprep.subr.mxu0 0.0
    %1124 = vmatpush1.msra.mxu0 0.0
    %1125 = vmatprep.subr.mxu0 0.0
    %1126 = vmatpush1.msra.mxu0 0.0
    %1127 = vmatprep.subr.mxu0 0.0
    %1128 = vmatpush1.msra.mxu0 0.0
    %1129 = vmatprep.subr.mxu0 0.0
    %1130 = vmatpush1.msra.mxu0 0.0
    %1131 = vmatprep.subr.mxu0 0.0
    %1132 = vmatpush1.msra.mxu0 0.0
    %1133 = vmatprep.subr.mxu0 0.0
    %1134 = vmatpush1.msra.mxu0 0.0
    %1135 = vmatprep.subr.mxu0 0.0
    %1136 = vmatpush1.msra.mxu0 0.0
    %1137 = vmatprep.subr.mxu0 0.0
    %1138 = vmatpush1.msra.mxu0 0.0
    %1139 = vmatprep.subr.mxu0 0.0
    %1140 = vmatpush1.msra.mxu0 0.0
    %1141 = vmatprep.subr.mxu0 0.0
    %1142 = vmatpush1.msra.mxu0 0.0
    %1143 = vmatprep.subr.mxu0 0.0
    %1144 = vmatpush1.msra.mxu0 0.0
    %1145 = vmatprep.mubr.f32.mxu0 0.0
    %1146 = vmatmul.mubr.f32.gmra.mrb[0].mxu0 %v1065
    %v1147 = vpop.f32.mrb[0].mxu0
    %v1148 = vadd.f32 0.0, %v1147
    %v1149 = vpop.f32.mrb[0].mxu0
    %v1150 = vadd.f32 0.0, %v1149
    %1151 = vmatprep.mubr.f32.mxu0 0.0
    %1152 = vmatmul.mubr.f32.gmra.mrb[0].mxu0 %v1066
    %v1153 = vpop.f32.mrb[0].mxu0
    %v1154 = vadd.f32 0.0, %v1153
    %v1155 = vpop.f32.mrb[0].mxu0
    %v1156 = vadd.f32 0.0, %v1155
    %1157 = vdwg.mxu0
    %1158 = vmatprep.subr.mxu0 %v558
    %1159 = vmatpush1.msra.mxu0 %v557
    %1160 = vmatprep.subr.mxu0 %v562
    %1161 = vmatpush1.msra.mxu0 %v561
    %1162 = vmatprep.subr.mxu0 %v566
    %1163 = vmatpush1.msra.mxu0 %v565
    %1164 = vmatprep.subr.mxu0 %v570
    %1165 = vmatpush1.msra.mxu0 %v569
    %1166 = vmatprep.subr.mxu0 %v574
    %1167 = vmatpush1.msra.mxu0 %v573
    %1168 = vmatprep.subr.mxu0 %v578
    %1169 = vmatpush1.msra.mxu0 %v577
    %1170 = vmatprep.subr.mxu0 %v582
    %1171 = vmatpush1.msra.mxu0 %v581
    %1172 = vmatprep.subr.mxu0 %v586
    %1173 = vmatpush1.msra.mxu0 %v585
    %1174 = vmatprep.subr.mxu0 %v590
    %1175 = vmatpush1.msra.mxu0 %v589
    %1176 = vmatprep.subr.mxu0 %v594
    %1177 = vmatpush1.msra.mxu0 %v593
    %1178 = vmatprep.subr.mxu0 %v598
    %1179 = vmatpush1.msra.mxu0 %v597
    %1180 = vmatprep.subr.mxu0 %v602
    %1181 = vmatpush1.msra.mxu0 %v601
    %1182 = vmatprep.subr.mxu0 %v606
    %1183 = vmatpush1.msra.mxu0 %v605
    %1184 = vmatprep.subr.mxu0 %v610
    %1185 = vmatpush1.msra.mxu0 %v609
    %1186 = vmatprep.subr.mxu0 %v614
    %1187 = vmatpush1.msra.mxu0 %v613
    %1188 = vmatprep.subr.mxu0 %v618
    %1189 = vmatpush1.msra.mxu0 %v617
    %1190 = vmatprep.subr.mxu0 0.0
    %1191 = vmatpush1.msra.mxu0 0.0
    %1192 = vmatprep.subr.mxu0 0.0
    %1193 = vmatpush1.msra.mxu0 0.0
    %1194 = vmatprep.subr.mxu0 0.0
    %1195 = vmatpush1.msra.mxu0 0.0
    %1196 = vmatprep.subr.mxu0 0.0
    %1197 = vmatpush1.msra.mxu0 0.0
    %1198 = vmatprep.subr.mxu0 0.0
    %1199 = vmatpush1.msra.mxu0 0.0
    %1200 = vmatprep.subr.mxu0 0.0
    %1201 = vmatpush1.msra.mxu0 0.0
    %1202 = vmatprep.subr.mxu0 0.0
    %1203 = vmatpush1.msra.mxu0 0.0
    %1204 = vmatprep.subr.mxu0 0.0
    %1205 = vmatpush1.msra.mxu0 0.0
    %1206 = vmatprep.subr.mxu0 0.0
    %1207 = vmatpush1.msra.mxu0 0.0
    %1208 = vmatprep.subr.mxu0 0.0
    %1209 = vmatpush1.msra.mxu0 0.0
    %1210 = vmatprep.subr.mxu0 0.0
    %1211 = vmatpush1.msra.mxu0 0.0
    %1212 = vmatprep.subr.mxu0 0.0
    %1213 = vmatpush1.msra.mxu0 0.0
    %1214 = vmatprep.subr.mxu0 0.0
    %1215 = vmatpush1.msra.mxu0 0.0
    %1216 = vmatprep.subr.mxu0 0.0
    %1217 = vmatpush1.msra.mxu0 0.0
    %1218 = vmatprep.subr.mxu0 0.0
    %1219 = vmatpush1.msra.mxu0 0.0
    %1220 = vmatprep.subr.mxu0 0.0
    %1221 = vmatpush1.msra.mxu0 0.0
    %1222 = vmatprep.mubr.f32.mxu0 0.0
    %1223 = vmatmul.mubr.f32.gmra.mrb[0].mxu0 %v1065
    %v1224 = vpop.f32.mrb[0].mxu0
    %v1225 = vadd.f32 0.0, %v1224
    %v1226 = vpop.f32.mrb[0].mxu0
    %v1227 = vadd.f32 0.0, %v1226
    %1228 = vmatprep.mubr.f32.mxu0 0.0
    %1229 = vmatmul.mubr.f32.gmra.mrb[0].mxu0 %v1066
    %v1230 = vpop.f32.mrb[0].mxu0
    %v1231 = vadd.f32 0.0, %v1230
    %v1232 = vpop.f32.mrb[0].mxu0
    %v1233 = vadd.f32 0.0, %v1232
    %1234 = vdwg.mxu0
    %v1235 = vadd.f32 %v1073, %v1148
    %v1236 = vadd.f32 %v1074, %v1150
    %v1237 = vadd.f32 %v1075, %v1225
    %v1238 = vadd.f32 %v1076, %v1227
    %v1239 = vadd.f32 %v1077, %v1154
    %v1240 = vadd.f32 %v1078, %v1156
    %v1241 = vadd.f32 %v1079, %v1231
    %v1242 = vadd.f32 %v1080, %v1233
    %v1243 = vxor.u32 %v1235, 2147483648
    %v1244 = vxor.u32 %v1239, 2147483648
    %v1245 = vmul.f32 %v1243, 1.442695
    %v1246 = vpow.pop %v1245
    %v1247 = vmul.f32 %v1244, 1.442695
    %v1248 = vpow.pop %v1247
    %v1249 = vadd.f32 %v1246, 1.0
    %v1250 = vadd.f32 %v1248, 1.0
    %v1251 = vrcp.pop %v1249
    %v1252 = vmul.f32 1.0, %v1251
    %v1253 = vrcp.pop %v1250
    %v1254 = vmul.f32 1.0, %v1253
    %v1255 = vxor.u32 %v1236, 2147483648
    %v1256 = vxor.u32 %v1240, 2147483648
    %v1257 = vmul.f32 %v1255, 1.442695
    %v1258 = vpow.pop %v1257
    %v1259 = vmul.f32 %v1256, 1.442695
    %v1260 = vpow.pop %v1259
    %v1261 = vadd.f32 %v1258, 1.0
    %v1262 = vadd.f32 %v1260, 1.0
    %v1263 = vrcp.pop %v1261
    %v1264 = vmul.f32 1.0, %v1263
    %v1265 = vrcp.pop %v1262
    %v1266 = vmul.f32 1.0, %v1265
    %v1267 = vtanh.pop %v1237
    %v1268 = vtanh.pop %v1241
    %v1269 = vxor.u32 %v1238, 2147483648
    %v1270 = vxor.u32 %v1242, 2147483648
    %v1271 = vmul.f32 %v1269, 1.442695
    %v1272 = vpow.pop %v1271
    %v1273 = vmul.f32 %v1270, 1.442695
    %v1274 = vpow.pop %v1273
    %v1275 = vadd.f32 %v1272, 1.0
    %v1276 = vadd.f32 %v1274, 1.0
    %v1277 = vrcp.pop %v1275
    %v1278 = vmul.f32 1.0, %v1277
    %v1279 = vrcp.pop %v1276
    %v1280 = vmul.f32 1.0, %v1279
    %v1281 = vmul.f32 %v1264, %v1061
    %v1282 = vmul.f32 %v1266, %v1062
    %v1283 = vmul.f32 %v1252, %v1267
    %v1284 = vmul.f32 %v1254, %v1268
    %v1285 = vadd.f32 %v1281, %v1283
    %v1286 = vadd.f32 %v1282, %v1284
    %v1287 = vtanh.pop %v1285
    %v1288 = vtanh.pop %v1286
    %v1289 = vmul.f32 %v1278, %v1287
    %v1290 = vmul.f32 %v1280, %v1288
    %s1291 = scalar_lea.vmem [#allocation11], 32
    %1292 = vst [vmem:[%s1291] sm:$0xff] %v1289
    %1293 = vst [vmem:[%s1291 + $0x8] sm:$0xff] %v1290
    %s1294 = smul.u32 6, 4
    %s1295 = smul.addr %s1294, 8
    %s1296 = scalar_lea.vmem [#allocation2], %s1295
    %v1297 = vld [vmem:[%s1296] sm:$0xff]
    %v1298 = vld [vmem:[%s1296 + $0x8] sm:$0xff]
    %v1299 = vld [vmem:[%s1296 + $0x10] sm:$0xff]
    %v1300 = vld [vmem:[%s1296 + $0x18] sm:$0xff]
    %v1301 = vld [vmem:[%s1296 + $0x20] sm:$0xff]
    %v1302 = vld [vmem:[%s1296 + $0x28] sm:$0xff]
    %v1303 = vld [vmem:[%s1296 + $0x30] sm:$0xff]
    %v1304 = vld [vmem:[%s1296 + $0x38] sm:$0xff]
    %1305 = vmatprep.subr.mxu0 %v556
    %1306 = vmatpush1.msra.mxu0 %v555
    %1307 = vmatprep.subr.mxu0 %v560
    %1308 = vmatpush1.msra.mxu0 %v559
    %1309 = vmatprep.subr.mxu0 %v564
    %1310 = vmatpush1.msra.mxu0 %v563
    %1311 = vmatprep.subr.mxu0 %v568
    %1312 = vmatpush1.msra.mxu0 %v567
    %1313 = vmatprep.subr.mxu0 %v572
    %1314 = vmatpush1.msra.mxu0 %v571
    %1315 = vmatprep.subr.mxu0 %v576
    %1316 = vmatpush1.msra.mxu0 %v575
    %1317 = vmatprep.subr.mxu0 %v580
    %1318 = vmatpush1.msra.mxu0 %v579
    %1319 = vmatprep.subr.mxu0 %v584
    %1320 = vmatpush1.msra.mxu0 %v583
    %1321 = vmatprep.subr.mxu0 %v588
    %1322 = vmatpush1.msra.mxu0 %v587
    %1323 = vmatprep.subr.mxu0 %v592
    %1324 = vmatpush1.msra.mxu0 %v591
    %1325 = vmatprep.subr.mxu0 %v596
    %1326 = vmatpush1.msra.mxu0 %v595
    %1327 = vmatprep.subr.mxu0 %v600
    %1328 = vmatpush1.msra.mxu0 %v599
    %1329 = vmatprep.subr.mxu0 %v604
    %1330 = vmatpush1.msra.mxu0 %v603
    %1331 = vmatprep.subr.mxu0 %v608
    %1332 = vmatpush1.msra.mxu0 %v607
    %1333 = vmatprep.subr.mxu0 %v612
    %1334 = vmatpush1.msra.mxu0 %v611
    %1335 = vmatprep.subr.mxu0 %v616
    %1336 = vmatpush1.msra.mxu0 %v615
    %1337 = vmatprep.subr.mxu0 0.0
    %1338 = vmatpush1.msra.mxu0 0.0
    %1339 = vmatprep.subr.mxu0 0.0
    %1340 = vmatpush1.msra.mxu0 0.0
    %1341 = vmatprep.subr.mxu0 0.0
    %1342 = vmatpush1.msra.mxu0 0.0
    %1343 = vmatprep.subr.mxu0 0.0
    %1344 = vmatpush1.msra.mxu0 0.0
    %1345 = vmatprep.subr.mxu0 0.0
    %1346 = vmatpush1.msra.mxu0 0.0
    %1347 = vmatprep.subr.mxu0 0.0
    %1348 = vmatpush1.msra.mxu0 0.0
    %1349 = vmatprep.subr.mxu0 0.0
    %1350 = vmatpush1.msra.mxu0 0.0
    %1351 = vmatprep.subr.mxu0 0.0
    %1352 = vmatpush1.msra.mxu0 0.0
    %1353 = vmatprep.subr.mxu0 0.0
    %1354 = vmatpush1.msra.mxu0 0.0
    %1355 = vmatprep.subr.mxu0 0.0
    %1356 = vmatpush1.msra.mxu0 0.0
    %1357 = vmatprep.subr.mxu0 0.0
    %1358 = vmatpush1.msra.mxu0 0.0
    %1359 = vmatprep.subr.mxu0 0.0
    %1360 = vmatpush1.msra.mxu0 0.0
    %1361 = vmatprep.subr.mxu0 0.0
    %1362 = vmatpush1.msra.mxu0 0.0
    %1363 = vmatprep.subr.mxu0 0.0
    %1364 = vmatpush1.msra.mxu0 0.0
    %1365 = vmatprep.subr.mxu0 0.0
    %1366 = vmatpush1.msra.mxu0 0.0
    %1367 = vmatprep.subr.mxu0 0.0
    %1368 = vmatpush1.msra.mxu0 0.0
    %1369 = vmatprep.mubr.f32.mxu0 0.0
    %1370 = vmatmul.mubr.f32.gmra.mrb[0].mxu0 %v1289
    %v1371 = vpop.f32.mrb[0].mxu0
    %v1372 = vadd.f32 0.0, %v1371
    %v1373 = vpop.f32.mrb[0].mxu0
    %v1374 = vadd.f32 0.0, %v1373
    %1375 = vmatprep.mubr.f32.mxu0 0.0
    %1376 = vmatmul.mubr.f32.gmra.mrb[0].mxu0 %v1290
    %v1377 = vpop.f32.mrb[0].mxu0
    %v1378 = vadd.f32 0.0, %v1377
    %v1379 = vpop.f32.mrb[0].mxu0
    %v1380 = vadd.f32 0.0, %v1379
    %1381 = vdwg.mxu0
    %1382 = vmatprep.subr.mxu0 %v558
    %1383 = vmatpush1.msra.mxu0 %v557
    %1384 = vmatprep.subr.mxu0 %v562
    %1385 = vmatpush1.msra.mxu0 %v561
    %1386 = vmatprep.subr.mxu0 %v566
    %1387 = vmatpush1.msra.mxu0 %v565
    %1388 = vmatprep.subr.mxu0 %v570
    %1389 = vmatpush1.msra.mxu0 %v569
    %1390 = vmatprep.subr.mxu0 %v574
    %1391 = vmatpush1.msra.mxu0 %v573
    %1392 = vmatprep.subr.mxu0 %v578
    %1393 = vmatpush1.msra.mxu0 %v577
    %1394 = vmatprep.subr.mxu0 %v582
    %1395 = vmatpush1.msra.mxu0 %v581
    %1396 = vmatprep.subr.mxu0 %v586
    %1397 = vmatpush1.msra.mxu0 %v585
    %1398 = vmatprep.subr.mxu0 %v590
    %1399 = vmatpush1.msra.mxu0 %v589
    %1400 = vmatprep.subr.mxu0 %v594
    %1401 = vmatpush1.msra.mxu0 %v593
    %1402 = vmatprep.subr.mxu0 %v598
    %1403 = vmatpush1.msra.mxu0 %v597
    %1404 = vmatprep.subr.mxu0 %v602
    %1405 = vmatpush1.msra.mxu0 %v601
    %1406 = vmatprep.subr.mxu0 %v606
    %1407 = vmatpush1.msra.mxu0 %v605
    %1408 = vmatprep.subr.mxu0 %v610
    %1409 = vmatpush1.msra.mxu0 %v609
    %1410 = vmatprep.subr.mxu0 %v614
    %1411 = vmatpush1.msra.mxu0 %v613
    %1412 = vmatprep.subr.mxu0 %v618
    %1413 = vmatpush1.msra.mxu0 %v617
    %1414 = vmatprep.subr.mxu0 0.0
    %1415 = vmatpush1.msra.mxu0 0.0
    %1416 = vmatprep.subr.mxu0 0.0
    %1417 = vmatpush1.msra.mxu0 0.0
    %1418 = vmatprep.subr.mxu0 0.0
    %1419 = vmatpush1.msra.mxu0 0.0
    %1420 = vmatprep.subr.mxu0 0.0
    %1421 = vmatpush1.msra.mxu0 0.0
    %1422 = vmatprep.subr.mxu0 0.0
    %1423 = vmatpush1.msra.mxu0 0.0
    %1424 = vmatprep.subr.mxu0 0.0
    %1425 = vmatpush1.msra.mxu0 0.0
    %1426 = vmatprep.subr.mxu0 0.0
    %1427 = vmatpush1.msra.mxu0 0.0
    %1428 = vmatprep.subr.mxu0 0.0
    %1429 = vmatpush1.msra.mxu0 0.0
    %1430 = vmatprep.subr.mxu0 0.0
    %1431 = vmatpush1.msra.mxu0 0.0
    %1432 = vmatprep.subr.mxu0 0.0
    %1433 = vmatpush1.msra.mxu0 0.0
    %1434 = vmatprep.subr.mxu0 0.0
    %1435 = vmatpush1.msra.mxu0 0.0
    %1436 = vmatprep.subr.mxu0 0.0
    %1437 = vmatpush1.msra.mxu0 0.0
    %1438 = vmatprep.subr.mxu0 0.0
    %1439 = vmatpush1.msra.mxu0 0.0
    %1440 = vmatprep.subr.mxu0 0.0
    %1441 = vmatpush1.msra.mxu0 0.0
    %1442 = vmatprep.subr.mxu0 0.0
    %1443 = vmatpush1.msra.mxu0 0.0
    %1444 = vmatprep.subr.mxu0 0.0
    %1445 = vmatpush1.msra.mxu0 0.0
    %1446 = vmatprep.mubr.f32.mxu0 0.0
    %1447 = vmatmul.mubr.f32.gmra.mrb[0].mxu0 %v1289
    %v1448 = vpop.f32.mrb[0].mxu0
    %v1449 = vadd.f32 0.0, %v1448
    %v1450 = vpop.f32.mrb[0].mxu0
    %v1451 = vadd.f32 0.0, %v1450
    %1452 = vmatprep.mubr.f32.mxu0 0.0
    %1453 = vmatmul.mubr.f32.gmra.mrb[0].mxu0 %v1290
    %v1454 = vpop.f32.mrb[0].mxu0
    %v1455 = vadd.f32 0.0, %v1454
    %v1456 = vpop.f32.mrb[0].mxu0
    %v1457 = vadd.f32 0.0, %v1456
    %1458 = vdwg.mxu0
    %v1459 = vadd.f32 %v1297, %v1372
    %v1460 = vadd.f32 %v1298, %v1374
    %v1461 = vadd.f32 %v1299, %v1449
    %v1462 = vadd.f32 %v1300, %v1451
    %v1463 = vadd.f32 %v1301, %v1378
    %v1464 = vadd.f32 %v1302, %v1380
    %v1465 = vadd.f32 %v1303, %v1455
    %v1466 = vadd.f32 %v1304, %v1457
    %v1467 = vxor.u32 %v1459, 2147483648
    %v1468 = vxor.u32 %v1463, 2147483648
    %v1469 = vmul.f32 %v1467, 1.442695
    %v1470 = vpow.pop %v1469
    %v1471 = vmul.f32 %v1468, 1.442695
    %v1472 = vpow.pop %v1471
    %v1473 = vadd.f32 %v1470, 1.0
    %v1474 = vadd.f32 %v1472, 1.0
    %v1475 = vrcp.pop %v1473
    %v1476 = vmul.f32 1.0, %v1475
    %v1477 = vrcp.pop %v1474
    %v1478 = vmul.f32 1.0, %v1477
    %v1479 = vxor.u32 %v1460, 2147483648
    %v1480 = vxor.u32 %v1464, 2147483648
    %v1481 = vmul.f32 %v1479, 1.442695
    %v1482 = vpow.pop %v1481
    %v1483 = vmul.f32 %v1480, 1.442695
    %v1484 = vpow.pop %v1483
    %v1485 = vadd.f32 %v1482, 1.0
    %v1486 = vadd.f32 %v1484, 1.0
    %v1487 = vrcp.pop %v1485
    %v1488 = vmul.f32 1.0, %v1487
    %v1489 = vrcp.pop %v1486
    %v1490 = vmul.f32 1.0, %v1489
    %v1491 = vtanh.pop %v1461
    %v1492 = vtanh.pop %v1465
    %v1493 = vxor.u32 %v1462, 2147483648
    %v1494 = vxor.u32 %v1466, 2147483648
    %v1495 = vmul.f32 %v1493, 1.442695
    %v1496 = vpow.pop %v1495
    %v1497 = vmul.f32 %v1494, 1.442695
    %v1498 = vpow.pop %v1497
    %v1499 = vadd.f32 %v1496, 1.0
    %v1500 = vadd.f32 %v1498, 1.0
    %v1501 = vrcp.pop %v1499
    %v1502 = vmul.f32 1.0, %v1501
    %v1503 = vrcp.pop %v1500
    %v1504 = vmul.f32 1.0, %v1503
    %v1505 = vmul.f32 %v1488, %v1285
    %v1506 = vmul.f32 %v1490, %v1286
    %v1507 = vmul.f32 %v1476, %v1491
    %v1508 = vmul.f32 %v1478, %v1492
    %v1509 = vadd.f32 %v1505, %v1507
    %v1510 = vadd.f32 %v1506, %v1508
    %v1511 = vtanh.pop %v1509
    %v1512 = vtanh.pop %v1510
    %v1513 = vmul.f32 %v1502, %v1511
    %v1514 = vmul.f32 %v1504, %v1512
    %s1515 = scalar_lea.vmem [#allocation11], 48
    %1516 = vst [vmem:[%s1515] sm:$0xff] %v1513
    %1517 = vst [vmem:[%s1515 + $0x8] sm:$0xff] %v1514
    %s1518 = smul.u32 8, 4
    %s1519 = smul.addr %s1518, 8
    %s1520 = scalar_lea.vmem [#allocation2], %s1519
    %v1521 = vld [vmem:[%s1520] sm:$0xff]
    %v1522 = vld [vmem:[%s1520 + $0x8] sm:$0xff]
    %v1523 = vld [vmem:[%s1520 + $0x10] sm:$0xff]
    %v1524 = vld [vmem:[%s1520 + $0x18] sm:$0xff]
    %v1525 = vld [vmem:[%s1520 + $0x20] sm:$0xff]
    %v1526 = vld [vmem:[%s1520 + $0x28] sm:$0xff]
    %v1527 = vld [vmem:[%s1520 + $0x30] sm:$0xff]
    %v1528 = vld [vmem:[%s1520 + $0x38] sm:$0xff]
    %1529 = vmatprep.subr.mxu0 %v556
    %1530 = vmatpush1.msra.mxu0 %v555
    %1531 = vmatprep.subr.mxu0 %v560
    %1532 = vmatpush1.msra.mxu0 %v559
    %1533 = vmatprep.subr.mxu0 %v564
    %1534 = vmatpush1.msra.mxu0 %v563
    %1535 = vmatprep.subr.mxu0 %v568
    %1536 = vmatpush1.msra.mxu0 %v567
    %1537 = vmatprep.subr.mxu0 %v572
    %1538 = vmatpush1.msra.mxu0 %v571
    %1539 = vmatprep.subr.mxu0 %v576
    %1540 = vmatpush1.msra.mxu0 %v575
    %1541 = vmatprep.subr.mxu0 %v580
    %1542 = vmatpush1.msra.mxu0 %v579
    %1543 = vmatprep.subr.mxu0 %v584
    %1544 = vmatpush1.msra.mxu0 %v583
    %1545 = vmatprep.subr.mxu0 %v588
    %1546 = vmatpush1.msra.mxu0 %v587
    %1547 = vmatprep.subr.mxu0 %v592
    %1548 = vmatpush1.msra.mxu0 %v591
    %1549 = vmatprep.subr.mxu0 %v596
    %1550 = vmatpush1.msra.mxu0 %v595
    %1551 = vmatprep.subr.mxu0 %v600
    %1552 = vmatpush1.msra.mxu0 %v599
    %1553 = vmatprep.subr.mxu0 %v604
    %1554 = vmatpush1.msra.mxu0 %v603
    %1555 = vmatprep.subr.mxu0 %v608
    %1556 = vmatpush1.msra.mxu0 %v607
    %1557 = vmatprep.subr.mxu0 %v612
    %1558 = vmatpush1.msra.mxu0 %v611
    %1559 = vmatprep.subr.mxu0 %v616
    %1560 = vmatpush1.msra.mxu0 %v615
    %1561 = vmatprep.subr.mxu0 0.0
    %1562 = vmatpush1.msra.mxu0 0.0
    %1563 = vmatprep.subr.mxu0 0.0
    %1564 = vmatpush1.msra.mxu0 0.0
    %1565 = vmatprep.subr.mxu0 0.0
    %1566 = vmatpush1.msra.mxu0 0.0
    %1567 = vmatprep.subr.mxu0 0.0
    %1568 = vmatpush1.msra.mxu0 0.0
    %1569 = vmatprep.subr.mxu0 0.0
    %1570 = vmatpush1.msra.mxu0 0.0
    %1571 = vmatprep.subr.mxu0 0.0
    %1572 = vmatpush1.msra.mxu0 0.0
    %1573 = vmatprep.subr.mxu0 0.0
    %1574 = vmatpush1.msra.mxu0 0.0
    %1575 = vmatprep.subr.mxu0 0.0
    %1576 = vmatpush1.msra.mxu0 0.0
    %1577 = vmatprep.subr.mxu0 0.0
    %1578 = vmatpush1.msra.mxu0 0.0
    %1579 = vmatprep.subr.mxu0 0.0
    %1580 = vmatpush1.msra.mxu0 0.0
    %1581 = vmatprep.subr.mxu0 0.0
    %1582 = vmatpush1.msra.mxu0 0.0
    %1583 = vmatprep.subr.mxu0 0.0
    %1584 = vmatpush1.msra.mxu0 0.0
    %1585 = vmatprep.subr.mxu0 0.0
    %1586 = vmatpush1.msra.mxu0 0.0
    %1587 = vmatprep.subr.mxu0 0.0
    %1588 = vmatpush1.msra.mxu0 0.0
    %1589 = vmatprep.subr.mxu0 0.0
    %1590 = vmatpush1.msra.mxu0 0.0
    %1591 = vmatprep.subr.mxu0 0.0
    %1592 = vmatpush1.msra.mxu0 0.0
    %1593 = vmatprep.mubr.f32.mxu0 0.0
    %1594 = vmatmul.mubr.f32.gmra.mrb[0].mxu0 %v1513
    %v1595 = vpop.f32.mrb[0].mxu0
    %v1596 = vadd.f32 0.0, %v1595
    %v1597 = vpop.f32.mrb[0].mxu0
    %v1598 = vadd.f32 0.0, %v1597
    %1599 = vmatprep.mubr.f32.mxu0 0.0
    %1600 = vmatmul.mubr.f32.gmra.mrb[0].mxu0 %v1514
    %v1601 = vpop.f32.mrb[0].mxu0
    %v1602 = vadd.f32 0.0, %v1601
    %v1603 = vpop.f32.mrb[0].mxu0
    %v1604 = vadd.f32 0.0, %v1603
    %1605 = vdwg.mxu0
    %1606 = vmatprep.subr.mxu0 %v558
    %1607 = vmatpush1.msra.mxu0 %v557
    %1608 = vmatprep.subr.mxu0 %v562
    %1609 = vmatpush1.msra.mxu0 %v561
    %1610 = vmatprep.subr.mxu0 %v566
    %1611 = vmatpush1.msra.mxu0 %v565
    %1612 = vmatprep.subr.mxu0 %v570
    %1613 = vmatpush1.msra.mxu0 %v569
    %1614 = vmatprep.subr.mxu0 %v574
    %1615 = vmatpush1.msra.mxu0 %v573
    %1616 = vmatprep.subr.mxu0 %v578
    %1617 = vmatpush1.msra.mxu0 %v577
    %1618 = vmatprep.subr.mxu0 %v582
    %1619 = vmatpush1.msra.mxu0 %v581
    %1620 = vmatprep.subr.mxu0 %v586
    %1621 = vmatpush1.msra.mxu0 %v585
    %1622 = vmatprep.subr.mxu0 %v590
    %1623 = vmatpush1.msra.mxu0 %v589
    %1624 = vmatprep.subr.mxu0 %v594
    %1625 = vmatpush1.msra.mxu0 %v593
    %1626 = vmatprep.subr.mxu0 %v598
    %1627 = vmatpush1.msra.mxu0 %v597
    %1628 = vmatprep.subr.mxu0 %v602
    %1629 = vmatpush1.msra.mxu0 %v601
    %1630 = vmatprep.subr.mxu0 %v606
    %1631 = vmatpush1.msra.mxu0 %v605
    %1632 = vmatprep.subr.mxu0 %v610
    %1633 = vmatpush1.msra.mxu0 %v609
    %1634 = vmatprep.subr.mxu0 %v614
    %1635 = vmatpush1.msra.mxu0 %v613
    %1636 = vmatprep.subr.mxu0 %v618
    %1637 = vmatpush1.msra.mxu0 %v617
    %1638 = vmatprep.subr.mxu0 0.0
    %1639 = vmatpush1.msra.mxu0 0.0
    %1640 = vmatprep.subr.mxu0 0.0
    %1641 = vmatpush1.msra.mxu0 0.0
    %1642 = vmatprep.subr.mxu0 0.0
    %1643 = vmatpush1.msra.mxu0 0.0
    %1644 = vmatprep.subr.mxu0 0.0
    %1645 = vmatpush1.msra.mxu0 0.0
    %1646 = vmatprep.subr.mxu0 0.0
    %1647 = vmatpush1.msra.mxu0 0.0
    %1648 = vmatprep.subr.mxu0 0.0
    %1649 = vmatpush1.msra.mxu0 0.0
    %1650 = vmatprep.subr.mxu0 0.0
    %1651 = vmatpush1.msra.mxu0 0.0
    %1652 = vmatprep.subr.mxu0 0.0
    %1653 = vmatpush1.msra.mxu0 0.0
    %1654 = vmatprep.subr.mxu0 0.0
    %1655 = vmatpush1.msra.mxu0 0.0
    %1656 = vmatprep.subr.mxu0 0.0
    %1657 = vmatpush1.msra.mxu0 0.0
    %1658 = vmatprep.subr.mxu0 0.0
    %1659 = vmatpush1.msra.mxu0 0.0
    %1660 = vmatprep.subr.mxu0 0.0
    %1661 = vmatpush1.msra.mxu0 0.0
    %1662 = vmatprep.subr.mxu0 0.0
    %1663 = vmatpush1.msra.mxu0 0.0
    %1664 = vmatprep.subr.mxu0 0.0
    %1665 = vmatpush1.msra.mxu0 0.0
    %1666 = vmatprep.subr.mxu0 0.0
    %1667 = vmatpush1.msra.mxu0 0.0
    %1668 = vmatprep.subr.mxu0 0.0
    %1669 = vmatpush1.msra.mxu0 0.0
    %1670 = vmatprep.mubr.f32.mxu0 0.0
    %1671 = vmatmul.mubr.f32.gmra.mrb[0].mxu0 %v1513
    %v1672 = vpop.f32.mrb[0].mxu0
    %v1673 = vadd.f32 0.0, %v1672
    %v1674 = vpop.f32.mrb[0].mxu0
    %v1675 = vadd.f32 0.0, %v1674
    %1676 = vmatprep.mubr.f32.mxu0 0.0
    %1677 = vmatmul.mubr.f32.gmra.mrb[0].mxu0 %v1514
    %v1678 = vpop.f32.mrb[0].mxu0
    %v1679 = vadd.f32 0.0, %v1678
    %v1680 = vpop.f32.mrb[0].mxu0
    %v1681 = vadd.f32 0.0, %v1680
    %1682 = vdwg.mxu0
    %v1683 = vadd.f32 %v1521, %v1596
    %v1684 = vadd.f32 %v1522, %v1598
    %v1685 = vadd.f32 %v1523, %v1673
    %v1686 = vadd.f32 %v1524, %v1675
    %v1687 = vadd.f32 %v1525, %v1602
    %v1688 = vadd.f32 %v1526, %v1604
    %v1689 = vadd.f32 %v1527, %v1679
    %v1690 = vadd.f32 %v1528, %v1681
    %v1691 = vxor.u32 %v1683, 2147483648
    %v1692 = vxor.u32 %v1687, 2147483648
    %v1693 = vmul.f32 %v1691, 1.442695
    %v1694 = vpow.pop %v1693
    %v1695 = vmul.f32 %v1692, 1.442695
    %v1696 = vpow.pop %v1695
    %v1697 = vadd.f32 %v1694, 1.0
    %v1698 = vadd.f32 %v1696, 1.0
    %v1699 = vrcp.pop %v1697
    %v1700 = vmul.f32 1.0, %v1699
    %v1701 = vrcp.pop %v1698
    %v1702 = vmul.f32 1.0, %v1701
    %v1703 = vxor.u32 %v1684, 2147483648
    %v1704 = vxor.u32 %v1688, 2147483648
    %v1705 = vmul.f32 %v1703, 1.442695
    %v1706 = vpow.pop %v1705
    %v1707 = vmul.f32 %v1704, 1.442695
    %v1708 = vpow.pop %v1707
    %v1709 = vadd.f32 %v1706, 1.0
    %v1710 = vadd.f32 %v1708, 1.0
    %v1711 = vrcp.pop %v1709
    %v1712 = vmul.f32 1.0, %v1711
    %v1713 = vrcp.pop %v1710
    %v1714 = vmul.f32 1.0, %v1713
    %v1715 = vtanh.pop %v1685
    %v1716 = vtanh.pop %v1689
    %v1717 = vxor.u32 %v1686, 2147483648
    %v1718 = vxor.u32 %v1690, 2147483648
    %v1719 = vmul.f32 %v1717, 1.442695
    %v1720 = vpow.pop %v1719
    %v1721 = vmul.f32 %v1718, 1.442695
    %v1722 = vpow.pop %v1721
    %v1723 = vadd.f32 %v1720, 1.0
    %v1724 = vadd.f32 %v1722, 1.0
    %v1725 = vrcp.pop %v1723
    %v1726 = vmul.f32 1.0, %v1725
    %v1727 = vrcp.pop %v1724
    %v1728 = vmul.f32 1.0, %v1727
    %v1729 = vmul.f32 %v1712, %v1509
    %v1730 = vmul.f32 %v1714, %v1510
    %v1731 = vmul.f32 %v1700, %v1715
    %v1732 = vmul.f32 %v1702, %v1716
    %v1733 = vadd.f32 %v1729, %v1731
    %v1734 = vadd.f32 %v1730, %v1732
    %v1735 = vtanh.pop %v1733
    %v1736 = vtanh.pop %v1734
    %v1737 = vmul.f32 %v1726, %v1735
    %v1738 = vmul.f32 %v1728, %v1736
    %s1739 = scalar_lea.vmem [#allocation11], 64
    %1740 = vst [vmem:[%s1739] sm:$0xff] %v1737
    %1741 = vst [vmem:[%s1739 + $0x8] sm:$0xff] %v1738
    %s1742 = smul.u32 10, 4
    %s1743 = smul.addr %s1742, 8
    %s1744 = scalar_lea.vmem [#allocation2], %s1743
    %v1745 = vld [vmem:[%s1744] sm:$0xff]
    %v1746 = vld [vmem:[%s1744 + $0x8] sm:$0xff]
    %v1747 = vld [vmem:[%s1744 + $0x10] sm:$0xff]
    %v1748 = vld [vmem:[%s1744 + $0x18] sm:$0xff]
    %v1749 = vld [vmem:[%s1744 + $0x20] sm:$0xff]
    %v1750 = vld [vmem:[%s1744 + $0x28] sm:$0xff]
    %v1751 = vld [vmem:[%s1744 + $0x30] sm:$0xff]
    %v1752 = vld [vmem:[%s1744 + $0x38] sm:$0xff]
    %1753 = vmatprep.subr.mxu0 %v556
    %1754 = vmatpush1.msra.mxu0 %v555
    %1755 = vmatprep.subr.mxu0 %v560
    %1756 = vmatpush1.msra.mxu0 %v559
    %1757 = vmatprep.subr.mxu0 %v564
    %1758 = vmatpush1.msra.mxu0 %v563
    %1759 = vmatprep.subr.mxu0 %v568
    %1760 = vmatpush1.msra.mxu0 %v567
    %1761 = vmatprep.subr.mxu0 %v572
    %1762 = vmatpush1.msra.mxu0 %v571
    %1763 = vmatprep.subr.mxu0 %v576
    %1764 = vmatpush1.msra.mxu0 %v575
    %1765 = vmatprep.subr.mxu0 %v580
    %1766 = vmatpush1.msra.mxu0 %v579
    %1767 = vmatprep.subr.mxu0 %v584
    %1768 = vmatpush1.msra.mxu0 %v583
    %1769 = vmatprep.subr.mxu0 %v588
    %1770 = vmatpush1.msra.mxu0 %v587
    %1771 = vmatprep.subr.mxu0 %v592
    %1772 = vmatpush1.msra.mxu0 %v591
    %1773 = vmatprep.subr.mxu0 %v596
    %1774 = vmatpush1.msra.mxu0 %v595
    %1775 = vmatprep.subr.mxu0 %v600
    %1776 = vmatpush1.msra.mxu0 %v599
    %1777 = vmatprep.subr.mxu0 %v604
    %1778 = vmatpush1.msra.mxu0 %v603
    %1779 = vmatprep.subr.mxu0 %v608
    %1780 = vmatpush1.msra.mxu0 %v607
    %1781 = vmatprep.subr.mxu0 %v612
    %1782 = vmatpush1.msra.mxu0 %v611
    %1783 = vmatprep.subr.mxu0 %v616
    %1784 = vmatpush1.msra.mxu0 %v615
    %1785 = vmatprep.subr.mxu0 0.0
    %1786 = vmatpush1.msra.mxu0 0.0
    %1787 = vmatprep.subr.mxu0 0.0
    %1788 = vmatpush1.msra.mxu0 0.0
    %1789 = vmatprep.subr.mxu0 0.0
    %1790 = vmatpush1.msra.mxu0 0.0
    %1791 = vmatprep.subr.mxu0 0.0
    %1792 = vmatpush1.msra.mxu0 0.0
    %1793 = vmatprep.subr.mxu0 0.0
    %1794 = vmatpush1.msra.mxu0 0.0
    %1795 = vmatprep.subr.mxu0 0.0
    %1796 = vmatpush1.msra.mxu0 0.0
    %1797 = vmatprep.subr.mxu0 0.0
    %1798 = vmatpush1.msra.mxu0 0.0
    %1799 = vmatprep.subr.mxu0 0.0
    %1800 = vmatpush1.msra.mxu0 0.0
    %1801 = vmatprep.subr.mxu0 0.0
    %1802 = vmatpush1.msra.mxu0 0.0
    %1803 = vmatprep.subr.mxu0 0.0
    %1804 = vmatpush1.msra.mxu0 0.0
    %1805 = vmatprep.subr.mxu0 0.0
    %1806 = vmatpush1.msra.mxu0 0.0
    %1807 = vmatprep.subr.mxu0 0.0
    %1808 = vmatpush1.msra.mxu0 0.0
    %1809 = vmatprep.subr.mxu0 0.0
    %1810 = vmatpush1.msra.mxu0 0.0
    %1811 = vmatprep.subr.mxu0 0.0
    %1812 = vmatpush1.msra.mxu0 0.0
    %1813 = vmatprep.subr.mxu0 0.0
    %1814 = vmatpush1.msra.mxu0 0.0
    %1815 = vmatprep.subr.mxu0 0.0
    %1816 = vmatpush1.msra.mxu0 0.0
    %1817 = vmatprep.mubr.f32.mxu0 0.0
    %1818 = vmatmul.mubr.f32.gmra.mrb[0].mxu0 %v1737
    %v1819 = vpop.f32.mrb[0].mxu0
    %v1820 = vadd.f32 0.0, %v1819
    %v1821 = vpop.f32.mrb[0].mxu0
    %v1822 = vadd.f32 0.0, %v1821
    %1823 = vmatprep.mubr.f32.mxu0 0.0
    %1824 = vmatmul.mubr.f32.gmra.mrb[0].mxu0 %v1738
    %v1825 = vpop.f32.mrb[0].mxu0
    %v1826 = vadd.f32 0.0, %v1825
    %v1827 = vpop.f32.mrb[0].mxu0
    %v1828 = vadd.f32 0.0, %v1827
    %1829 = vdwg.mxu0
    %1830 = vmatprep.subr.mxu0 %v558
    %1831 = vmatpush1.msra.mxu0 %v557
    %1832 = vmatprep.subr.mxu0 %v562
    %1833 = vmatpush1.msra.mxu0 %v561
    %1834 = vmatprep.subr.mxu0 %v566
    %1835 = vmatpush1.msra.mxu0 %v565
    %1836 = vmatprep.subr.mxu0 %v570
    %1837 = vmatpush1.msra.mxu0 %v569
    %1838 = vmatprep.subr.mxu0 %v574
    %1839 = vmatpush1.msra.mxu0 %v573
    %1840 = vmatprep.subr.mxu0 %v578
    %1841 = vmatpush1.msra.mxu0 %v577
    %1842 = vmatprep.subr.mxu0 %v582
    %1843 = vmatpush1.msra.mxu0 %v581
    %1844 = vmatprep.subr.mxu0 %v586
    %1845 = vmatpush1.msra.mxu0 %v585
    %1846 = vmatprep.subr.mxu0 %v590
    %1847 = vmatpush1.msra.mxu0 %v589
    %1848 = vmatprep.subr.mxu0 %v594
    %1849 = vmatpush1.msra.mxu0 %v593
    %1850 = vmatprep.subr.mxu0 %v598
    %1851 = vmatpush1.msra.mxu0 %v597
    %1852 = vmatprep.subr.mxu0 %v602
    %1853 = vmatpush1.msra.mxu0 %v601
    %1854 = vmatprep.subr.mxu0 %v606
    %1855 = vmatpush1.msra.mxu0 %v605
    %1856 = vmatprep.subr.mxu0 %v610
    %1857 = vmatpush1.msra.mxu0 %v609
    %1858 = vmatprep.subr.mxu0 %v614
    %1859 = vmatpush1.msra.mxu0 %v613
    %1860 = vmatprep.subr.mxu0 %v618
    %1861 = vmatpush1.msra.mxu0 %v617
    %1862 = vmatprep.subr.mxu0 0.0
    %1863 = vmatpush1.msra.mxu0 0.0
    %1864 = vmatprep.subr.mxu0 0.0
    %1865 = vmatpush1.msra.mxu0 0.0
    %1866 = vmatprep.subr.mxu0 0.0
    %1867 = vmatpush1.msra.mxu0 0.0
    %1868 = vmatprep.subr.mxu0 0.0
    %1869 = vmatpush1.msra.mxu0 0.0
    %1870 = vmatprep.subr.mxu0 0.0
    %1871 = vmatpush1.msra.mxu0 0.0
    %1872 = vmatprep.subr.mxu0 0.0
    %1873 = vmatpush1.msra.mxu0 0.0
    %1874 = vmatprep.subr.mxu0 0.0
    %1875 = vmatpush1.msra.mxu0 0.0
    %1876 = vmatprep.subr.mxu0 0.0
    %1877 = vmatpush1.msra.mxu0 0.0
    %1878 = vmatprep.subr.mxu0 0.0
    %1879 = vmatpush1.msra.mxu0 0.0
    %1880 = vmatprep.subr.mxu0 0.0
    %1881 = vmatpush1.msra.mxu0 0.0
    %1882 = vmatprep.subr.mxu0 0.0
    %1883 = vmatpush1.msra.mxu0 0.0
    %1884 = vmatprep.subr.mxu0 0.0
    %1885 = vmatpush1.msra.mxu0 0.0
    %1886 = vmatprep.subr.mxu0 0.0
    %1887 = vmatpush1.msra.mxu0 0.0
    %1888 = vmatprep.subr.mxu0 0.0
    %1889 = vmatpush1.msra.mxu0 0.0
    %1890 = vmatprep.subr.mxu0 0.0
    %1891 = vmatpush1.msra.mxu0 0.0
    %1892 = vmatprep.subr.mxu0 0.0
    %1893 = vmatpush1.msra.mxu0 0.0
    %1894 = vmatprep.mubr.f32.mxu0 0.0
    %1895 = vmatmul.mubr.f32.gmra.mrb[0].mxu0 %v1737
    %v1896 = vpop.f32.mrb[0].mxu0
    %v1897 = vadd.f32 0.0, %v1896
    %v1898 = vpop.f32.mrb[0].mxu0
    %v1899 = vadd.f32 0.0, %v1898
    %1900 = vmatprep.mubr.f32.mxu0 0.0
    %1901 = vmatmul.mubr.f32.gmra.mrb[0].mxu0 %v1738
    %v1902 = vpop.f32.mrb[0].mxu0
    %v1903 = vadd.f32 0.0, %v1902
    %v1904 = vpop.f32.mrb[0].mxu0
    %v1905 = vadd.f32 0.0, %v1904
    %1906 = vdwg.mxu0
    %v1907 = vadd.f32 %v1745, %v1820
    %v1908 = vadd.f32 %v1746, %v1822
    %v1909 = vadd.f32 %v1747, %v1897
    %v1910 = vadd.f32 %v1748, %v1899
    %v1911 = vadd.f32 %v1749, %v1826
    %v1912 = vadd.f32 %v1750, %v1828
    %v1913 = vadd.f32 %v1751, %v1903
    %v1914 = vadd.f32 %v1752, %v1905
    %v1915 = vxor.u32 %v1907, 2147483648
    %v1916 = vxor.u32 %v1911, 2147483648
    %v1917 = vmul.f32 %v1915, 1.442695
    %v1918 = vpow.pop %v1917
    %v1919 = vmul.f32 %v1916, 1.442695
    %v1920 = vpow.pop %v1919
    %v1921 = vadd.f32 %v1918, 1.0
    %v1922 = vadd.f32 %v1920, 1.0
    %v1923 = vrcp.pop %v1921
    %v1924 = vmul.f32 1.0, %v1923
    %v1925 = vrcp.pop %v1922
    %v1926 = vmul.f32 1.0, %v1925
    %v1927 = vxor.u32 %v1908, 2147483648
    %v1928 = vxor.u32 %v1912, 2147483648
    %v1929 = vmul.f32 %v1927, 1.442695
    %v1930 = vpow.pop %v1929
    %v1931 = vmul.f32 %v1928, 1.442695
    %v1932 = vpow.pop %v1931
    %v1933 = vadd.f32 %v1930, 1.0
    %v1934 = vadd.f32 %v1932, 1.0
    %v1935 = vrcp.pop %v1933
    %v1936 = vmul.f32 1.0, %v1935
    %v1937 = vrcp.pop %v1934
    %v1938 = vmul.f32 1.0, %v1937
    %v1939 = vtanh.pop %v1909
    %v1940 = vtanh.pop %v1913
    %v1941 = vxor.u32 %v1910, 2147483648
    %v1942 = vxor.u32 %v1914, 2147483648
    %v1943 = vmul.f32 %v1941, 1.442695
    %v1944 = vpow.pop %v1943
    %v1945 = vmul.f32 %v1942, 1.442695
    %v1946 = vpow.pop %v1945
    %v1947 = vadd.f32 %v1944, 1.0
    %v1948 = vadd.f32 %v1946, 1.0
    %v1949 = vrcp.pop %v1947
    %v1950 = vmul.f32 1.0, %v1949
    %v1951 = vrcp.pop %v1948
    %v1952 = vmul.f32 1.0, %v1951
    %v1953 = vmul.f32 %v1936, %v1733
    %v1954 = vmul.f32 %v1938, %v1734
    %v1955 = vmul.f32 %v1924, %v1939
    %v1956 = vmul.f32 %v1926, %v1940
    %v1957 = vadd.f32 %v1953, %v1955
    %v1958 = vadd.f32 %v1954, %v1956
    %v1959 = vtanh.pop %v1957
    %v1960 = vtanh.pop %v1958
    %v1961 = vmul.f32 %v1950, %v1959
    %v1962 = vmul.f32 %v1952, %v1960
    %s1963 = scalar_lea.vmem [#allocation11], 80
    %1964 = vst [vmem:[%s1963] sm:$0xff] %v1961
    %1965 = vst [vmem:[%s1963 + $0x8] sm:$0xff] %v1962
    %s1966 = smul.u32 12, 4
    %s1967 = smul.addr %s1966, 8
    %s1968 = scalar_lea.vmem [#allocation2], %s1967
    %v1969 = vld [vmem:[%s1968] sm:$0xff]
    %v1970 = vld [vmem:[%s1968 + $0x8] sm:$0xff]
    %v1971 = vld [vmem:[%s1968 + $0x10] sm:$0xff]
    %v1972 = vld [vmem:[%s1968 + $0x18] sm:$0xff]
    %v1973 = vld [vmem:[%s1968 + $0x20] sm:$0xff]
    %v1974 = vld [vmem:[%s1968 + $0x28] sm:$0xff]
    %v1975 = vld [vmem:[%s1968 + $0x30] sm:$0xff]
    %v1976 = vld [vmem:[%s1968 + $0x38] sm:$0xff]
    %1977 = vmatprep.subr.mxu0 %v556
    %1978 = vmatpush1.msra.mxu0 %v555
    %1979 = vmatprep.subr.mxu0 %v560
    %1980 = vmatpush1.msra.mxu0 %v559
    %1981 = vmatprep.subr.mxu0 %v564
    %1982 = vmatpush1.msra.mxu0 %v563
    %1983 = vmatprep.subr.mxu0 %v568
    %1984 = vmatpush1.msra.mxu0 %v567
    %1985 = vmatprep.subr.mxu0 %v572
    %1986 = vmatpush1.msra.mxu0 %v571
    %1987 = vmatprep.subr.mxu0 %v576
    %1988 = vmatpush1.msra.mxu0 %v575
    %1989 = vmatprep.subr.mxu0 %v580
    %1990 = vmatpush1.msra.mxu0 %v579
    %1991 = vmatprep.subr.mxu0 %v584
    %1992 = vmatpush1.msra.mxu0 %v583
    %1993 = vmatprep.subr.mxu0 %v588
    %1994 = vmatpush1.msra.mxu0 %v587
    %1995 = vmatprep.subr.mxu0 %v592
    %1996 = vmatpush1.msra.mxu0 %v591
    %1997 = vmatprep.subr.mxu0 %v596
    %1998 = vmatpush1.msra.mxu0 %v595
    %1999 = vmatprep.subr.mxu0 %v600
    %2000 = vmatpush1.msra.mxu0 %v599
    %2001 = vmatprep.subr.mxu0 %v604
    %2002 = vmatpush1.msra.mxu0 %v603
    %2003 = vmatprep.subr.mxu0 %v608
    %2004 = vmatpush1.msra.mxu0 %v607
    %2005 = vmatprep.subr.mxu0 %v612
    %2006 = vmatpush1.msra.mxu0 %v611
    %2007 = vmatprep.subr.mxu0 %v616
    %2008 = vmatpush1.msra.mxu0 %v615
    %2009 = vmatprep.subr.mxu0 0.0
    %2010 = vmatpush1.msra.mxu0 0.0
    %2011 = vmatprep.subr.mxu0 0.0
    %2012 = vmatpush1.msra.mxu0 0.0
    %2013 = vmatprep.subr.mxu0 0.0
    %2014 = vmatpush1.msra.mxu0 0.0
    %2015 = vmatprep.subr.mxu0 0.0
    %2016 = vmatpush1.msra.mxu0 0.0
    %2017 = vmatprep.subr.mxu0 0.0
    %2018 = vmatpush1.msra.mxu0 0.0
    %2019 = vmatprep.subr.mxu0 0.0
    %2020 = vmatpush1.msra.mxu0 0.0
    %2021 = vmatprep.subr.mxu0 0.0
    %2022 = vmatpush1.msra.mxu0 0.0
    %2023 = vmatprep.subr.mxu0 0.0
    %2024 = vmatpush1.msra.mxu0 0.0
    %2025 = vmatprep.subr.mxu0 0.0
    %2026 = vmatpush1.msra.mxu0 0.0
    %2027 = vmatprep.subr.mxu0 0.0
    %2028 = vmatpush1.msra.mxu0 0.0
    %2029 = vmatprep.subr.mxu0 0.0
    %2030 = vmatpush1.msra.mxu0 0.0
    %2031 = vmatprep.subr.mxu0 0.0
    %2032 = vmatpush1.msra.mxu0 0.0
    %2033 = vmatprep.subr.mxu0 0.0
    %2034 = vmatpush1.msra.mxu0 0.0
    %2035 = vmatprep.subr.mxu0 0.0
    %2036 = vmatpush1.msra.mxu0 0.0
    %2037 = vmatprep.subr.mxu0 0.0
    %2038 = vmatpush1.msra.mxu0 0.0
    %2039 = vmatprep.subr.mxu0 0.0
    %2040 = vmatpush1.msra.mxu0 0.0
    %2041 = vmatprep.mubr.f32.mxu0 0.0
    %2042 = vmatmul.mubr.f32.gmra.mrb[0].mxu0 %v1961
    %v2043 = vpop.f32.mrb[0].mxu0
    %v2044 = vadd.f32 0.0, %v2043
    %v2045 = vpop.f32.mrb[0].mxu0
    %v2046 = vadd.f32 0.0, %v2045
    %2047 = vmatprep.mubr.f32.mxu0 0.0
    %2048 = vmatmul.mubr.f32.gmra.mrb[0].mxu0 %v1962
    %v2049 = vpop.f32.mrb[0].mxu0
    %v2050 = vadd.f32 0.0, %v2049
    %v2051 = vpop.f32.mrb[0].mxu0
    %v2052 = vadd.f32 0.0, %v2051
    %2053 = vdwg.mxu0
    %2054 = vmatprep.subr.mxu0 %v558
    %2055 = vmatpush1.msra.mxu0 %v557
    %2056 = vmatprep.subr.mxu0 %v562
    %2057 = vmatpush1.msra.mxu0 %v561
    %2058 = vmatprep.subr.mxu0 %v566
    %2059 = vmatpush1.msra.mxu0 %v565
    %2060 = vmatprep.subr.mxu0 %v570
    %2061 = vmatpush1.msra.mxu0 %v569
    %2062 = vmatprep.subr.mxu0 %v574
    %2063 = vmatpush1.msra.mxu0 %v573
    %2064 = vmatprep.subr.mxu0 %v578
    %2065 = vmatpush1.msra.mxu0 %v577
    %2066 = vmatprep.subr.mxu0 %v582
    %2067 = vmatpush1.msra.mxu0 %v581
    %2068 = vmatprep.subr.mxu0 %v586
    %2069 = vmatpush1.msra.mxu0 %v585
    %2070 = vmatprep.subr.mxu0 %v590
    %2071 = vmatpush1.msra.mxu0 %v589
    %2072 = vmatprep.subr.mxu0 %v594
    %2073 = vmatpush1.msra.mxu0 %v593
    %2074 = vmatprep.subr.mxu0 %v598
    %2075 = vmatpush1.msra.mxu0 %v597
    %2076 = vmatprep.subr.mxu0 %v602
    %2077 = vmatpush1.msra.mxu0 %v601
    %2078 = vmatprep.subr.mxu0 %v606
    %2079 = vmatpush1.msra.mxu0 %v605
    %2080 = vmatprep.subr.mxu0 %v610
    %2081 = vmatpush1.msra.mxu0 %v609
    %2082 = vmatprep.subr.mxu0 %v614
    %2083 = vmatpush1.msra.mxu0 %v613
    %2084 = vmatprep.subr.mxu0 %v618
    %2085 = vmatpush1.msra.mxu0 %v617
    %2086 = vmatprep.subr.mxu0 0.0
    %2087 = vmatpush1.msra.mxu0 0.0
    %2088 = vmatprep.subr.mxu0 0.0
    %2089 = vmatpush1.msra.mxu0 0.0
    %2090 = vmatprep.subr.mxu0 0.0
    %2091 = vmatpush1.msra.mxu0 0.0
    %2092 = vmatprep.subr.mxu0 0.0
    %2093 = vmatpush1.msra.mxu0 0.0
    %2094 = vmatprep.subr.mxu0 0.0
    %2095 = vmatpush1.msra.mxu0 0.0
    %2096 = vmatprep.subr.mxu0 0.0
    %2097 = vmatpush1.msra.mxu0 0.0
    %2098 = vmatprep.subr.mxu0 0.0
    %2099 = vmatpush1.msra.mxu0 0.0
    %2100 = vmatprep.subr.mxu0 0.0
    %2101 = vmatpush1.msra.mxu0 0.0
    %2102 = vmatprep.subr.mxu0 0.0
    %2103 = vmatpush1.msra.mxu0 0.0
    %2104 = vmatprep.subr.mxu0 0.0
    %2105 = vmatpush1.msra.mxu0 0.0
    %2106 = vmatprep.subr.mxu0 0.0
    %2107 = vmatpush1.msra.mxu0 0.0
    %2108 = vmatprep.subr.mxu0 0.0
    %2109 = vmatpush1.msra.mxu0 0.0
    %2110 = vmatprep.subr.mxu0 0.0
    %2111 = vmatpush1.msra.mxu0 0.0
    %2112 = vmatprep.subr.mxu0 0.0
    %2113 = vmatpush1.msra.mxu0 0.0
    %2114 = vmatprep.subr.mxu0 0.0
    %2115 = vmatpush1.msra.mxu0 0.0
    %2116 = vmatprep.subr.mxu0 0.0
    %2117 = vmatpush1.msra.mxu0 0.0
    %2118 = vmatprep.mubr.f32.mxu0 0.0
    %2119 = vmatmul.mubr.f32.gmra.mrb[0].mxu0 %v1961
    %v2120 = vpop.f32.mrb[0].mxu0
    %v2121 = vadd.f32 0.0, %v2120
    %v2122 = vpop.f32.mrb[0].mxu0
    %v2123 = vadd.f32 0.0, %v2122
    %2124 = vmatprep.mubr.f32.mxu0 0.0
    %2125 = vmatmul.mubr.f32.gmra.mrb[0].mxu0 %v1962
    %v2126 = vpop.f32.mrb[0].mxu0
    %v2127 = vadd.f32 0.0, %v2126
    %v2128 = vpop.f32.mrb[0].mxu0
    %v2129 = vadd.f32 0.0, %v2128
    %2130 = vdwg.mxu0
    %v2131 = vadd.f32 %v1969, %v2044
    %v2132 = vadd.f32 %v1970, %v2046
    %v2133 = vadd.f32 %v1971, %v2121
    %v2134 = vadd.f32 %v1972, %v2123
    %v2135 = vadd.f32 %v1973, %v2050
    %v2136 = vadd.f32 %v1974, %v2052
    %v2137 = vadd.f32 %v1975, %v2127
    %v2138 = vadd.f32 %v1976, %v2129
    %v2139 = vxor.u32 %v2131, 2147483648
    %v2140 = vxor.u32 %v2135, 2147483648
    %v2141 = vmul.f32 %v2139, 1.442695
    %v2142 = vpow.pop %v2141
    %v2143 = vmul.f32 %v2140, 1.442695
    %v2144 = vpow.pop %v2143
    %v2145 = vadd.f32 %v2142, 1.0
    %v2146 = vadd.f32 %v2144, 1.0
    %v2147 = vrcp.pop %v2145
    %v2148 = vmul.f32 1.0, %v2147
    %v2149 = vrcp.pop %v2146
    %v2150 = vmul.f32 1.0, %v2149
    %v2151 = vxor.u32 %v2132, 2147483648
    %v2152 = vxor.u32 %v2136, 2147483648
    %v2153 = vmul.f32 %v2151, 1.442695
    %v2154 = vpow.pop %v2153
    %v2155 = vmul.f32 %v2152, 1.442695
    %v2156 = vpow.pop %v2155
    %v2157 = vadd.f32 %v2154, 1.0
    %v2158 = vadd.f32 %v2156, 1.0
    %v2159 = vrcp.pop %v2157
    %v2160 = vmul.f32 1.0, %v2159
    %v2161 = vrcp.pop %v2158
    %v2162 = vmul.f32 1.0, %v2161
    %v2163 = vtanh.pop %v2133
    %v2164 = vtanh.pop %v2137
    %v2165 = vxor.u32 %v2134, 2147483648
    %v2166 = vxor.u32 %v2138, 2147483648
    %v2167 = vmul.f32 %v2165, 1.442695
    %v2168 = vpow.pop %v2167
    %v2169 = vmul.f32 %v2166, 1.442695
    %v2170 = vpow.pop %v2169
    %v2171 = vadd.f32 %v2168, 1.0
    %v2172 = vadd.f32 %v2170, 1.0
    %v2173 = vrcp.pop %v2171
    %v2174 = vmul.f32 1.0, %v2173
    %v2175 = vrcp.pop %v2172
    %v2176 = vmul.f32 1.0, %v2175
    %v2177 = vmul.f32 %v2160, %v1957
    %v2178 = vmul.f32 %v2162, %v1958
    %v2179 = vmul.f32 %v2148, %v2163
    %v2180 = vmul.f32 %v2150, %v2164
    %v2181 = vadd.f32 %v2177, %v2179
    %v2182 = vadd.f32 %v2178, %v2180
    %v2183 = vtanh.pop %v2181
    %v2184 = vtanh.pop %v2182
    %v2185 = vmul.f32 %v2174, %v2183
    %v2186 = vmul.f32 %v2176, %v2184
    %s2187 = scalar_lea.vmem [#allocation11], 96
    %2188 = vst [vmem:[%s2187] sm:$0xff] %v2185
    %2189 = vst [vmem:[%s2187 + $0x8] sm:$0xff] %v2186
    %s2190 = smul.u32 14, 4
    %s2191 = smul.addr %s2190, 8
    %s2192 = scalar_lea.vmem [#allocation2], %s2191
    %v2193 = vld [vmem:[%s2192] sm:$0xff]
    %v2194 = vld [vmem:[%s2192 + $0x8] sm:$0xff]
    %v2195 = vld [vmem:[%s2192 + $0x10] sm:$0xff]
    %v2196 = vld [vmem:[%s2192 + $0x18] sm:$0xff]
    %v2197 = vld [vmem:[%s2192 + $0x20] sm:$0xff]
    %v2198 = vld [vmem:[%s2192 + $0x28] sm:$0xff]
    %v2199 = vld [vmem:[%s2192 + $0x30] sm:$0xff]
    %v2200 = vld [vmem:[%s2192 + $0x38] sm:$0xff]
    %2201 = vmatprep.subr.mxu0 %v556
    %2202 = vmatpush1.msra.mxu0 %v555
    %2203 = vmatprep.subr.mxu0 %v560
    %2204 = vmatpush1.msra.mxu0 %v559
    %2205 = vmatprep.subr.mxu0 %v564
    %2206 = vmatpush1.msra.mxu0 %v563
    %2207 = vmatprep.subr.mxu0 %v568
    %2208 = vmatpush1.msra.mxu0 %v567
    %2209 = vmatprep.subr.mxu0 %v572
    %2210 = vmatpush1.msra.mxu0 %v571
    %2211 = vmatprep.subr.mxu0 %v576
    %2212 = vmatpush1.msra.mxu0 %v575
    %2213 = vmatprep.subr.mxu0 %v580
    %2214 = vmatpush1.msra.mxu0 %v579
    %2215 = vmatprep.subr.mxu0 %v584
    %2216 = vmatpush1.msra.mxu0 %v583
    %2217 = vmatprep.subr.mxu0 %v588
    %2218 = vmatpush1.msra.mxu0 %v587
    %2219 = vmatprep.subr.mxu0 %v592
    %2220 = vmatpush1.msra.mxu0 %v591
    %2221 = vmatprep.subr.mxu0 %v596
    %2222 = vmatpush1.msra.mxu0 %v595
    %2223 = vmatprep.subr.mxu0 %v600
    %2224 = vmatpush1.msra.mxu0 %v599
    %2225 = vmatprep.subr.mxu0 %v604
    %2226 = vmatpush1.msra.mxu0 %v603
    %2227 = vmatprep.subr.mxu0 %v608
    %2228 = vmatpush1.msra.mxu0 %v607
    %2229 = vmatprep.subr.mxu0 %v612
    %2230 = vmatpush1.msra.mxu0 %v611
    %2231 = vmatprep.subr.mxu0 %v616
    %2232 = vmatpush1.msra.mxu0 %v615
    %2233 = vmatprep.subr.mxu0 0.0
    %2234 = vmatpush1.msra.mxu0 0.0
    %2235 = vmatprep.subr.mxu0 0.0
    %2236 = vmatpush1.msra.mxu0 0.0
    %2237 = vmatprep.subr.mxu0 0.0
    %2238 = vmatpush1.msra.mxu0 0.0
    %2239 = vmatprep.subr.mxu0 0.0
    %2240 = vmatpush1.msra.mxu0 0.0
    %2241 = vmatprep.subr.mxu0 0.0
    %2242 = vmatpush1.msra.mxu0 0.0
    %2243 = vmatprep.subr.mxu0 0.0
    %2244 = vmatpush1.msra.mxu0 0.0
    %2245 = vmatprep.subr.mxu0 0.0
    %2246 = vmatpush1.msra.mxu0 0.0
    %2247 = vmatprep.subr.mxu0 0.0
    %2248 = vmatpush1.msra.mxu0 0.0
    %2249 = vmatprep.subr.mxu0 0.0
    %2250 = vmatpush1.msra.mxu0 0.0
    %2251 = vmatprep.subr.mxu0 0.0
    %2252 = vmatpush1.msra.mxu0 0.0
    %2253 = vmatprep.subr.mxu0 0.0
    %2254 = vmatpush1.msra.mxu0 0.0
    %2255 = vmatprep.subr.mxu0 0.0
    %2256 = vmatpush1.msra.mxu0 0.0
    %2257 = vmatprep.subr.mxu0 0.0
    %2258 = vmatpush1.msra.mxu0 0.0
    %2259 = vmatprep.subr.mxu0 0.0
    %2260 = vmatpush1.msra.mxu0 0.0
    %2261 = vmatprep.subr.mxu0 0.0
    %2262 = vmatpush1.msra.mxu0 0.0
    %2263 = vmatprep.subr.mxu0 0.0
    %2264 = vmatpush1.msra.mxu0 0.0
    %2265 = vmatprep.mubr.f32.mxu0 0.0
    %2266 = vmatmul.mubr.f32.gmra.mrb[0].mxu0 %v2185
    %v2267 = vpop.f32.mrb[0].mxu0
    %v2268 = vadd.f32 0.0, %v2267
    %v2269 = vpop.f32.mrb[0].mxu0
    %v2270 = vadd.f32 0.0, %v2269
    %2271 = vmatprep.mubr.f32.mxu0 0.0
    %2272 = vmatmul.mubr.f32.gmra.mrb[0].mxu0 %v2186
    %v2273 = vpop.f32.mrb[0].mxu0
    %v2274 = vadd.f32 0.0, %v2273
    %v2275 = vpop.f32.mrb[0].mxu0
    %v2276 = vadd.f32 0.0, %v2275
    %2277 = vdwg.mxu0
    %2278 = vmatprep.subr.mxu0 %v558
    %2279 = vmatpush1.msra.mxu0 %v557
    %2280 = vmatprep.subr.mxu0 %v562
    %2281 = vmatpush1.msra.mxu0 %v561
    %2282 = vmatprep.subr.mxu0 %v566
    %2283 = vmatpush1.msra.mxu0 %v565
    %2284 = vmatprep.subr.mxu0 %v570
    %2285 = vmatpush1.msra.mxu0 %v569
    %2286 = vmatprep.subr.mxu0 %v574
    %2287 = vmatpush1.msra.mxu0 %v573
    %2288 = vmatprep.subr.mxu0 %v578
    %2289 = vmatpush1.msra.mxu0 %v577
    %2290 = vmatprep.subr.mxu0 %v582
    %2291 = vmatpush1.msra.mxu0 %v581
    %2292 = vmatprep.subr.mxu0 %v586
    %2293 = vmatpush1.msra.mxu0 %v585
    %2294 = vmatprep.subr.mxu0 %v590
    %2295 = vmatpush1.msra.mxu0 %v589
    %2296 = vmatprep.subr.mxu0 %v594
    %2297 = vmatpush1.msra.mxu0 %v593
    %2298 = vmatprep.subr.mxu0 %v598
    %2299 = vmatpush1.msra.mxu0 %v597
    %2300 = vmatprep.subr.mxu0 %v602
    %2301 = vmatpush1.msra.mxu0 %v601
    %2302 = vmatprep.subr.mxu0 %v606
    %2303 = vmatpush1.msra.mxu0 %v605
    %2304 = vmatprep.subr.mxu0 %v610
    %2305 = vmatpush1.msra.mxu0 %v609
    %2306 = vmatprep.subr.mxu0 %v614
    %2307 = vmatpush1.msra.mxu0 %v613
    %2308 = vmatprep.subr.mxu0 %v618
    %2309 = vmatpush1.msra.mxu0 %v617
    %2310 = vmatprep.subr.mxu0 0.0
    %2311 = vmatpush1.msra.mxu0 0.0
    %2312 = vmatprep.subr.mxu0 0.0
    %2313 = vmatpush1.msra.mxu0 0.0
    %2314 = vmatprep.subr.mxu0 0.0
    %2315 = vmatpush1.msra.mxu0 0.0
    %2316 = vmatprep.subr.mxu0 0.0
    %2317 = vmatpush1.msra.mxu0 0.0
    %2318 = vmatprep.subr.mxu0 0.0
    %2319 = vmatpush1.msra.mxu0 0.0
    %2320 = vmatprep.subr.mxu0 0.0
    %2321 = vmatpush1.msra.mxu0 0.0
    %2322 = vmatprep.subr.mxu0 0.0
    %2323 = vmatpush1.msra.mxu0 0.0
    %2324 = vmatprep.subr.mxu0 0.0
    %2325 = vmatpush1.msra.mxu0 0.0
    %2326 = vmatprep.subr.mxu0 0.0
    %2327 = vmatpush1.msra.mxu0 0.0
    %2328 = vmatprep.subr.mxu0 0.0
    %2329 = vmatpush1.msra.mxu0 0.0
    %2330 = vmatprep.subr.mxu0 0.0
    %2331 = vmatpush1.msra.mxu0 0.0
    %2332 = vmatprep.subr.mxu0 0.0
    %2333 = vmatpush1.msra.mxu0 0.0
    %2334 = vmatprep.subr.mxu0 0.0
    %2335 = vmatpush1.msra.mxu0 0.0
    %2336 = vmatprep.subr.mxu0 0.0
    %2337 = vmatpush1.msra.mxu0 0.0
    %2338 = vmatprep.subr.mxu0 0.0
    %2339 = vmatpush1.msra.mxu0 0.0
    %2340 = vmatprep.subr.mxu0 0.0
    %2341 = vmatpush1.msra.mxu0 0.0
    %2342 = vmatprep.mubr.f32.mxu0 0.0
    %2343 = vmatmul.mubr.f32.gmra.mrb[0].mxu0 %v2185
    %v2344 = vpop.f32.mrb[0].mxu0
    %v2345 = vadd.f32 0.0, %v2344
    %v2346 = vpop.f32.mrb[0].mxu0
    %v2347 = vadd.f32 0.0, %v2346
    %2348 = vmatprep.mubr.f32.mxu0 0.0
    %2349 = vmatmul.mubr.f32.gmra.mrb[0].mxu0 %v2186
    %v2350 = vpop.f32.mrb[0].mxu0
    %v2351 = vadd.f32 0.0, %v2350
    %v2352 = vpop.f32.mrb[0].mxu0
    %v2353 = vadd.f32 0.0, %v2352
    %2354 = vdwg.mxu0
    %v2355 = vadd.f32 %v2193, %v2268
    %v2356 = vadd.f32 %v2194, %v2270
    %v2357 = vadd.f32 %v2195, %v2345
    %v2358 = vadd.f32 %v2196, %v2347
    %v2359 = vadd.f32 %v2197, %v2274
    %v2360 = vadd.f32 %v2198, %v2276
    %v2361 = vadd.f32 %v2199, %v2351
    %v2362 = vadd.f32 %v2200, %v2353
    %v2363 = vxor.u32 %v2355, 2147483648
    %v2364 = vxor.u32 %v2359, 2147483648
    %v2365 = vmul.f32 %v2363, 1.442695
    %v2366 = vpow.pop %v2365
    %v2367 = vmul.f32 %v2364, 1.442695
    %v2368 = vpow.pop %v2367
    %v2369 = vadd.f32 %v2366, 1.0
    %v2370 = vadd.f32 %v2368, 1.0
    %v2371 = vrcp.pop %v2369
    %v2372 = vmul.f32 1.0, %v2371
    %v2373 = vrcp.pop %v2370
    %v2374 = vmul.f32 1.0, %v2373
    %v2375 = vxor.u32 %v2356, 2147483648
    %v2376 = vxor.u32 %v2360, 2147483648
    %v2377 = vmul.f32 %v2375, 1.442695
    %v2378 = vpow.pop %v2377
    %v2379 = vmul.f32 %v2376, 1.442695
    %v2380 = vpow.pop %v2379
    %v2381 = vadd.f32 %v2378, 1.0
    %v2382 = vadd.f32 %v2380, 1.0
    %v2383 = vrcp.pop %v2381
    %v2384 = vmul.f32 1.0, %v2383
    %v2385 = vrcp.pop %v2382
    %v2386 = vmul.f32 1.0, %v2385
    %v2387 = vtanh.pop %v2357
    %v2388 = vtanh.pop %v2361
    %v2389 = vxor.u32 %v2358, 2147483648
    %v2390 = vxor.u32 %v2362, 2147483648
    %v2391 = vmul.f32 %v2389, 1.442695
    %v2392 = vpow.pop %v2391
    %v2393 = vmul.f32 %v2390, 1.442695
    %v2394 = vpow.pop %v2393
    %v2395 = vadd.f32 %v2392, 1.0
    %v2396 = vadd.f32 %v2394, 1.0
    %v2397 = vrcp.pop %v2395
    %v2398 = vmul.f32 1.0, %v2397
    %v2399 = vrcp.pop %v2396
    %v2400 = vmul.f32 1.0, %v2399
    %v2401 = vmul.f32 %v2384, %v2181
    %v2402 = vmul.f32 %v2386, %v2182
    %v2403 = vmul.f32 %v2372, %v2387
    %v2404 = vmul.f32 %v2374, %v2388
    %v2405 = vadd.f32 %v2401, %v2403
    %v2406 = vadd.f32 %v2402, %v2404
    %v2407 = vtanh.pop %v2405
    %v2408 = vtanh.pop %v2406
    %v2409 = vmul.f32 %v2398, %v2407
    %v2410 = vmul.f32 %v2400, %v2408
    %s2411 = scalar_lea.vmem [#allocation11], 112
    %2412 = vst [vmem:[%s2411] sm:$0xff] %v2409
    %2413 = vst [vmem:[%s2411 + $0x8] sm:$0xff] %v2410
    %2414 = vst [vmem:[#allocation3] sm:$0xff] %v2409
    %2415 = vst [vmem:[#allocation3 + $0x8] sm:$0xff] %v2410
    %2416 = vst [vmem:[#allocation4] sm:$0xff] %v2405
    %2417 = vst [vmem:[#allocation4 + $0x8] sm:$0xff] %v2406
    // Predicated region
    $region34: #{tpu_custom_call.1} parent=1 // pred_check
      _
    $region35: #{tpu_custom_call.1} parent=1 // pred_check_branch
      %2419 = sbr.rel (0) target = $region37
    $region36: #{tpu_custom_call.1} parent=1 // pred_region
      %s2421 = ssub.s32 2048, 2048
      %2422 = vsyncadd [#allocation7], %s2421
      %s2423 = sshll.u32 [#allocation11], 4
      %s2424 = int_to_ptr.vmem [resolvable:$true] %s2423
      %2429 = dma.vmem_to_hbm [thread:$0]  %s2424, 2048, %s4, [#allocation7], 128, 128, 8
    $region37: #{tpu_custom_call.1} parent=1 // pred_fallthru
      _
    // Predicated region
    $region38: #{tpu_custom_call.1} parent=1 // pred_check
      _
    $region39: #{tpu_custom_call.1} parent=1 // pred_check_branch
      %2431 = sbr.rel (0) target = $region41
    $region40: #{tpu_custom_call.1} parent=1 // pred_region
      %2432 = dma.done [#allocation7], 2048
    $region41: #{tpu_custom_call.1} parent=1 // pred_fallthru
      _
    %2433 = vsyncpa [#allocation6], 1
    %2434 = vsyncpa [#allocation9], 1
    %2435 = vsyncpa [#allocation7], 1

</llo_original>
